<compile_context>
chip_gen: v7x
topology: tpu7x:2x2x1
jax: 0.10.0
libtpu: 0.0.40
codegen_flags: <defaults>
</compile_context>

<pallas_src>
import functools

import jax
import jax.numpy as jnp
from jax import lax
from jax.experimental import pallas as pl
from jax.experimental.pallas import tpu as pltpu

BN_EPS = 1e-5


# ---------------------------------------------------------------------------
# Fused Pallas kernel: one grid step == one full branch, batch packed on lanes
# ---------------------------------------------------------------------------
def _fused_multiscopic_kernel(x_ref, w_ref, vec_ref, o_ref, xpad_ref, col_ref,
                              *, blocks, batch):
    """x_ref   : (B, C_in, L)                      whole-batch input
    w_ref   : (1, n_convs, C_out_max, KC_max)   this branch's union-tap im2col weights
    vec_ref : (1, C_max, n_vecs)                this branch's biases / BN scale / BN shift
    o_ref   : (1, C_f, B*L_f)                   branch output (batch packed on lanes)
    xpad_ref: VMEM (C_max, max B*(L+2P))        'same'-padding staging (per-batch segments)
    col_ref : VMEM (KC_max, max B*L)            im2col matrix
    blocks  : static ((convs_meta, pool), ...) with
              convs_meta = ((C_in, C_out, L_in, pad, taps), ...)
    """
    f32 = jnp.float32
    conv_idx = 0
    vec_idx = 0
    y = None                                    # (C, B*L) activation, batch on lanes

    for convs_meta, pool in blocks:
        for (c_in, c_out, seq, pad, taps) in convs_meta:
            lp = seq + 2 * pad                  # per-batch padded segment length
            kc = len(taps) * c_in
            # ---- 'same' padding: zero ONLY the halo stripes (re-zeroed per conv so
            # stale data from a previous, longer conv cannot leak into the padding).
            if pad > 0:
                xpad_ref[0:c_in, 0:pad] = jnp.zeros((c_in, pad), f32)
                for b in range(batch - 1):
                    xpad_ref[0:c_in, (b + 1) * lp - pad:(b + 1) * lp + pad] = (
                        jnp.zeros((c_in, 2 * pad), f32))
                xpad_ref[0:c_in, batch * lp - pad:batch * lp] = (
                    jnp.zeros((c_in, pad), f32))
            # ---- data segments (batch items adjacent, separated by the 2*pad halos)
            for b in range(batch):
                seg = b * lp + pad
                if y is None:
                    xpad_ref[0:c_in, seg:seg + seq] = x_ref[b].astype(f32)
                else:
                    xpad_ref[0:c_in, seg:seg + seq] = y[:, b * seq:(b + 1) * seq]
            # ---- im2col on the static union-tap grid -> ONE MXU matmul per conv
            for j, t in enumerate(taps):
                for b in range(batch):
                    col_ref[j * c_in:(j + 1) * c_in, b * seq:(b + 1) * seq] = (
                        xpad_ref[0:c_in, b * lp + t:b * lp + t + seq])
            w = w_ref[0, conv_idx, 0:c_out, 0:kc]
            bias = vec_ref[0, 0:c_out, vec_idx:vec_idx + 1]
            acc = jnp.dot(w, col_ref[0:kc, 0:batch * seq],
                          preferred_element_type=f32)
            y = jnp.maximum(acc + bias, 0.0)    # conv bias + ReLU
            conv_idx += 1
            vec_idx += 1

        # ---- eval-mode BatchNorm1d (folded to scale/shift) ----
        c = convs_meta[-1][1]
        seq = convs_meta[-1][2]
        scale = vec_ref[0, 0:c, vec_idx:vec_idx + 1]
        shift = vec_ref[0, 0:c, vec_idx + 1:vec_idx + 2]
        vec_idx += 2
        y = y * scale + shift

        # ---- MaxPool1d(pool, stride=pool); seq % pool == 0 (asserted in wrapper)
        # so pooling windows never straddle a batch segment in the packed lane axis.
        lo = seq // pool
        # TODO(synk): a lane-strided scratch read (ref[:, pl.ds(p, B*lo, stride=pool)])
        # would keep this on the XLU slot; the reshape+max form is the proven-lowering
        # path at these sizes and now runs once per block (not per batch item).
        y = jnp.max(y.reshape(c, batch * lo, pool), axis=-1)

    # single lane-packed store of the whole branch result
    o_ref[0, :, :] = y.astype(o_ref.dtype)


# ---------------------------------------------------------------------------
# Wrapper: pre-dilate weights onto union tap grids, pack params into 2 slabs,
# single pallas_call over branches
# ---------------------------------------------------------------------------
def multi_scopic_cnn_forward(params, x):
    """Forward of MultiScopicCNN, all branches fused into one pallas_call.

    params: list (branch) of list (block) of dict(convs=[{w,b,dilation}], bn, pool).
            All branches must share channel / kernel-size structure (true for the
            multi_scopic config; only dilations differ between branches).
    x: (B, C_in, L) float32.
    """
    B, C_in, L = x.shape
    n_br = len(params)
    n_blocks = len(params[0])

    blocks_meta = []            # static: (((C_in, C_out, L_in, pad, taps), ...), pool)
    w_per_conv = []             # [conv_idx][branch] -> (C_out, KC) union-tap im2col weight
    conv_dims = []              # [conv_idx] -> (C_out, KC)
    vec_cols = [[] for _ in range(n_br)]   # per branch: (C,) vectors in consumption order

    cur_C, cur_L = C_in, L
    c_max = C_in
    xpad_rows = xpad_cols = col_rows = col_cols = 1

    for ib in range(n_blocks):
        n_convs = len(params[0][ib]["convs"])
        convs_meta = []
        for ic in range(n_convs):
            K = int(params[0][ib]["convs"][ic]["w"].shape[-1])
            C_out = int(params[0][ib]["convs"][ic]["w"].shape[0])
            assert K % 2 == 1, "torch 'same' padding rule assumed odd kernel size"
            dils = [int(params[br][ib]["convs"][ic]["dilation"]) for br in range(n_br)]
            k_eff = [d * (K - 1) + 1 for d in dils]
            k_eff_max = max(k_eff)
            pad = (k_eff_max - 1) // 2          # == max branch 'same' pad; extra pad is
                                                # absorbed by the centered zero-taps
            # union of pre-dilated (unit-stride) tap offsets over all branches (static)
            taps = tuple(sorted({(k_eff_max - k_eff[br]) // 2 + i * dils[br]
                                 for br in range(n_br) for i in range(K)}))
            kc = len(taps) * cur_C
            per_branch_w = []
            for br in range(n_br):
                conv = params[br][ib]["convs"][ic]
                w = conv["w"]                                    # (C_out, C_in, K)
                assert w.shape == (C_out, cur_C, K), "branches must share structure"
                off = (k_eff_max - k_eff[br]) // 2
                wmat = jnp.zeros((C_out, kc), jnp.float32)
                for i in range(K):
                    j = taps.index(off + i * dils[br])
                    wmat = wmat.at[:, j * cur_C:(j + 1) * cur_C].set(w[:, :, i])
                per_branch_w.append(wmat)
                vec_cols[br].append(conv["b"].astype(jnp.float32))
            w_per_conv.append(per_branch_w)
            conv_dims.append((C_out, kc))
            convs_meta.append((cur_C, C_out, cur_L, pad, taps))
            xpad_rows = max(xpad_rows, cur_C)
            xpad_cols = max(xpad_cols, B * (cur_L + 2 * pad))
            col_rows = max(col_rows, kc)
            col_cols = max(col_cols, B * cur_L)
            cur_C = C_out
            c_max = max(c_max, cur_C)
        # fold eval-mode BatchNorm1d into scale/shift column vectors
        for br in range(n_br):
            bn = params[br][ib]["bn"]
            inv = 1.0 / jnp.sqrt(bn["var"] + BN_EPS)
            vec_cols[br].append((bn["gamma"] * inv).astype(jnp.float32))
            vec_cols[br].append(
                (bn["beta"] - bn["mean"] * bn["gamma"] * inv).astype(jnp.float32))
        pool = int(params[0][ib]["pool"])
        # TODO(synk): support cur_L % pool != 0 (torch floor-mode tail drop) via
        # per-batch-segment pooling; the multi_scopic config always divides evenly.
        assert cur_L % pool == 0, "packed-batch pooling requires L % pool == 0"
        blocks_meta.append((tuple(convs_meta), pool))
        cur_L = cur_L // pool

    C_f, L_f = cur_C, cur_L

    # ---- pack ALL per-branch parameters into two branch-indexed slabs ----
    n_convs_total = len(w_per_conv)
    c_out_max = max(d[0] for d in conv_dims)
    kc_max = max(d[1] for d in conv_dims)
    w_slab = jnp.zeros((n_br, n_convs_total, c_out_max, kc_max), jnp.float32)
    for ci, per_branch in enumerate(w_per_conv):
        for br, wmat in enumerate(per_branch):
            w_slab = w_slab.at[br, ci, :wmat.shape[0], :wmat.shape[1]].set(wmat)
    n_vecs = len(vec_cols[0])
    vec_slab = jnp.zeros((n_br, c_max, n_vecs), jnp.float32)
    for br in range(n_br):
        for vi, v in enumerate(vec_cols[br]):
            vec_slab = vec_slab.at[br, :v.shape[0], vi].set(v)

    kernel = functools.partial(_fused_multiscopic_kernel,
                               blocks=tuple(blocks_meta), batch=B)
    out = pl.pallas_call(
        kernel,
        out_shape=jax.ShapeDtypeStruct((n_br, C_f, B * L_f), x.dtype),
        grid_spec=pltpu.PrefetchScalarGridSpec(
            num_scalar_prefetch=0,
            grid=(n_br,),
            in_specs=[
                pl.BlockSpec((B, C_in, L), lambda br: (0, 0, 0)),
                pl.BlockSpec((1, n_convs_total, c_out_max, kc_max),
                             lambda br: (br, 0, 0, 0)),
                pl.BlockSpec((1, c_max, n_vecs), lambda br: (br, 0, 0)),
            ],
            out_specs=pl.BlockSpec((1, C_f, B * L_f), lambda br: (br, 0, 0)),
            scratch_shapes=[pltpu.VMEM((xpad_rows, xpad_cols), jnp.float32),
                            pltpu.VMEM((col_rows, col_cols), jnp.float32)]),
        compiler_params=pltpu.CompilerParams(dimension_semantics=("parallel",)),
    )(x, w_slab, vec_slab)

    # (n_br, C_f, B*L_f) -> (B, n_br*C_f, L_f): matches torch.cat(..., dim=1)
    out = out.reshape(n_br, C_f, B, L_f).transpose(2, 0, 1, 3).reshape(
        B, n_br * C_f, L_f)
    return out


# ---------------------------------------------------------------------------
# Parameter construction (matches MultiScopicCNN.__init__ shapes)
# ---------------------------------------------------------------------------
def init_params(key, in_channels, config):
    params = []
    for br_idx, br_scopes in enumerate(config["scopes"]):
        branch = []
        block_in = in_channels
        for blk_idx, blk_scopes in enumerate(br_scopes):
            n_convs = len(blk_scopes)
            nf = config["num_filters"][br_idx][blk_idx]
            fl = config["filter_lengths"][br_idx][blk_idx]
            out_chs = [nf] * n_convs if isinstance(nf, int) else list(nf)
            flens = [fl] * n_convs if isinstance(fl, int) else list(fl)
            convs = []
            c_in = block_in
            for ci in range(n_convs):
                key, k1, k2 = jax.random.split(key, 3)
                K, c_out = flens[ci], out_chs[ci]
                fan_in = c_in * K
                w = jax.random.normal(k1, (c_out, c_in, K), jnp.float32) / jnp.sqrt(fan_in)
                b = 0.1 * jax.random.normal(k2, (c_out,), jnp.float32)
                convs.append(dict(w=w, b=b, dilation=int(blk_scopes[ci])))
                c_in = c_out
            key, k1, k2, k3 = jax.random.split(key, 4)
            bn = dict(
                gamma=1.0 + 0.1 * jax.random.normal(k1, (c_in,), jnp.float32),
                beta=0.1 * jax.random.normal(k2, (c_in,), jnp.float32),
                mean=0.05 * jax.random.normal(k3, (c_in,), jnp.float32),
                var=jnp.ones((c_in,), jnp.float32),
            )
            branch.append(dict(convs=convs, bn=bn,
                               pool=int(config["subsample_lengths"][br_idx][blk_idx])))
            block_in = c_in
        params.append(branch)
    return params


def _ref_forward(params, x):
    """Pure-JAX reference (lax.conv) with identical semantics, for verification."""
    outs = []
    for branch in params:
        y = x
        for block in branch:
            for conv in block["convs"]:
                w, b, d = conv["w"], conv["b"], conv["dilation"]
                K = w.shape[-1]
                pad = d * (K - 1) // 2
                y = lax.conv_general_dilated(
                    y, w, window_strides=(1,), padding=[(pad, pad)],
                    rhs_dilation=(d,), dimension_numbers=("NCH", "OIH", "NCH"))
                y = jax.nn.relu(y + b[None, :, None])
            bn = block["bn"]
            inv = 1.0 / jnp.sqrt(bn["var"] + BN_EPS)
            y = ((y - bn["mean"][None, :, None]) * inv[None, :, None]
                 * bn["gamma"][None, :, None] + bn["beta"][None, :, None])
            s = block["pool"]
            B, C, Lc = y.shape
            Lo = Lc // s
            y = y[:, :, :Lo * s].reshape(B, C, Lo, s).max(axis=-1)
        outs.append(y)
    return jnp.concatenate(outs, axis=1)


if __name__ == "__main__":
    # Scaled-down multi_scopic config: 3 branches x 2 blocks, dilations grow per branch.
    CONFIG = dict(
        scopes=[
            [[1], [1, 1]],
            [[2], [2, 4]],
            [[4], [4, 8]],
        ],
        num_filters=[[8, 16]] * 3,
        filter_lengths=[[5, 3]] * 3,
        subsample_lengths=[[2, 2]] * 3,
        dropouts=[[0.0, 0.3]] * 3,  # eval-mode: unused
        groups=1,
    )

    B, C_IN, SEQ = 2, 4, 64
    key = jax.random.PRNGKey(0)
    kx, kp = jax.random.split(key)
    x = jax.random.normal(kx, (B, C_IN, SEQ), jnp.float32)

    params = init_params(kp, C_IN, CONFIG)

    out = multi_scopic_cnn_forward(params, x)
    out = jax.block_until_ready(out)

    ref = _ref_forward(params, x)
    assert out.shape == (B, 3 * 16, SEQ // 4), out.shape
    if not jnp.allclose(out, ref, atol=1e-4, rtol=1e-4):
        max_err = float(jnp.max(jnp.abs(out - ref)))
        raise AssertionError(f"Pallas output mismatch vs reference, max err={max_err}")

    print("KERNEL_OK")
</pallas_src>

<mosaic_0001>
module attributes {stable_mosaic.version = 11 : i64} {
  func.func @_fused_multiscopic_kernel(%arg0: i32, %arg1: memref<2x4x64xf32, #tpu.memory_space<vmem>>, %arg2: memref<1x3x16x112xf32, #tpu.memory_space<vmem>>, %arg3: memref<1x16x7xf32, #tpu.memory_space<vmem>>, %arg4: memref<1x16x32xf32, #tpu.memory_space<vmem>>, %arg5: memref<16x160xf32, #tpu.memory_space<vmem>>, %arg6: memref<112x128xf32, #tpu.memory_space<vmem>>) attributes {dimension_semantics = [#tpu.dimension_semantics<parallel>], iteration_bounds = array<i64: 3>, scalar_prefetch = 0 : i64, scratch_operands = 2 : i64, tpu.core_type = #tpu.core_type<tc>, window_params = [{pipeline_mode = #tpu.pipeline_mode<synchronous>, transform_indices = @transform_0, window_bounds = array<i64: 2, 4, 64>}, {transform_indices = @transform_1, window_bounds = array<i64: 1, 3, 16, 112>}, {transform_indices = @transform_2, window_bounds = array<i64: 1, 16, 7>}, {transform_indices = @transform_3, window_bounds = array<i64: 1, 16, 32>}]} {
    %cst = arith.constant 0.000000e+00 : f32
    %0 = vector.broadcast %cst : f32 to vector<4x8xf32>
    %c0 = arith.constant 0 : index
    %c0_0 = arith.constant 0 : index
    %1 = vector.load %arg5[%c0, %c0_0] : memref<16x160xf32, #tpu.memory_space<vmem>>, vector<4x8xf32>
    tpu.vector_store %arg5[%c0, %c0_0], %0 {strides = array<i32>} : memref<16x160xf32, #tpu.memory_space<vmem>>, vector<4x8xf32>,
    %cst_1 = arith.constant 0.000000e+00 : f32
    %2 = vector.broadcast %cst_1 : f32 to vector<4x16xf32>
    %c0_2 = arith.constant 0 : index
    %c72 = arith.constant 72 : index
    %3 = vector.load %arg5[%c0_2, %c72] : memref<16x160xf32, #tpu.memory_space<vmem>>, vector<4x16xf32>
    tpu.vector_store %arg5[%c0_2, %c72], %2 {strides = array<i32>} : memref<16x160xf32, #tpu.memory_space<vmem>>, vector<4x16xf32>,
    %cst_3 = arith.constant 0.000000e+00 : f32
    %4 = vector.broadcast %cst_3 : f32 to vector<4x8xf32>
    %c0_4 = arith.constant 0 : index
    %c152 = arith.constant 152 : index
    %5 = vector.load %arg5[%c0_4, %c152] : memref<16x160xf32, #tpu.memory_space<vmem>>, vector<4x8xf32>
    tpu.vector_store %arg5[%c0_4, %c152], %4 {strides = array<i32>} : memref<16x160xf32, #tpu.memory_space<vmem>>, vector<4x8xf32>,
    %c0_5 = arith.constant 0 : index
    %c0_6 = arith.constant 0 : index
    %c0_7 = arith.constant 0 : index
    %6 = vector.load %arg1[%c0_5, %c0_6, %c0_7] : memref<2x4x64xf32, #tpu.memory_space<vmem>>, vector<1x4x64xf32>
    %7 = vector.shape_cast %6 : vector<1x4x64xf32> to vector<4x64xf32>
    %c0_8 = arith.constant 0 : index
    %c8 = arith.constant 8 : index
    %8 = vector.load %arg5[%c0_8, %c8] : memref<16x160xf32, #tpu.memory_space<vmem>>, vector<4x64xf32>
    tpu.vector_store %arg5[%c0_8, %c8], %7 {strides = array<i32>} : memref<16x160xf32, #tpu.memory_space<vmem>>, vector<4x64xf32>,
    %c1 = arith.constant 1 : index
    %c0_9 = arith.constant 0 : index
    %c0_10 = arith.constant 0 : index
    %9 = vector.load %arg1[%c1, %c0_9, %c0_10] : memref<2x4x64xf32, #tpu.memory_space<vmem>>, vector<1x4x64xf32>
    %10 = vector.shape_cast %9 : vector<1x4x64xf32> to vector<4x64xf32>
    %c0_11 = arith.constant 0 : index
    %c88 = arith.constant 88 : index
    %11 = vector.load %arg5[%c0_11, %c88] : memref<16x160xf32, #tpu.memory_space<vmem>>, vector<4x64xf32>
    tpu.vector_store %arg5[%c0_11, %c88], %10 {strides = array<i32>} : memref<16x160xf32, #tpu.memory_space<vmem>>, vector<4x64xf32>,
    %c0_12 = arith.constant 0 : index
    %c0_13 = arith.constant 0 : index
    %12 = vector.load %arg5[%c0_12, %c0_13] : memref<16x160xf32, #tpu.memory_space<vmem>>, vector<4x64xf32>
    %c0_14 = arith.constant 0 : index
    %c0_15 = arith.constant 0 : index
    %13 = vector.load %arg6[%c0_14, %c0_15] : memref<112x128xf32, #tpu.memory_space<vmem>>, vector<4x64xf32>
    tpu.vector_store %arg6[%c0_14, %c0_15], %12 {strides = array<i32>} : memref<112x128xf32, #tpu.memory_space<vmem>>, vector<4x64xf32>,
    %c0_16 = arith.constant 0 : index
    %c80 = arith.constant 80 : index
    %14 = vector.load %arg5[%c0_16, %c80] : memref<16x160xf32, #tpu.memory_space<vmem>>, vector<4x64xf32>
    %c0_17 = arith.constant 0 : index
    %c64 = arith.constant 64 : index
    %15 = vector.load %arg6[%c0_17, %c64] : memref<112x128xf32, #tpu.memory_space<vmem>>, vector<4x64xf32>
    tpu.vector_store %arg6[%c0_17, %c64], %14 {strides = array<i32>} : memref<112x128xf32, #tpu.memory_space<vmem>>, vector<4x64xf32>,
    %c0_18 = arith.constant 0 : index
    %c4 = arith.constant 4 : index
    %16 = vector.load %arg5[%c0_18, %c4] : memref<16x160xf32, #tpu.memory_space<vmem>>, vector<4x64xf32>
    %c4_19 = arith.constant 4 : index
    %c0_20 = arith.constant 0 : index
    %17 = vector.load %arg6[%c4_19, %c0_20] : memref<112x128xf32, #tpu.memory_space<vmem>>, vector<4x64xf32>
    tpu.vector_store %arg6[%c4_19, %c0_20], %16 {strides = array<i32>} : memref<112x128xf32, #tpu.memory_space<vmem>>, vector<4x64xf32>,
    %c0_21 = arith.constant 0 : index
    %c84 = arith.constant 84 : index
    %18 = vector.load %arg5[%c0_21, %c84] : memref<16x160xf32, #tpu.memory_space<vmem>>, vector<4x64xf32>
    %c4_22 = arith.constant 4 : index
    %c64_23 = arith.constant 64 : index
    %19 = vector.load %arg6[%c4_22, %c64_23] : memref<112x128xf32, #tpu.memory_space<vmem>>, vector<4x64xf32>
    tpu.vector_store %arg6[%c4_22, %c64_23], %18 {strides = array<i32>} : memref<112x128xf32, #tpu.memory_space<vmem>>, vector<4x64xf32>,
    %c0_24 = arith.constant 0 : index
    %c6 = arith.constant 6 : index
    %20 = vector.load %arg5[%c0_24, %c6] : memref<16x160xf32, #tpu.memory_space<vmem>>, vector<4x64xf32>
    %c8_25 = arith.constant 8 : index
    %c0_26 = arith.constant 0 : index
    %21 = vector.load %arg6[%c8_25, %c0_26] : memref<112x128xf32, #tpu.memory_space<vmem>>, vector<4x64xf32>
    tpu.vector_store %arg6[%c8_25, %c0_26], %20 {strides = array<i32>} : memref<112x128xf32, #tpu.memory_space<vmem>>, vector<4x64xf32>,
    %c0_27 = arith.constant 0 : index
    %c86 = arith.constant 86 : index
    %22 = vector.load %arg5[%c0_27, %c86] : memref<16x160xf32, #tpu.memory_space<vmem>>, vector<4x64xf32>
    %c8_28 = arith.constant 8 : index
    %c64_29 = arith.constant 64 : index
    %23 = vector.load %arg6[%c8_28, %c64_29] : memref<112x128xf32, #tpu.memory_space<vmem>>, vector<4x64xf32>
    tpu.vector_store %arg6[%c8_28, %c64_29], %22 {strides = array<i32>} : memref<112x128xf32, #tpu.memory_space<vmem>>, vector<4x64xf32>,
    %c0_30 = arith.constant 0 : index
    %c7 = arith.constant 7 : index
    %24 = vector.load %arg5[%c0_30, %c7] : memref<16x160xf32, #tpu.memory_space<vmem>>, vector<4x64xf32>
    %c12 = arith.constant 12 : index
    %c0_31 = arith.constant 0 : index
    %25 = vector.load %arg6[%c12, %c0_31] : memref<112x128xf32, #tpu.memory_space<vmem>>, vector<4x64xf32>
    tpu.vector_store %arg6[%c12, %c0_31], %24 {strides = array<i32>} : memref<112x128xf32, #tpu.memory_space<vmem>>, vector<4x64xf32>,
    %c0_32 = arith.constant 0 : index
    %c87 = arith.constant 87 : index
    %26 = vector.load %arg5[%c0_32, %c87] : memref<16x160xf32, #tpu.memory_space<vmem>>, vector<4x64xf32>
    %c12_33 = arith.constant 12 : index
    %c64_34 = arith.constant 64 : index
    %27 = vector.load %arg6[%c12_33, %c64_34] : memref<112x128xf32, #tpu.memory_space<vmem>>, vector<4x64xf32>
    tpu.vector_store %arg6[%c12_33, %c64_34], %26 {strides = array<i32>} : memref<112x128xf32, #tpu.memory_space<vmem>>, vector<4x64xf32>,
    %c0_35 = arith.constant 0 : index
    %c8_36 = arith.constant 8 : index
    %28 = vector.load %arg5[%c0_35, %c8_36] : memref<16x160xf32, #tpu.memory_space<vmem>>, vector<4x64xf32>
    %c16 = arith.constant 16 : index
    %c0_37 = arith.constant 0 : index
    %29 = vector.load %arg6[%c16, %c0_37] : memref<112x128xf32, #tpu.memory_space<vmem>>, vector<4x64xf32>
    tpu.vector_store %arg6[%c16, %c0_37], %28 {strides = array<i32>} : memref<112x128xf32, #tpu.memory_space<vmem>>, vector<4x64xf32>,
    %c0_38 = arith.constant 0 : index
    %c88_39 = arith.constant 88 : index
    %30 = vector.load %arg5[%c0_38, %c88_39] : memref<16x160xf32, #tpu.memory_space<vmem>>, vector<4x64xf32>
    %c16_40 = arith.constant 16 : index
    %c64_41 = arith.constant 64 : index
    %31 = vector.load %arg6[%c16_40, %c64_41] : memref<112x128xf32, #tpu.memory_space<vmem>>, vector<4x64xf32>
    tpu.vector_store %arg6[%c16_40, %c64_41], %30 {strides = array<i32>} : memref<112x128xf32, #tpu.memory_space<vmem>>, vector<4x64xf32>,
    %c0_42 = arith.constant 0 : index
    %c9 = arith.constant 9 : index
    %32 = vector.load %arg5[%c0_42, %c9] : memref<16x160xf32, #tpu.memory_space<vmem>>, vector<4x64xf32>
    %c20 = arith.constant 20 : index
    %c0_43 = arith.constant 0 : index
    %33 = vector.load %arg6[%c20, %c0_43] : memref<112x128xf32, #tpu.memory_space<vmem>>, vector<4x64xf32>
    tpu.vector_store %arg6[%c20, %c0_43], %32 {strides = array<i32>} : memref<112x128xf32, #tpu.memory_space<vmem>>, vector<4x64xf32>,
    %c0_44 = arith.constant 0 : index
    %c89 = arith.constant 89 : index
    %34 = vector.load %arg5[%c0_44, %c89] : memref<16x160xf32, #tpu.memory_space<vmem>>, vector<4x64xf32>
    %c20_45 = arith.constant 20 : index
    %c64_46 = arith.constant 64 : index
    %35 = vector.load %arg6[%c20_45, %c64_46] : memref<112x128xf32, #tpu.memory_space<vmem>>, vector<4x64xf32>
    tpu.vector_store %arg6[%c20_45, %c64_46], %34 {strides = array<i32>} : memref<112x128xf32, #tpu.memory_space<vmem>>, vector<4x64xf32>,
    %c0_47 = arith.constant 0 : index
    %c10 = arith.constant 10 : index
    %36 = vector.load %arg5[%c0_47, %c10] : memref<16x160xf32, #tpu.memory_space<vmem>>, vector<4x64xf32>
    %c24 = arith.constant 24 : index
    %c0_48 = arith.constant 0 : index
    %37 = vector.load %arg6[%c24, %c0_48] : memref<112x128xf32, #tpu.memory_space<vmem>>, vector<4x64xf32>
    tpu.vector_store %arg6[%c24, %c0_48], %36 {strides = array<i32>} : memref<112x128xf32, #tpu.memory_space<vmem>>, vector<4x64xf32>,
    %c0_49 = arith.constant 0 : index
    %c90 = arith.constant 90 : index
    %38 = vector.load %arg5[%c0_49, %c90] : memref<16x160xf32, #tpu.memory_space<vmem>>, vector<4x64xf32>
    %c24_50 = arith.constant 24 : index
    %c64_51 = arith.constant 64 : index
    %39 = vector.load %arg6[%c24_50, %c64_51] : memref<112x128xf32, #tpu.memory_space<vmem>>, vector<4x64xf32>
    tpu.vector_store %arg6[%c24_50, %c64_51], %38 {strides = array<i32>} : memref<112x128xf32, #tpu.memory_space<vmem>>, vector<4x64xf32>,
    %c0_52 = arith.constant 0 : index
    %c12_53 = arith.constant 12 : index
    %40 = vector.load %arg5[%c0_52, %c12_53] : memref<16x160xf32, #tpu.memory_space<vmem>>, vector<4x64xf32>
    %c28 = arith.constant 28 : index
    %c0_54 = arith.constant 0 : index
    %41 = vector.load %arg6[%c28, %c0_54] : memref<112x128xf32, #tpu.memory_space<vmem>>, vector<4x64xf32>
    tpu.vector_store %arg6[%c28, %c0_54], %40 {strides = array<i32>} : memref<112x128xf32, #tpu.memory_space<vmem>>, vector<4x64xf32>,
    %c0_55 = arith.constant 0 : index
    %c92 = arith.constant 92 : index
    %42 = vector.load %arg5[%c0_55, %c92] : memref<16x160xf32, #tpu.memory_space<vmem>>, vector<4x64xf32>
    %c28_56 = arith.constant 28 : index
    %c64_57 = arith.constant 64 : index
    %43 = vector.load %arg6[%c28_56, %c64_57] : memref<112x128xf32, #tpu.memory_space<vmem>>, vector<4x64xf32>
    tpu.vector_store %arg6[%c28_56, %c64_57], %42 {strides = array<i32>} : memref<112x128xf32, #tpu.memory_space<vmem>>, vector<4x64xf32>,
    %c0_58 = arith.constant 0 : index
    %c16_59 = arith.constant 16 : index
    %44 = vector.load %arg5[%c0_58, %c16_59] : memref<16x160xf32, #tpu.memory_space<vmem>>, vector<4x64xf32>
    %c32 = arith.constant 32 : index
    %c0_60 = arith.constant 0 : index
    %45 = vector.load %arg6[%c32, %c0_60] : memref<112x128xf32, #tpu.memory_space<vmem>>, vector<4x64xf32>
    tpu.vector_store %arg6[%c32, %c0_60], %44 {strides = array<i32>} : memref<112x128xf32, #tpu.memory_space<vmem>>, vector<4x64xf32>,
    %c0_61 = arith.constant 0 : index
    %c96 = arith.constant 96 : index
    %46 = vector.load %arg5[%c0_61, %c96] : memref<16x160xf32, #tpu.memory_space<vmem>>, vector<4x64xf32>
    %c32_62 = arith.constant 32 : index
    %c64_63 = arith.constant 64 : index
    %47 = vector.load %arg6[%c32_62, %c64_63] : memref<112x128xf32, #tpu.memory_space<vmem>>, vector<4x64xf32>
    tpu.vector_store %arg6[%c32_62, %c64_63], %46 {strides = array<i32>} : memref<112x128xf32, #tpu.memory_space<vmem>>, vector<4x64xf32>,
    %c0_64 = arith.constant 0 : index
    %c0_65 = arith.constant 0 : index
    %c0_66 = arith.constant 0 : index
    %c0_67 = arith.constant 0 : index
    %48 = vector.load %arg2[%c0_64, %c0_65, %c0_66, %c0_67] : memref<1x3x16x112xf32, #tpu.memory_space<vmem>>, vector<1x1x8x36xf32>
    %49 = vector.shape_cast %48 : vector<1x1x8x36xf32> to vector<8x36xf32>
    %c0_68 = arith.constant 0 : index
    %c0_69 = arith.constant 0 : index
    %c0_70 = arith.constant 0 : index
    %50 = vector.load %arg3[%c0_68, %c0_69, %c0_70] : memref<1x16x7xf32, #tpu.memory_space<vmem>>, vector<1x8x1xf32>
    %51 = vector.shape_cast %50 : vector<1x8x1xf32> to vector<8x1xf32>
    %c0_71 = arith.constant 0 : index
    %c0_72 = arith.constant 0 : index
    %52 = vector.load %arg6[%c0_71, %c0_72] : memref<112x128xf32, #tpu.memory_space<vmem>>, vector<36x128xf32>
    %cst_73 = arith.constant dense<0.000000e+00> : vector<8x128xf32>
    %53 = tpu.matmul %49, %52, %cst_73 {dimension_numbers = #tpu.dot_dimension_numbers<[1], [0], [0], [1], [0, 0, 1, 1], [], []>} : vector<8x36xf32>, vector<36x128xf32>, vector<8x128xf32> -> vector<8x128xf32>
    %54 = vector.broadcast %51 : vector<8x1xf32> to vector<8x128xf32>
    %55 = arith.addf %53, %54 : vector<8x128xf32>
    %cst_74 = arith.constant 0.000000e+00 : f32
    %56 = vector.broadcast %cst_74 : f32 to vector<8x128xf32>
    %57 = arith.maximumf %55, %56 : vector<8x128xf32>
    %c0_75 = arith.constant 0 : index
    %c0_76 = arith.constant 0 : index
    %c1_77 = arith.constant 1 : index
    %58 = vector.load %arg3[%c0_75, %c0_76, %c1_77] : memref<1x16x7xf32, #tpu.memory_space<vmem>>, vector<1x8x1xf32>
    %59 = vector.shape_cast %58 : vector<1x8x1xf32> to vector<8x1xf32>
    %c0_78 = arith.constant 0 : index
    %c0_79 = arith.constant 0 : index
    %c2 = arith.constant 2 : index
    %60 = vector.load %arg3[%c0_78, %c0_79, %c2] : memref<1x16x7xf32, #tpu.memory_space<vmem>>, vector<1x8x1xf32>
    %61 = vector.shape_cast %60 : vector<1x8x1xf32> to vector<8x1xf32>
    %62 = vector.broadcast %59 : vector<8x1xf32> to vector<8x128xf32>
    %63 = arith.mulf %57, %62 : vector<8x128xf32>
    %64 = vector.broadcast %61 : vector<8x1xf32> to vector<8x128xf32>
    %65 = arith.addf %63, %64 : vector<8x128xf32>
    %66 = vector.shape_cast %65 : vector<8x128xf32> to vector<8x64x2xf32>
    %cst_80 = arith.constant dense<0xFF800000> : vector<8x64xf32>
    %67 = vector.multi_reduction <maximumf>, %66, %cst_80 [2] : vector<8x64x2xf32> to vector<8x64xf32>
    %cst_81 = arith.constant 0.000000e+00 : f32
    %68 = vector.broadcast %cst_81 : f32 to vector<8x4xf32>
    %c0_82 = arith.constant 0 : index
    %c0_83 = arith.constant 0 : index
    %69 = vector.load %arg5[%c0_82, %c0_83] : memref<16x160xf32, #tpu.memory_space<vmem>>, vector<8x4xf32>
    tpu.vector_store %arg5[%c0_82, %c0_83], %68 {strides = array<i32>} : memref<16x160xf32, #tpu.memory_space<vmem>>, vector<8x4xf32>,
    %cst_84 = arith.constant 0.000000e+00 : f32
    %70 = vector.broadcast %cst_84 : f32 to vector<8x8xf32>
    %c0_85 = arith.constant 0 : index
    %c36 = arith.constant 36 : index
    %71 = vector.load %arg5[%c0_85, %c36] : memref<16x160xf32, #tpu.memory_space<vmem>>, vector<8x8xf32>
    tpu.vector_store %arg5[%c0_85, %c36], %70 {strides = array<i32>} : memref<16x160xf32, #tpu.memory_space<vmem>>, vector<8x8xf32>,
    %cst_86 = arith.constant 0.000000e+00 : f32
    %72 = vector.broadcast %cst_86 : f32 to vector<8x4xf32>
    %c0_87 = arith.constant 0 : index
    %c76 = arith.constant 76 : index
    %73 = vector.load %arg5[%c0_87, %c76] : memref<16x160xf32, #tpu.memory_space<vmem>>, vector<8x4xf32>
    tpu.vector_store %arg5[%c0_87, %c76], %72 {strides = array<i32>} : memref<16x160xf32, #tpu.memory_space<vmem>>, vector<8x4xf32>,
    %74 = vector.extract_strided_slice %67 {offsets = [0, 0], sizes = [8, 32], strides = [1, 1]} : vector<8x64xf32> to vector<8x32xf32>
    %c0_88 = arith.constant 0 : index
    %c4_89 = arith.constant 4 : index
    %75 = vector.load %arg5[%c0_88, %c4_89] : memref<16x160xf32, #tpu.memory_space<vmem>>, vector<8x32xf32>
    tpu.vector_store %arg5[%c0_88, %c4_89], %74 {strides = array<i32>} : memref<16x160xf32, #tpu.memory_space<vmem>>, vector<8x32xf32>,
    %76 = vector.extract_strided_slice %67 {offsets = [0, 32], sizes = [8, 32], strides = [1, 1]} : vector<8x64xf32> to vector<8x32xf32>
    %c0_90 = arith.constant 0 : index
    %c44 = arith.constant 44 : index
    %77 = vector.load %arg5[%c0_90, %c44] : memref<16x160xf32, #tpu.memory_space<vmem>>, vector<8x32xf32>
    tpu.vector_store %arg5[%c0_90, %c44], %76 {strides = array<i32>} : memref<16x160xf32, #tpu.memory_space<vmem>>, vector<8x32xf32>,
    %c0_91 = arith.constant 0 : index
    %c0_92 = arith.constant 0 : index
    %78 = vector.load %arg5[%c0_91, %c0_92] : memref<16x160xf32, #tpu.memory_space<vmem>>, vector<8x32xf32>
    %c0_93 = arith.constant 0 : index
    %c0_94 = arith.constant 0 : index
    %79 = vector.load %arg6[%c0_93, %c0_94] : memref<112x128xf32, #tpu.memory_space<vmem>>, vector<8x32xf32>
    tpu.vector_store %arg6[%c0_93, %c0_94], %78 {strides = array<i32>} : memref<112x128xf32, #tpu.memory_space<vmem>>, vector<8x32xf32>,
    %c0_95 = arith.constant 0 : index
    %c40 = arith.constant 40 : index
    %80 = vector.load %arg5[%c0_95, %c40] : memref<16x160xf32, #tpu.memory_space<vmem>>, vector<8x32xf32>
    %c0_96 = arith.constant 0 : index
    %c32_97 = arith.constant 32 : index
    %81 = vector.load %arg6[%c0_96, %c32_97] : memref<112x128xf32, #tpu.memory_space<vmem>>, vector<8x32xf32>
    tpu.vector_store %arg6[%c0_96, %c32_97], %80 {strides = array<i32>} : memref<112x128xf32, #tpu.memory_space<vmem>>, vector<8x32xf32>,
    %c0_98 = arith.constant 0 : index
    %c2_99 = arith.constant 2 : index
    %82 = vector.load %arg5[%c0_98, %c2_99] : memref<16x160xf32, #tpu.memory_space<vmem>>, vector<8x32xf32>
    %c8_100 = arith.constant 8 : index
    %c0_101 = arith.constant 0 : index
    %83 = vector.load %arg6[%c8_100, %c0_101] : memref<112x128xf32, #tpu.memory_space<vmem>>, vector<8x32xf32>
    tpu.vector_store %arg6[%c8_100, %c0_101], %82 {strides = array<i32>} : memref<112x128xf32, #tpu.memory_space<vmem>>, vector<8x32xf32>,
    %c0_102 = arith.constant 0 : index
    %c42 = arith.constant 42 : index
    %84 = vector.load %arg5[%c0_102, %c42] : memref<16x160xf32, #tpu.memory_space<vmem>>, vector<8x32xf32>
    %c8_103 = arith.constant 8 : index
    %c32_104 = arith.constant 32 : index
    %85 = vector.load %arg6[%c8_103, %c32_104] : memref<112x128xf32, #tpu.memory_space<vmem>>, vector<8x32xf32>
    tpu.vector_store %arg6[%c8_103, %c32_104], %84 {strides = array<i32>} : memref<112x128xf32, #tpu.memory_space<vmem>>, vector<8x32xf32>,
    %c0_105 = arith.constant 0 : index
    %c3 = arith.constant 3 : index
    %86 = vector.load %arg5[%c0_105, %c3] : memref<16x160xf32, #tpu.memory_space<vmem>>, vector<8x32xf32>
    %c16_106 = arith.constant 16 : index
    %c0_107 = arith.constant 0 : index
    %87 = vector.load %arg6[%c16_106, %c0_107] : memref<112x128xf32, #tpu.memory_space<vmem>>, vector<8x32xf32>
    tpu.vector_store %arg6[%c16_106, %c0_107], %86 {strides = array<i32>} : memref<112x128xf32, #tpu.memory_space<vmem>>, vector<8x32xf32>,
    %c0_108 = arith.constant 0 : index
    %c43 = arith.constant 43 : index
    %88 = vector.load %arg5[%c0_108, %c43] : memref<16x160xf32, #tpu.memory_space<vmem>>, vector<8x32xf32>
    %c16_109 = arith.constant 16 : index
    %c32_110 = arith.constant 32 : index
    %89 = vector.load %arg6[%c16_109, %c32_110] : memref<112x128xf32, #tpu.memory_space<vmem>>, vector<8x32xf32>
    tpu.vector_store %arg6[%c16_109, %c32_110], %88 {strides = array<i32>} : memref<112x128xf32, #tpu.memory_space<vmem>>, vector<8x32xf32>,
    %c0_111 = arith.constant 0 : index
    %c4_112 = arith.constant 4 : index
    %90 = vector.load %arg5[%c0_111, %c4_112] : memref<16x160xf32, #tpu.memory_space<vmem>>, vector<8x32xf32>
    %c24_113 = arith.constant 24 : index
    %c0_114 = arith.constant 0 : index
    %91 = vector.load %arg6[%c24_113, %c0_114] : memref<112x128xf32, #tpu.memory_space<vmem>>, vector<8x32xf32>
    tpu.vector_store %arg6[%c24_113, %c0_114], %90 {strides = array<i32>} : memref<112x128xf32, #tpu.memory_space<vmem>>, vector<8x32xf32>,
    %c0_115 = arith.constant 0 : index
    %c44_116 = arith.constant 44 : index
    %92 = vector.load %arg5[%c0_115, %c44_116] : memref<16x160xf32, #tpu.memory_space<vmem>>, vector<8x32xf32>
    %c24_117 = arith.constant 24 : index
    %c32_118 = arith.constant 32 : index
    %93 = vector.load %arg6[%c24_117, %c32_118] : memref<112x128xf32, #tpu.memory_space<vmem>>, vector<8x32xf32>
    tpu.vector_store %arg6[%c24_117, %c32_118], %92 {strides = array<i32>} : memref<112x128xf32, #tpu.memory_space<vmem>>, vector<8x32xf32>,
    %c0_119 = arith.constant 0 : index
    %c5 = arith.constant 5 : index
    %94 = vector.load %arg5[%c0_119, %c5] : memref<16x160xf32, #tpu.memory_space<vmem>>, vector<8x32xf32>
    %c32_120 = arith.constant 32 : index
    %c0_121 = arith.constant 0 : index
    %95 = vector.load %arg6[%c32_120, %c0_121] : memref<112x128xf32, #tpu.memory_space<vmem>>, vector<8x32xf32>
    tpu.vector_store %arg6[%c32_120, %c0_121], %94 {strides = array<i32>} : memref<112x128xf32, #tpu.memory_space<vmem>>, vector<8x32xf32>,
    %c0_122 = arith.constant 0 : index
    %c45 = arith.constant 45 : index
    %96 = vector.load %arg5[%c0_122, %c45] : memref<16x160xf32, #tpu.memory_space<vmem>>, vector<8x32xf32>
    %c32_123 = arith.constant 32 : index
    %c32_124 = arith.constant 32 : index
    %97 = vector.load %arg6[%c32_123, %c32_124] : memref<112x128xf32, #tpu.memory_space<vmem>>, vector<8x32xf32>
    tpu.vector_store %arg6[%c32_123, %c32_124], %96 {strides = array<i32>} : memref<112x128xf32, #tpu.memory_space<vmem>>, vector<8x32xf32>,
    %c0_125 = arith.constant 0 : index
    %c6_126 = arith.constant 6 : index
    %98 = vector.load %arg5[%c0_125, %c6_126] : memref<16x160xf32, #tpu.memory_space<vmem>>, vector<8x32xf32>
    %c40_127 = arith.constant 40 : index
    %c0_128 = arith.constant 0 : index
    %99 = vector.load %arg6[%c40_127, %c0_128] : memref<112x128xf32, #tpu.memory_space<vmem>>, vector<8x32xf32>
    tpu.vector_store %arg6[%c40_127, %c0_128], %98 {strides = array<i32>} : memref<112x128xf32, #tpu.memory_space<vmem>>, vector<8x32xf32>,
    %c0_129 = arith.constant 0 : index
    %c46 = arith.constant 46 : index
    %100 = vector.load %arg5[%c0_129, %c46] : memref<16x160xf32, #tpu.memory_space<vmem>>, vector<8x32xf32>
    %c40_130 = arith.constant 40 : index
    %c32_131 = arith.constant 32 : index
    %101 = vector.load %arg6[%c40_130, %c32_131] : memref<112x128xf32, #tpu.memory_space<vmem>>, vector<8x32xf32>
    tpu.vector_store %arg6[%c40_130, %c32_131], %100 {strides = array<i32>} : memref<112x128xf32, #tpu.memory_space<vmem>>, vector<8x32xf32>,
    %c0_132 = arith.constant 0 : index
    %c8_133 = arith.constant 8 : index
    %102 = vector.load %arg5[%c0_132, %c8_133] : memref<16x160xf32, #tpu.memory_space<vmem>>, vector<8x32xf32>
    %c48 = arith.constant 48 : index
    %c0_134 = arith.constant 0 : index
    %103 = vector.load %arg6[%c48, %c0_134] : memref<112x128xf32, #tpu.memory_space<vmem>>, vector<8x32xf32>
    tpu.vector_store %arg6[%c48, %c0_134], %102 {strides = array<i32>} : memref<112x128xf32, #tpu.memory_space<vmem>>, vector<8x32xf32>,
    %c0_135 = arith.constant 0 : index
    %c48_136 = arith.constant 48 : index
    %104 = vector.load %arg5[%c0_135, %c48_136] : memref<16x160xf32, #tpu.memory_space<vmem>>, vector<8x32xf32>
    %c48_137 = arith.constant 48 : index
    %c32_138 = arith.constant 32 : index
    %105 = vector.load %arg6[%c48_137, %c32_138] : memref<112x128xf32, #tpu.memory_space<vmem>>, vector<8x32xf32>
    tpu.vector_store %arg6[%c48_137, %c32_138], %104 {strides = array<i32>} : memref<112x128xf32, #tpu.memory_space<vmem>>, vector<8x32xf32>,
    %c0_139 = arith.constant 0 : index
    %c1_140 = arith.constant 1 : index
    %c0_141 = arith.constant 0 : index
    %c0_142 = arith.constant 0 : index
    %106 = vector.load %arg2[%c0_139, %c1_140, %c0_141, %c0_142] : memref<1x3x16x112xf32, #tpu.memory_space<vmem>>, vector<1x1x16x56xf32>
    %107 = vector.shape_cast %106 : vector<1x1x16x56xf32> to vector<16x56xf32>
    %c0_143 = arith.constant 0 : index
    %c0_144 = arith.constant 0 : index
    %c3_145 = arith.constant 3 : index
    %108 = vector.load %arg3[%c0_143, %c0_144, %c3_145] : memref<1x16x7xf32, #tpu.memory_space<vmem>>, vector<1x16x1xf32>
    %109 = vector.shape_cast %108 : vector<1x16x1xf32> to vector<16x1xf32>
    %c0_146 = arith.constant 0 : index
    %c0_147 = arith.constant 0 : index
    %110 = vector.load %arg6[%c0_146, %c0_147] : memref<112x128xf32, #tpu.memory_space<vmem>>, vector<56x64xf32>
    %cst_148 = arith.constant dense<0.000000e+00> : vector<16x64xf32>
    %111 = tpu.matmul %107, %110, %cst_148 {dimension_numbers = #tpu.dot_dimension_numbers<[1], [0], [0], [1], [0, 0, 1, 1], [], []>} : vector<16x56xf32>, vector<56x64xf32>, vector<16x64xf32> -> vector<16x64xf32>
    %112 = vector.broadcast %109 : vector<16x1xf32> to vector<16x64xf32>
    %113 = arith.addf %111, %112 : vector<16x64xf32>
    %cst_149 = arith.constant 0.000000e+00 : f32
    %114 = vector.broadcast %cst_149 : f32 to vector<16x64xf32>
    %115 = arith.maximumf %113, %114 : vector<16x64xf32>
    %cst_150 = arith.constant 0.000000e+00 : f32
    %116 = vector.broadcast %cst_150 : f32 to vector<16x8xf32>
    %c0_151 = arith.constant 0 : index
    %c0_152 = arith.constant 0 : index
    %117 = vector.load %arg5[%c0_151, %c0_152] : memref<16x160xf32, #tpu.memory_space<vmem>>, vector<16x8xf32>
    tpu.vector_store %arg5[%c0_151, %c0_152], %116 {strides = array<i32>} : memref<16x160xf32, #tpu.memory_space<vmem>>, vector<16x8xf32>,
    %cst_153 = arith.constant 0.000000e+00 : f32
    %118 = vector.broadcast %cst_153 : f32 to vector<16x16xf32>
    %c0_154 = arith.constant 0 : index
    %c40_155 = arith.constant 40 : index
    %119 = vector.load %arg5[%c0_154, %c40_155] : memref<16x160xf32, #tpu.memory_space<vmem>>, vector<16x16xf32>
    tpu.vector_store %arg5[%c0_154, %c40_155], %118 {strides = array<i32>} : memref<16x160xf32, #tpu.memory_space<vmem>>, vector<16x16xf32>,
    %cst_156 = arith.constant 0.000000e+00 : f32
    %120 = vector.broadcast %cst_156 : f32 to vector<16x8xf32>
    %c0_157 = arith.constant 0 : index
    %c88_158 = arith.constant 88 : index
    %121 = vector.load %arg5[%c0_157, %c88_158] : memref<16x160xf32, #tpu.memory_space<vmem>>, vector<16x8xf32>
    tpu.vector_store %arg5[%c0_157, %c88_158], %120 {strides = array<i32>} : memref<16x160xf32, #tpu.memory_space<vmem>>, vector<16x8xf32>,
    %122 = vector.extract_strided_slice %115 {offsets = [0, 0], sizes = [16, 32], strides = [1, 1]} : vector<16x64xf32> to vector<16x32xf32>
    %c0_159 = arith.constant 0 : index
    %c8_160 = arith.constant 8 : index
    %123 = vector.load %arg5[%c0_159, %c8_160] : memref<16x160xf32, #tpu.memory_space<vmem>>, vector<16x32xf32>
    tpu.vector_store %arg5[%c0_159, %c8_160], %122 {strides = array<i32>} : memref<16x160xf32, #tpu.memory_space<vmem>>, vector<16x32xf32>,
    %124 = vector.extract_strided_slice %115 {offsets = [0, 32], sizes = [16, 32], strides = [1, 1]} : vector<16x64xf32> to vector<16x32xf32>
    %c0_161 = arith.constant 0 : index
    %c56 = arith.constant 56 : index
    %125 = vector.load %arg5[%c0_161, %c56] : memref<16x160xf32, #tpu.memory_space<vmem>>, vector<16x32xf32>
    tpu.vector_store %arg5[%c0_161, %c56], %124 {strides = array<i32>} : memref<16x160xf32, #tpu.memory_space<vmem>>, vector<16x32xf32>,
    %c0_162 = arith.constant 0 : index
    %c0_163 = arith.constant 0 : index
    %126 = vector.load %arg5[%c0_162, %c0_163] : memref<16x160xf32, #tpu.memory_space<vmem>>, vector<16x32xf32>
    %c0_164 = arith.constant 0 : index
    %c0_165 = arith.constant 0 : index
    %127 = vector.load %arg6[%c0_164, %c0_165] : memref<112x128xf32, #tpu.memory_space<vmem>>, vector<16x32xf32>
    tpu.vector_store %arg6[%c0_164, %c0_165], %126 {strides = array<i32>} : memref<112x128xf32, #tpu.memory_space<vmem>>, vector<16x32xf32>,
    %c0_166 = arith.constant 0 : index
    %c48_167 = arith.constant 48 : index
    %128 = vector.load %arg5[%c0_166, %c48_167] : memref<16x160xf32, #tpu.memory_space<vmem>>, vector<16x32xf32>
    %c0_168 = arith.constant 0 : index
    %c32_169 = arith.constant 32 : index
    %129 = vector.load %arg6[%c0_168, %c32_169] : memref<112x128xf32, #tpu.memory_space<vmem>>, vector<16x32xf32>
    tpu.vector_store %arg6[%c0_168, %c32_169], %128 {strides = array<i32>} : memref<112x128xf32, #tpu.memory_space<vmem>>, vector<16x32xf32>,
    %c0_170 = arith.constant 0 : index
    %c4_171 = arith.constant 4 : index
    %130 = vector.load %arg5[%c0_170, %c4_171] : memref<16x160xf32, #tpu.memory_space<vmem>>, vector<16x32xf32>
    %c16_172 = arith.constant 16 : index
    %c0_173 = arith.constant 0 : index
    %131 = vector.load %arg6[%c16_172, %c0_173] : memref<112x128xf32, #tpu.memory_space<vmem>>, vector<16x32xf32>
    tpu.vector_store %arg6[%c16_172, %c0_173], %130 {strides = array<i32>} : memref<112x128xf32, #tpu.memory_space<vmem>>, vector<16x32xf32>,
    %c0_174 = arith.constant 0 : index
    %c52 = arith.constant 52 : index
    %132 = vector.load %arg5[%c0_174, %c52] : memref<16x160xf32, #tpu.memory_space<vmem>>, vector<16x32xf32>
    %c16_175 = arith.constant 16 : index
    %c32_176 = arith.constant 32 : index
    %133 = vector.load %arg6[%c16_175, %c32_176] : memref<112x128xf32, #tpu.memory_space<vmem>>, vector<16x32xf32>
    tpu.vector_store %arg6[%c16_175, %c32_176], %132 {strides = array<i32>} : memref<112x128xf32, #tpu.memory_space<vmem>>, vector<16x32xf32>,
    %c0_177 = arith.constant 0 : index
    %c7_178 = arith.constant 7 : index
    %134 = vector.load %arg5[%c0_177, %c7_178] : memref<16x160xf32, #tpu.memory_space<vmem>>, vector<16x32xf32>
    %c32_179 = arith.constant 32 : index
    %c0_180 = arith.constant 0 : index
    %135 = vector.load %arg6[%c32_179, %c0_180] : memref<112x128xf32, #tpu.memory_space<vmem>>, vector<16x32xf32>
    tpu.vector_store %arg6[%c32_179, %c0_180], %134 {strides = array<i32>} : memref<112x128xf32, #tpu.memory_space<vmem>>, vector<16x32xf32>,
    %c0_181 = arith.constant 0 : index
    %c55 = arith.constant 55 : index
    %136 = vector.load %arg5[%c0_181, %c55] : memref<16x160xf32, #tpu.memory_space<vmem>>, vector<16x32xf32>
    %c32_182 = arith.constant 32 : index
    %c32_183 = arith.constant 32 : index
    %137 = vector.load %arg6[%c32_182, %c32_183] : memref<112x128xf32, #tpu.memory_space<vmem>>, vector<16x32xf32>
    tpu.vector_store %arg6[%c32_182, %c32_183], %136 {strides = array<i32>} : memref<112x128xf32, #tpu.memory_space<vmem>>, vector<16x32xf32>,
    %c0_184 = arith.constant 0 : index
    %c8_185 = arith.constant 8 : index
    %138 = vector.load %arg5[%c0_184, %c8_185] : memref<16x160xf32, #tpu.memory_space<vmem>>, vector<16x32xf32>
    %c48_186 = arith.constant 48 : index
    %c0_187 = arith.constant 0 : index
    %139 = vector.load %arg6[%c48_186, %c0_187] : memref<112x128xf32, #tpu.memory_space<vmem>>, vector<16x32xf32>
    tpu.vector_store %arg6[%c48_186, %c0_187], %138 {strides = array<i32>} : memref<112x128xf32, #tpu.memory_space<vmem>>, vector<16x32xf32>,
    %c0_188 = arith.constant 0 : index
    %c56_189 = arith.constant 56 : index
    %140 = vector.load %arg5[%c0_188, %c56_189] : memref<16x160xf32, #tpu.memory_space<vmem>>, vector<16x32xf32>
    %c48_190 = arith.constant 48 : index
    %c32_191 = arith.constant 32 : index
    %141 = vector.load %arg6[%c48_190, %c32_191] : memref<112x128xf32, #tpu.memory_space<vmem>>, vector<16x32xf32>
    tpu.vector_store %arg6[%c48_190, %c32_191], %140 {strides = array<i32>} : memref<112x128xf32, #tpu.memory_space<vmem>>, vector<16x32xf32>,
    %c0_192 = arith.constant 0 : index
    %c9_193 = arith.constant 9 : index
    %142 = vector.load %arg5[%c0_192, %c9_193] : memref<16x160xf32, #tpu.memory_space<vmem>>, vector<16x32xf32>
    %c64_194 = arith.constant 64 : index
    %c0_195 = arith.constant 0 : index
    %143 = vector.load %arg6[%c64_194, %c0_195] : memref<112x128xf32, #tpu.memory_space<vmem>>, vector<16x32xf32>
    tpu.vector_store %arg6[%c64_194, %c0_195], %142 {strides = array<i32>} : memref<112x128xf32, #tpu.memory_space<vmem>>, vector<16x32xf32>,
    %c0_196 = arith.constant 0 : index
    %c57 = arith.constant 57 : index
    %144 = vector.load %arg5[%c0_196, %c57] : memref<16x160xf32, #tpu.memory_space<vmem>>, vector<16x32xf32>
    %c64_197 = arith.constant 64 : index
    %c32_198 = arith.constant 32 : index
    %145 = vector.load %arg6[%c64_197, %c32_198] : memref<112x128xf32, #tpu.memory_space<vmem>>, vector<16x32xf32>
    tpu.vector_store %arg6[%c64_197, %c32_198], %144 {strides = array<i32>} : memref<112x128xf32, #tpu.memory_space<vmem>>, vector<16x32xf32>,
    %c0_199 = arith.constant 0 : index
    %c12_200 = arith.constant 12 : index
    %146 = vector.load %arg5[%c0_199, %c12_200] : memref<16x160xf32, #tpu.memory_space<vmem>>, vector<16x32xf32>
    %c80_201 = arith.constant 80 : index
    %c0_202 = arith.constant 0 : index
    %147 = vector.load %arg6[%c80_201, %c0_202] : memref<112x128xf32, #tpu.memory_space<vmem>>, vector<16x32xf32>
    tpu.vector_store %arg6[%c80_201, %c0_202], %146 {strides = array<i32>} : memref<112x128xf32, #tpu.memory_space<vmem>>, vector<16x32xf32>,
    %c0_203 = arith.constant 0 : index
    %c60 = arith.constant 60 : index
    %148 = vector.load %arg5[%c0_203, %c60] : memref<16x160xf32, #tpu.memory_space<vmem>>, vector<16x32xf32>
    %c80_204 = arith.constant 80 : index
    %c32_205 = arith.constant 32 : index
    %149 = vector.load %arg6[%c80_204, %c32_205] : memref<112x128xf32, #tpu.memory_space<vmem>>, vector<16x32xf32>
    tpu.vector_store %arg6[%c80_204, %c32_205], %148 {strides = array<i32>} : memref<112x128xf32, #tpu.memory_space<vmem>>, vector<16x32xf32>,
    %c0_206 = arith.constant 0 : index
    %c16_207 = arith.constant 16 : index
    %150 = vector.load %arg5[%c0_206, %c16_207] : memref<16x160xf32, #tpu.memory_space<vmem>>, vector<16x32xf32>
    %c96_208 = arith.constant 96 : index
    %c0_209 = arith.constant 0 : index
    %151 = vector.load %arg6[%c96_208, %c0_209] : memref<112x128xf32, #tpu.memory_space<vmem>>, vector<16x32xf32>
    tpu.vector_store %arg6[%c96_208, %c0_209], %150 {strides = array<i32>} : memref<112x128xf32, #tpu.memory_space<vmem>>, vector<16x32xf32>,
    %c0_210 = arith.constant 0 : index
    %c64_211 = arith.constant 64 : index
    %152 = vector.load %arg5[%c0_210, %c64_211] : memref<16x160xf32, #tpu.memory_space<vmem>>, vector<16x32xf32>
    %c96_212 = arith.constant 96 : index
    %c32_213 = arith.constant 32 : index
    %153 = vector.load %arg6[%c96_212, %c32_213] : memref<112x128xf32, #tpu.memory_space<vmem>>, vector<16x32xf32>
    tpu.vector_store %arg6[%c96_212, %c32_213], %152 {strides = array<i32>} : memref<112x128xf32, #tpu.memory_space<vmem>>, vector<16x32xf32>,
    %c0_214 = arith.constant 0 : index
    %c2_215 = arith.constant 2 : index
    %c0_216 = arith.constant 0 : index
    %c0_217 = arith.constant 0 : index
    %154 = vector.load %arg2[%c0_214, %c2_215, %c0_216, %c0_217] : memref<1x3x16x112xf32, #tpu.memory_space<vmem>>, vector<1x1x16x112xf32>
    %155 = vector.shape_cast %154 : vector<1x1x16x112xf32> to vector<16x112xf32>
    %c0_218 = arith.constant 0 : index
    %c0_219 = arith.constant 0 : index
    %c4_220 = arith.constant 4 : index
    %156 = vector.load %arg3[%c0_218, %c0_219, %c4_220] : memref<1x16x7xf32, #tpu.memory_space<vmem>>, vector<1x16x1xf32>
    %157 = vector.shape_cast %156 : vector<1x16x1xf32> to vector<16x1xf32>
    %c0_221 = arith.constant 0 : index
    %c0_222 = arith.constant 0 : index
    %158 = vector.load %arg6[%c0_221, %c0_222] : memref<112x128xf32, #tpu.memory_space<vmem>>, vector<112x64xf32>
    %cst_223 = arith.constant dense<0.000000e+00> : vector<16x64xf32>
    %159 = tpu.matmul %155, %158, %cst_223 {dimension_numbers = #tpu.dot_dimension_numbers<[1], [0], [0], [1], [0, 0, 1, 1], [], []>} : vector<16x112xf32>, vector<112x64xf32>, vector<16x64xf32> -> vector<16x64xf32>
    %160 = vector.broadcast %157 : vector<16x1xf32> to vector<16x64xf32>
    %161 = arith.addf %159, %160 : vector<16x64xf32>
    %cst_224 = arith.constant 0.000000e+00 : f32
    %162 = vector.broadcast %cst_224 : f32 to vector<16x64xf32>
    %163 = arith.maximumf %161, %162 : vector<16x64xf32>
    %c0_225 = arith.constant 0 : index
    %c0_226 = arith.constant 0 : index
    %c5_227 = arith.constant 5 : index
    %164 = vector.load %arg3[%c0_225, %c0_226, %c5_227] : memref<1x16x7xf32, #tpu.memory_space<vmem>>, vector<1x16x1xf32>
    %165 = vector.shape_cast %164 : vector<1x16x1xf32> to vector<16x1xf32>
    %c0_228 = arith.constant 0 : index
    %c0_229 = arith.constant 0 : index
    %c6_230 = arith.constant 6 : index
    %166 = vector.load %arg3[%c0_228, %c0_229, %c6_230] : memref<1x16x7xf32, #tpu.memory_space<vmem>>, vector<1x16x1xf32>
    %167 = vector.shape_cast %166 : vector<1x16x1xf32> to vector<16x1xf32>
    %168 = vector.broadcast %165 : vector<16x1xf32> to vector<16x64xf32>
    %169 = arith.mulf %163, %168 : vector<16x64xf32>
    %170 = vector.broadcast %167 : vector<16x1xf32> to vector<16x64xf32>
    %171 = arith.addf %169, %170 : vector<16x64xf32>
    %172 = vector.shape_cast %171 : vector<16x64xf32> to vector<16x32x2xf32>
    %cst_231 = arith.constant dense<0xFF800000> : vector<16x32xf32>
    %173 = vector.multi_reduction <maximumf>, %172, %cst_231 [2] : vector<16x32x2xf32> to vector<16x32xf32>
    %c0_232 = arith.constant 0 : index
    %c0_233 = arith.constant 0 : index
    %c0_234 = arith.constant 0 : index
    %174 = vector.load %arg4[%c0_232, %c0_233, %c0_234] : memref<1x16x32xf32, #tpu.memory_space<vmem>>, vector<1x16x32xf32>
    %175 = vector.shape_cast %174 : vector<1x16x32xf32> to vector<16x32xf32>
    %176 = vector.shape_cast %173 : vector<16x32xf32> to vector<1x16x32xf32>
    tpu.vector_store %arg4[%c0_232, %c0_233, %c0_234], %176 {strides = array<i32>} : memref<1x16x32xf32, #tpu.memory_space<vmem>>, vector<1x16x32xf32>,
    return
  }
  func.func @transform_0(%arg0: i32) -> (i32, i32, i32) {
    %c0_i32 = arith.constant 0 : i32
    %c0_i32_0 = arith.constant 0 : i32
    %c0_i32_1 = arith.constant 0 : i32
    %c0_i32_2 = arith.constant 0 : i32
    return %c0_i32, %c0_i32_0, %c0_i32_1 : i32, i32, i32
  }
  func.func @transform_1(%arg0: i32) -> (i32, i32, i32, i32) {
    %c0_i32 = arith.constant 0 : i32
    %c0_i32_0 = arith.constant 0 : i32
    %c0_i32_1 = arith.constant 0 : i32
    %c0_i32_2 = arith.constant 0 : i32
    return %arg0, %c0_i32, %c0_i32_0, %c0_i32_1 : i32, i32, i32, i32
  }
  func.func @transform_2(%arg0: i32) -> (i32, i32, i32) {
    %c0_i32 = arith.constant 0 : i32
    %c0_i32_0 = arith.constant 0 : i32
    %c0_i32_1 = arith.constant 0 : i32
    return %arg0, %c0_i32, %c0_i32_0 : i32, i32, i32
  }
  func.func @transform_3(%arg0: i32) -> (i32, i32, i32) {
    %c0_i32 = arith.constant 0 : i32
    %c0_i32_0 = arith.constant 0 : i32
    %c0_i32_1 = arith.constant 0 : i32
    return %arg0, %c0_i32, %c0_i32_0 : i32, i32, i32
  }
}

</mosaic_0001>

<llo_original>
// kernel: tpu_custom_call.1
$region0: #{tpu_custom_call.1}
  #allocation0 [shape = 'u32[]', space=smem, size = 0x4, offset = 0x4, fixed_abs, tag = 'smem constant byte address 0x4 - core index']
  #allocation1 [shape = 'u32[144,128]{1,0:T(1,128)}', space=vmem, size = 0x12000, scoped, tag = 'internal scratch']
  #allocation2 [shape = 'f32[16,160]{1,0:T(8,128)}', space=vmem, size = 0x4000, scoped, tag = 'scratch operand']
  #allocation3 [shape = 'f32[112,128]{1,0:T(8,128)}', space=vmem, size = 0xe000, scoped, tag = 'scratch operand']
  %s0 = inlined_call_operand.vmem [shape: f32[2,4,64], index: 0, kind: input, shape index: {}]
  %s1 = inlined_call_operand.hbm [shape: f32[3,3,16,112], index: 1, kind: input, shape index: {}]
  %s2 = inlined_call_operand.vmem [shape: f32[3,16,7], index: 2, kind: input, shape index: {}]
  %s3 = inlined_call_operand.hbm [shape: f32[3,16,32], index: 3, kind: output, shape index: {}]
  %s4 = sld [smem:[#allocation0]]
  $region49: #{tpu_custom_call.1} parent=0
    _
  %s6 = ssub.s32 1, %s4
  %s7 = scalar_select 0, %s6, %s4
  $region1: #{tpu_custom_call.1} parent=0
    #allocation4 [shape = 'u8[49152]{0}', space=vmem, size = 0xc000, scoped, tag = 'input window, operand 1']
    #allocation5 [shape = 's32[2]{0}', space=sflag, size = 0x8, scoped, tag = 'scoped memory for tpu_custom_call.1']
    #allocation6 [shape = 's32[2]{0}', space=sflag, size = 0x8, scoped, tag = 'scoped memory for tpu_custom_call.1']
    #allocation7 [shape = 'u8[16384]{0}', space=vmem, size = 0x4000, scoped, tag = 'output window, operand 0']
    %8 = vsyncpa [#allocation5], 0
    %s9 = scalar_lea.sflag [#allocation5], 1
    %10 = vsyncpa %s9, 0
    %11 = vsyncpa [#allocation6], 0
    %s12 = scalar_lea.sflag [#allocation6], 1
    %13 = vsyncpa %s12, 0
    loop: start=0, step=1, limit=5
    $region2: #{tpu_custom_call.1} parent=1 // loop_pre_header
      _
    $region3: #{tpu_custom_call.1} parent=1 // loop_header
      %s15 = sphi 0, %s19
      %p16 = scmp.ge.s32.totalorder %s15, 5
      %s23 = sphi 0, %s23
      %s25 = sphi 0, %s23
      %s26 = sphi 0, %s25
      %s40 = sphi 0, %s26
      %s46 = sphi 0, %s48
      %s49 = sphi 0, %s46
      %s50 = sphi 0, %s49
      %s66 = sphi 0, %s50
      %s72 = sphi 0, %s74
      %s75 = sphi 0, %s72
      %s76 = sphi 0, %s75
      %s92 = sphi 0, %s76
      %s98 = sphi 0, %s100
      %s101 = sphi 0, %s98
      %s102 = sphi 0, %s101
      %s118 = sphi 0, %s102
    $region4: #{tpu_custom_call.1} parent=1 // loop_header_branch
      %18 = sbr.rel (%p16) target = $region8
    $region5: #{tpu_custom_call.1} parent=1 // loop_body
      %s20 = ssub.s32 %s15, 1
      %s21 = ssub.s32 %s15, 2
      %s22 = sadd.s32 %s15, 1
      %s24 = sadd.s32 %s23, 1
      %p27 = scmp.eq.s32.totalorder %s15, 2
      %p28 = scmp.ne.s32.totalorder %s23, %s25
      %p29 = scmp.eq.s32.totalorder %s15, 0
      %p30 = por %p28, %p29
      %p31 = scmp.ne.s32.totalorder %s23, %s25
      %p32 = scmp.eq.s32.totalorder %s20, 2
      %p33 = por %p31, %p32
      %p34 = scmp.ne.s32.totalorder %s25, %s26
      %p35 = scmp.eq.s32.totalorder %s20, 0
      %p36 = por %p34, %p35
      %p37 = scmp.ne.s32.totalorder %s25, %s26
      %p38 = scmp.eq.s32.totalorder %s21, 2
      %p39 = por %p37, %p38
      %p41 = scmp.ne.s32.totalorder %s26, %s40
      %p42 = scmp.eq.s32.totalorder %s21, 0
      %p43 = por %p41, %p42
      %s44 = ssub.s32 %s15, %s22
      %p45 = scmp.eq.s32.totalorder %s44, 0
      %s47 = sadd.s32 %s46, 1
      %s48 = scalar_select %p45, %s46, %s47
      %p51 = pneg %p45
      %p52 = scmp.eq.s32.totalorder %s15, 2
      %p53 = por %p51, %p52
      %p54 = scmp.ne.s32.totalorder %s46, %s49
      %p55 = scmp.eq.s32.totalorder %s15, 0
      %p56 = por %p54, %p55
      %p57 = scmp.ne.s32.totalorder %s46, %s49
      %p58 = scmp.eq.s32.totalorder %s20, 2
      %p59 = por %p57, %p58
      %p60 = scmp.ne.s32.totalorder %s49, %s50
      %p61 = scmp.eq.s32.totalorder %s20, 0
      %p62 = por %p60, %p61
      %p63 = scmp.ne.s32.totalorder %s49, %s50
      %p64 = scmp.eq.s32.totalorder %s21, 2
      %p65 = por %p63, %p64
      %p67 = scmp.ne.s32.totalorder %s50, %s66
      %p68 = scmp.eq.s32.totalorder %s21, 0
      %p69 = por %p67, %p68
      %s70 = ssub.s32 %s15, %s22
      %p71 = scmp.eq.s32.totalorder %s70, 0
      %s73 = sadd.s32 %s72, 1
      %s74 = scalar_select %p71, %s72, %s73
      %p77 = pneg %p71
      %p78 = scmp.eq.s32.totalorder %s15, 2
      %p79 = por %p77, %p78
      %p80 = scmp.ne.s32.totalorder %s72, %s75
      %p81 = scmp.eq.s32.totalorder %s15, 0
      %p82 = por %p80, %p81
      %p83 = scmp.ne.s32.totalorder %s72, %s75
      %p84 = scmp.eq.s32.totalorder %s20, 2
      %p85 = por %p83, %p84
      %p86 = scmp.ne.s32.totalorder %s75, %s76
      %p87 = scmp.eq.s32.totalorder %s20, 0
      %p88 = por %p86, %p87
      %p89 = scmp.ne.s32.totalorder %s75, %s76
      %p90 = scmp.eq.s32.totalorder %s21, 2
      %p91 = por %p89, %p90
      %p93 = scmp.ne.s32.totalorder %s76, %s92
      %p94 = scmp.eq.s32.totalorder %s21, 0
      %p95 = por %p93, %p94
      %s96 = ssub.s32 %s15, %s22
      %p97 = scmp.eq.s32.totalorder %s96, 0
      %s99 = sadd.s32 %s98, 1
      %s100 = scalar_select %p97, %s98, %s99
      %p103 = pneg %p97
      %p104 = scmp.eq.s32.totalorder %s15, 2
      %p105 = por %p103, %p104
      %p106 = scmp.ne.s32.totalorder %s98, %s101
      %p107 = scmp.eq.s32.totalorder %s15, 0
      %p108 = por %p106, %p107
      %p109 = scmp.ne.s32.totalorder %s98, %s101
      %p110 = scmp.eq.s32.totalorder %s20, 2
      %p111 = por %p109, %p110
      %p112 = scmp.ne.s32.totalorder %s101, %s102
      %p113 = scmp.eq.s32.totalorder %s20, 0
      %p114 = por %p112, %p113
      %p115 = scmp.ne.s32.totalorder %s101, %s102
      %p116 = scmp.eq.s32.totalorder %s21, 2
      %p117 = por %p115, %p116
      %p119 = scmp.ne.s32.totalorder %s102, %s118
      %p120 = scmp.eq.s32.totalorder %s21, 0
      %p121 = por %p119, %p120
      %p122 = scmp.le.s32.totalorder 1, %s15
      %p123 = scmp.lt.s32.totalorder %s15, 4
      %p124 = pnand %p122, %p123
      %p125 = pneg %p124
      // Predicated region
      $region9: #{tpu_custom_call.1} parent=5 // pred_check
        _
      $region10: #{tpu_custom_call.1} parent=5 // pred_check_branch
        %127 = sbr.rel (%p124) target = $region12
      $region11: #{tpu_custom_call.1} parent=5 // pred_region
        %s128 = ssub.s32 %s15, 1
        // Predicated region
        $region13: #{tpu_custom_call.1} parent=11 // pred_check
          %p129 = pneg %p36
        $region14: #{tpu_custom_call.1} parent=11 // pred_check_branch
          %131 = sbr.rel (%p129) target = $region16
        $region15: #{tpu_custom_call.1} parent=11 // pred_region
          _
        $region16: #{tpu_custom_call.1} parent=11 // pred_fallthru
          _
      $region12: #{tpu_custom_call.1} parent=5 // pred_fallthru
        _
      %p132 = scmp.lt.s32.totalorder %s15, 3
      // Predicated region
      $region17: #{tpu_custom_call.1} parent=5 // pred_check
        %p133 = pneg %p132
      $region18: #{tpu_custom_call.1} parent=5 // pred_check_branch
        %135 = sbr.rel (%p133) target = $region20
      $region19: #{tpu_custom_call.1} parent=5 // pred_region
        // Predicated region
        $region21: #{tpu_custom_call.1} parent=19 // pred_check
          %p136 = pneg %p56
        $region22: #{tpu_custom_call.1} parent=19 // pred_check_branch
          %138 = sbr.rel (%p136) target = $region24
        $region23: #{tpu_custom_call.1} parent=19 // pred_region
          %s139 = sand.u32 %s46, 1
          %s140 = scalar_lea.sflag [#allocation5], %s139
          %s141 = sand.u32 %s46, 1
          %s142 = smul.addr %s141, 48
          %s143 = scalar_lea.vmem [#allocation4], %s142
          %s145 = ssub.s32 768, 768
          %146 = vsyncadd %s140, %s145
          %s147 = smul.addr %s15, 6
          %s148 = smul.addr %s147, 128
          %s149 = scalar_lea.hbm %s1, %s148
          %s150 = sshll.u32 %s143, 4
          %s151 = int_to_ptr.vmem [resolvable:$true] %s150
          %156 = dma.hbm_to_vmem [thread:$0]  %s149, 768, %s151, %s140, 128, 128, 8
        $region24: #{tpu_custom_call.1} parent=19 // pred_fallthru
          _
        // Predicated region
        $region25: #{tpu_custom_call.1} parent=19 // pred_check
          %p157 = pneg %p82
        $region26: #{tpu_custom_call.1} parent=19 // pred_check_branch
          %159 = sbr.rel (%p157) target = $region28
        $region27: #{tpu_custom_call.1} parent=19 // pred_region
          %p160 = scmp.lt.s32.totalorder %s15, 2
          %s161 = scalar_select %p160, %s15, 2
          %s162 = smul.addr %s161, 2
          %s163 = smul.addr %s162, 8
          %s164 = scalar_lea.vmem %s2, %s163
        $region28: #{tpu_custom_call.1} parent=19 // pred_fallthru
          _
      $region20: #{tpu_custom_call.1} parent=5 // pred_fallthru
        _
      %p165 = scmp.le.s32.totalorder 1, %s15
      %p166 = scmp.lt.s32.totalorder %s15, 4
      %p167 = pnand %p165, %p166
      %p168 = pneg %p167
      // Predicated region
      $region29: #{tpu_custom_call.1} parent=5 // pred_check
        _
      $region30: #{tpu_custom_call.1} parent=5 // pred_check_branch
        %170 = sbr.rel (%p167) target = $region32
      $region31: #{tpu_custom_call.1} parent=5 // pred_region
        %s171 = ssub.s32 %s15, 1
        %s172 = sand.u32 %s49, 1
        %s173 = scalar_lea.sflag [#allocation5], %s172
        %s174 = sand.u32 %s49, 1
        %s175 = smul.addr %s174, 48
        %s176 = scalar_lea.vmem [#allocation4], %s175
        // Predicated region
        $region33: #{tpu_custom_call.1} parent=31 // pred_check
          %p177 = pneg %p62
        $region34: #{tpu_custom_call.1} parent=31 // pred_check_branch
          %179 = sbr.rel (%p177) target = $region36
        $region35: #{tpu_custom_call.1} parent=31 // pred_region
          %180 = dma.done %s173, 768
        $region36: #{tpu_custom_call.1} parent=31 // pred_fallthru
          _
        %p181 = pneg %p36
        %p182 = pneg %p33
        %s183 = sand.u32 %s49, 1
        %s184 = scalar_lea.sflag [#allocation5], %s183
        %s185 = sand.u32 %s49, 1
        %s186 = smul.addr %s185, 48
        %s187 = scalar_lea.vmem [#allocation4], %s186
        %p188 = pneg %p62
        %p189 = pneg %p59
        %p190 = scmp.lt.s32.totalorder %s20, 2
        %s191 = scalar_select %p190, %s20, 2
        %s192 = smul.addr %s191, 2
        %s193 = smul.addr %s192, 8
        %s194 = scalar_lea.vmem %s2, %s193
        %p195 = pneg %p88
        %p196 = pneg %p85
        %p197 = pneg %p114
        %p198 = pneg %p111
        %s199 = sand.u32 %s101, 1
        %s200 = scalar_lea.sflag [#allocation6], %s199
        %s201 = sand.u32 %s101, 1
        %s202 = smul.addr %s201, 16
        %s203 = scalar_lea.vmem [#allocation7], %s202
        %p204 = scmp.lt.s32.totalorder %s20, 2
        %s205 = scalar_select %p204, %s20, 2
        %s206 = smul.addr %s205, 2
        %s207 = smul.addr %s206, 8
        %s208 = scalar_lea.vmem %s2, %s207
        %vm209 = vcmask 60416
        %210 = vst.msk [vmem:[#allocation2] sm:$0xf] %vm209, 0.0
        %vm211 = vcmask 716352
        %212 = vst.msk [vmem:[#allocation2] sm:$0xf] %vm211, 0.0
        %vm213 = vcmask 257216
        %214 = vst.msk [vmem:[#allocation2 + $0x8] sm:$0xf] %vm213, 0.0
        %v215 = vld [vmem:[%s0] sm:$0xf]
        %217 = vrot.lane.b32.xlu0 %v215, 8
        %v218 = vpop.permute.xlu0 %217
        %vm220 = vcmask 584768
        %221 = vst.msk [vmem:[#allocation2] sm:$0xf] %vm220, %v218
        %s222 = scalar_lea.vmem %s0, 4
        %v223 = vld [vmem:[%s222] sm:$0xf]
        %225 = vrot.lane.b32.xlu0 %v223, 88
        %v226 = vpop.permute.xlu0 %225
        %vm228 = vcmask 1044160
        %229 = vst.msk [vmem:[#allocation2] sm:$0xf] %vm228, %v226
        %vm230 = vcmask 191488
        %231 = vst.msk [vmem:[#allocation2 + $0x8] sm:$0xf] %vm230, %v226
        %v232 = vld [vmem:[#allocation2] sm:$0xf]
        %vm233 = vcmask 519168
        %234 = vst.msk [vmem:[#allocation3] sm:$0xf] %vm233, %v232
        %v235 = vld [vmem:[#allocation2] sm:$0xf]
        %v236 = vld [vmem:[#allocation2 + $0x8] sm:$0xf]
        %239 = vrot.lane.b32.xlu0 %v235, 112
        %v240 = vpop.permute.xlu0 %239
        %241 = vrot.lane.b32.xlu0 %v236, 112
        %v242 = vpop.permute.xlu0 %241
        %vm243 = vcmask 916480
        %v244 = vsel %vm243, %v240, %v242
        %vm246 = vcmask 1043968
        %247 = vst.msk [vmem:[#allocation3] sm:$0xf] %vm246, %v244
        %v248 = vld [vmem:[#allocation2] sm:$0xf]
        %250 = vrot.lane.b32.xlu0 %v248, 124
        %v251 = vpop.permute.xlu0 %250
        %253 = vst.msk [vmem:[#allocation3 + $0x4] sm:$0xf] %vm233, %v251
        %v254 = vld [vmem:[#allocation2] sm:$0xf]
        %v255 = vld [vmem:[#allocation2 + $0x8] sm:$0xf]
        %258 = vrot.lane.b32.xlu0 %v254, 108
        %v259 = vpop.permute.xlu0 %258
        %260 = vrot.lane.b32.xlu0 %v255, 108
        %v261 = vpop.permute.xlu0 %260
        %vm262 = vcmask 883712
        %v263 = vsel %vm262, %v259, %v261
        %265 = vst.msk [vmem:[#allocation3 + $0x4] sm:$0xf] %vm246, %v263
        %v266 = vld [vmem:[#allocation2] sm:$0xf]
        %268 = vrot.lane.b32.xlu0 %v266, 122
        %v269 = vpop.permute.xlu0 %268
        %271 = vst.msk [vmem:[#allocation3 + $0x8] sm:$0xf] %vm233, %v269
        %v272 = vld [vmem:[#allocation2] sm:$0xf]
        %v273 = vld [vmem:[#allocation2 + $0x8] sm:$0xf]
        %276 = vrot.lane.b32.xlu0 %v272, 106
        %v277 = vpop.permute.xlu0 %276
        %278 = vrot.lane.b32.xlu0 %v273, 106
        %v279 = vpop.permute.xlu0 %278
        %vm280 = vcmask 867328
        %v281 = vsel %vm280, %v277, %v279
        %283 = vst.msk [vmem:[#allocation3 + $0x8] sm:$0xf] %vm246, %v281
        %v284 = vld [vmem:[#allocation2] sm:$0xf]
        %286 = vrot.lane.b32.xlu0 %v284, 121
        %v287 = vpop.permute.xlu0 %286
        %289 = vst.msk [vmem:[#allocation3 + $0xc] sm:$0xf] %vm233, %v287
        %v290 = vld [vmem:[#allocation2] sm:$0xf]
        %v291 = vld [vmem:[#allocation2 + $0x8] sm:$0xf]
        %294 = vrot.lane.b32.xlu0 %v290, 105
        %v295 = vpop.permute.xlu0 %294
        %296 = vrot.lane.b32.xlu0 %v291, 105
        %v297 = vpop.permute.xlu0 %296
        %vm298 = vcmask 859136
        %v299 = vsel %vm298, %v295, %v297
        %301 = vst.msk [vmem:[#allocation3 + $0xc] sm:$0xf] %vm246, %v299
        %v302 = vld [vmem:[#allocation2] sm:$0xf]
        %304 = vrot.lane.b32.xlu0 %v302, 120
        %v305 = vpop.permute.xlu0 %304
        %307 = vst.msk [vmem:[#allocation3 + $0x10] sm:$0xf] %vm233, %v305
        %v308 = vld [vmem:[#allocation2] sm:$0xf]
        %v309 = vld [vmem:[#allocation2 + $0x8] sm:$0xf]
        %312 = vrot.lane.b32.xlu0 %v308, 104
        %v313 = vpop.permute.xlu0 %312
        %314 = vrot.lane.b32.xlu0 %v309, 104
        %v315 = vpop.permute.xlu0 %314
        %vm316 = vcmask 850944
        %v317 = vsel %vm316, %v313, %v315
        %319 = vst.msk [vmem:[#allocation3 + $0x10] sm:$0xf] %vm246, %v317
        %v320 = vld [vmem:[#allocation2] sm:$0xf]
        %322 = vrot.lane.b32.xlu0 %v320, 119
        %v323 = vpop.permute.xlu0 %322
        %325 = vst.msk [vmem:[#allocation3 + $0x14] sm:$0xf] %vm233, %v323
        %v326 = vld [vmem:[#allocation2] sm:$0xf]
        %v327 = vld [vmem:[#allocation2 + $0x8] sm:$0xf]
        %330 = vrot.lane.b32.xlu0 %v326, 103
        %v331 = vpop.permute.xlu0 %330
        %332 = vrot.lane.b32.xlu0 %v327, 103
        %v333 = vpop.permute.xlu0 %332
        %vm334 = vcmask 842752
        %v335 = vsel %vm334, %v331, %v333
        %337 = vst.msk [vmem:[#allocation3 + $0x14] sm:$0xf] %vm246, %v335
        %v338 = vld [vmem:[#allocation2] sm:$0xf]
        %340 = vrot.lane.b32.xlu0 %v338, 118
        %v341 = vpop.permute.xlu0 %340
        %343 = vst.msk [vmem:[#allocation3 + $0x18] sm:$0xf] %vm233, %v341
        %v344 = vld [vmem:[#allocation2] sm:$0xf]
        %v345 = vld [vmem:[#allocation2 + $0x8] sm:$0xf]
        %348 = vrot.lane.b32.xlu0 %v344, 102
        %v349 = vpop.permute.xlu0 %348
        %350 = vrot.lane.b32.xlu0 %v345, 102
        %v351 = vpop.permute.xlu0 %350
        %vm352 = vcmask 834560
        %v353 = vsel %vm352, %v349, %v351
        %355 = vst.msk [vmem:[#allocation3 + $0x18] sm:$0xf] %vm246, %v353
        %v356 = vld [vmem:[#allocation2] sm:$0xf]
        %358 = vrot.lane.b32.xlu0 %v356, 116
        %v359 = vpop.permute.xlu0 %358
        %361 = vst.msk [vmem:[#allocation3 + $0x1c] sm:$0xf] %vm233, %v359
        %v362 = vld [vmem:[#allocation2] sm:$0xf]
        %v363 = vld [vmem:[#allocation2 + $0x8] sm:$0xf]
        %366 = vrot.lane.b32.xlu0 %v362, 100
        %v367 = vpop.permute.xlu0 %366
        %368 = vrot.lane.b32.xlu0 %v363, 100
        %v369 = vpop.permute.xlu0 %368
        %vm370 = vcmask 818176
        %v371 = vsel %vm370, %v367, %v369
        %373 = vst.msk [vmem:[#allocation3 + $0x1c] sm:$0xf] %vm246, %v371
        %v374 = vld [vmem:[#allocation2] sm:$0xf]
        %376 = vrot.lane.b32.xlu0 %v374, 112
        %v377 = vpop.permute.xlu0 %376
        %379 = vst.msk [vmem:[#allocation3 + $0x20] sm:$0xf] %vm233, %v377
        %v380 = vld [vmem:[#allocation2] sm:$0xf]
        %v381 = vld [vmem:[#allocation2 + $0x8] sm:$0xf]
        %384 = vrot.lane.b32.xlu0 %v380, 96
        %v385 = vpop.permute.xlu0 %384
        %386 = vrot.lane.b32.xlu0 %v381, 96
        %v387 = vpop.permute.xlu0 %386
        %vm388 = vcmask 785408
        %v389 = vsel %vm388, %v385, %v387
        %391 = vst.msk [vmem:[#allocation3 + $0x20] sm:$0xf] %vm246, %v389
        %v392 = vld [vmem:[%s176] sm:$0xff]
        %v393 = vld [vmem:[%s208] sm:$0xff]
        %v394 = vld [vmem:[#allocation3] sm:$0xff]
        %v395 = vld [vmem:[#allocation3 + $0x8] sm:$0xff]
        %v396 = vld [vmem:[#allocation3 + $0x10] sm:$0xff]
        %v397 = vld [vmem:[#allocation3 + $0x18] sm:$0xff]
        %v398 = vld [vmem:[#allocation3 + $0x20] sm:$0xf]
        %400 = vset.pattern.permute.xlu0 0
        %401 = vperm.xlu0 %400, %v393
        %v402 = vpop.permute.xlu0 %401
        %vm404 = vcmask 293888
        %v406 = vsel %vm404, %v392, 0
        %vm408 = vcmask 1043456
        %v410 = vsel %vm408, %v398, 0
        %412 = vmatprep.subr.mxu0 0.0
        %413 = vmatpush1.msra.mxu0 %v394
        %414 = vmatprep.subr.mxu0 0.0
        %415 = vmatpush1.msra.mxu0 %v395
        %416 = vmatprep.subr.mxu0 0.0
        %417 = vmatpush1.msra.mxu0 %v396
        %418 = vmatprep.subr.mxu0 0.0
        %419 = vmatpush1.msra.mxu0 %v397
        %420 = vmatprep.subr.mxu0 0.0
        %421 = vmatpush1.msra.mxu0 %v410
        %422 = vmatprep.subr.mxu0 0.0
        %423 = vmatpush1.msra.mxu0 0.0
        %424 = vmatprep.subr.mxu0 0.0
        %425 = vmatpush1.msra.mxu0 0.0
        %426 = vmatprep.subr.mxu0 0.0
        %427 = vmatpush1.msra.mxu0 0.0
        %428 = vmatprep.subr.mxu0 0.0
        %429 = vmatpush1.msra.mxu0 0.0
        %430 = vmatprep.subr.mxu0 0.0
        %431 = vmatpush1.msra.mxu0 0.0
        %432 = vmatprep.subr.mxu0 0.0
        %433 = vmatpush1.msra.mxu0 0.0
        %434 = vmatprep.subr.mxu0 0.0
        %435 = vmatpush1.msra.mxu0 0.0
        %436 = vmatprep.subr.mxu0 0.0
        %437 = vmatpush1.msra.mxu0 0.0
        %438 = vmatprep.subr.mxu0 0.0
        %439 = vmatpush1.msra.mxu0 0.0
        %440 = vmatprep.subr.mxu0 0.0
        %441 = vmatpush1.msra.mxu0 0.0
        %442 = vmatprep.subr.mxu0 0.0
        %443 = vmatpush1.msra.mxu0 0.0
        %444 = vmatprep.subr.mxu0 0.0
        %445 = vmatpush1.msra.mxu0 0.0
        %446 = vmatprep.subr.mxu0 0.0
        %447 = vmatpush1.msra.mxu0 0.0
        %448 = vmatprep.subr.mxu0 0.0
        %449 = vmatpush1.msra.mxu0 0.0
        %450 = vmatprep.subr.mxu0 0.0
        %451 = vmatpush1.msra.mxu0 0.0
        %452 = vmatprep.subr.mxu0 0.0
        %453 = vmatpush1.msra.mxu0 0.0
        %454 = vmatprep.subr.mxu0 0.0
        %455 = vmatpush1.msra.mxu0 0.0
        %456 = vmatprep.subr.mxu0 0.0
        %457 = vmatpush1.msra.mxu0 0.0
        %458 = vmatprep.subr.mxu0 0.0
        %459 = vmatpush1.msra.mxu0 0.0
        %460 = vmatprep.subr.mxu0 0.0
        %461 = vmatpush1.msra.mxu0 0.0
        %462 = vmatprep.subr.mxu0 0.0
        %463 = vmatpush1.msra.mxu0 0.0
        %464 = vmatprep.subr.mxu0 0.0
        %465 = vmatpush1.msra.mxu0 0.0
        %466 = vmatprep.subr.mxu0 0.0
        %467 = vmatpush1.msra.mxu0 0.0
        %468 = vmatprep.subr.mxu0 0.0
        %469 = vmatpush1.msra.mxu0 0.0
        %470 = vmatprep.subr.mxu0 0.0
        %471 = vmatpush1.msra.mxu0 0.0
        %472 = vmatprep.subr.mxu0 0.0
        %473 = vmatpush1.msra.mxu0 0.0
        %474 = vmatprep.subr.mxu0 0.0
        %475 = vmatpush1.msra.mxu0 0.0
        %476 = vmatprep.mubr.f32.mxu0 0.0
        %477 = vmatmul.mubr.f32.gmra.mrb[0].mxu0 %v406
        %v478 = vpop.f32.mrb[0].mxu0
        %v479 = vadd.f32 %v402, %v478
        %v480 = vpop.f32.mrb[0].mxu0
        %481 = vdwg.mxu0
        %v482 = vmax.f32 %v479, 0.0
        %483 = vset.pattern.permute.xlu0 1
        %484 = vperm.xlu0 %483, %v393
        %v485 = vpop.permute.xlu0 %484
        %v487 = vmul.f32 %v482, %v485
        %488 = vset.pattern.permute.xlu0 2
        %489 = vperm.xlu0 %488, %v393
        %v490 = vpop.permute.xlu0 %489
        %v492 = vadd.f32 %v487, %v490
        %494 = vrot.lane.b32.xlu0 %v492, 126
        %v495 = vpop.permute.xlu0 %494
        %497 = vrot.lane.b32.xlu0 %v492, 124
        %v498 = vpop.permute.xlu0 %497
        %500 = vrot.lane.b32.xlu0 %v492, 122
        %v501 = vpop.permute.xlu0 %500
        %503 = vrot.lane.b32.xlu0 %v492, 120
        %v504 = vpop.permute.xlu0 %503
        %506 = vrot.lane.b32.xlu0 %v492, 118
        %v507 = vpop.permute.xlu0 %506
        %509 = vrot.lane.b32.xlu0 %v492, 116
        %v510 = vpop.permute.xlu0 %509
        %512 = vrot.lane.b32.xlu0 %v492, 114
        %v513 = vpop.permute.xlu0 %512
        %515 = vrot.lane.b32.xlu0 %v492, 112
        %v516 = vpop.permute.xlu0 %515
        %518 = vrot.lane.b32.xlu0 %v492, 110
        %v519 = vpop.permute.xlu0 %518
        %521 = vrot.lane.b32.xlu0 %v492, 108
        %v522 = vpop.permute.xlu0 %521
        %524 = vrot.lane.b32.xlu0 %v492, 106
        %v525 = vpop.permute.xlu0 %524
        %527 = vrot.lane.b32.xlu0 %v492, 104
        %v528 = vpop.permute.xlu0 %527
        %530 = vrot.lane.b32.xlu0 %v492, 102
        %v531 = vpop.permute.xlu0 %530
        %533 = vrot.lane.b32.xlu0 %v492, 100
        %v534 = vpop.permute.xlu0 %533
        %536 = vrot.lane.b32.xlu0 %v492, 98
        %v537 = vpop.permute.xlu0 %536
        %539 = vrot.lane.b32.xlu0 %v492, 96
        %v540 = vpop.permute.xlu0 %539
        %542 = vrot.lane.b32.xlu0 %v492, 94
        %v543 = vpop.permute.xlu0 %542
        %545 = vrot.lane.b32.xlu0 %v492, 92
        %v546 = vpop.permute.xlu0 %545
        %548 = vrot.lane.b32.xlu0 %v492, 90
        %v549 = vpop.permute.xlu0 %548
        %551 = vrot.lane.b32.xlu0 %v492, 88
        %v552 = vpop.permute.xlu0 %551
        %554 = vrot.lane.b32.xlu0 %v492, 86
        %v555 = vpop.permute.xlu0 %554
        %557 = vrot.lane.b32.xlu0 %v492, 84
        %v558 = vpop.permute.xlu0 %557
        %560 = vrot.lane.b32.xlu0 %v492, 82
        %v561 = vpop.permute.xlu0 %560
        %563 = vrot.lane.b32.xlu0 %v492, 80
        %v564 = vpop.permute.xlu0 %563
        %566 = vrot.lane.b32.xlu0 %v492, 78
        %v567 = vpop.permute.xlu0 %566
        %569 = vrot.lane.b32.xlu0 %v492, 76
        %v570 = vpop.permute.xlu0 %569
        %572 = vrot.lane.b32.xlu0 %v492, 74
        %v573 = vpop.permute.xlu0 %572
        %575 = vrot.lane.b32.xlu0 %v492, 72
        %v576 = vpop.permute.xlu0 %575
        %578 = vrot.lane.b32.xlu0 %v492, 70
        %v579 = vpop.permute.xlu0 %578
        %581 = vrot.lane.b32.xlu0 %v492, 68
        %v582 = vpop.permute.xlu0 %581
        %584 = vrot.lane.b32.xlu0 %v492, 66
        %v585 = vpop.permute.xlu0 %584
        %587 = vrot.lane.b32.xlu0 %v492, 64
        %v588 = vpop.permute.xlu0 %587
        %590 = vrot.lane.b32.xlu0 %v492, 62
        %v591 = vpop.permute.xlu0 %590
        %593 = vrot.lane.b32.xlu0 %v492, 60
        %v594 = vpop.permute.xlu0 %593
        %596 = vrot.lane.b32.xlu0 %v492, 58
        %v597 = vpop.permute.xlu0 %596
        %599 = vrot.lane.b32.xlu0 %v492, 56
        %v600 = vpop.permute.xlu0 %599
        %602 = vrot.lane.b32.xlu0 %v492, 54
        %v603 = vpop.permute.xlu0 %602
        %605 = vrot.lane.b32.xlu0 %v492, 52
        %v606 = vpop.permute.xlu0 %605
        %608 = vrot.lane.b32.xlu0 %v492, 50
        %v609 = vpop.permute.xlu0 %608
        %611 = vrot.lane.b32.xlu0 %v492, 48
        %v612 = vpop.permute.xlu0 %611
        %614 = vrot.lane.b32.xlu0 %v492, 46
        %v615 = vpop.permute.xlu0 %614
        %617 = vrot.lane.b32.xlu0 %v492, 44
        %v618 = vpop.permute.xlu0 %617
        %620 = vrot.lane.b32.xlu0 %v492, 42
        %v621 = vpop.permute.xlu0 %620
        %623 = vrot.lane.b32.xlu0 %v492, 40
        %v624 = vpop.permute.xlu0 %623
        %626 = vrot.lane.b32.xlu0 %v492, 38
        %v627 = vpop.permute.xlu0 %626
        %629 = vrot.lane.b32.xlu0 %v492, 36
        %v630 = vpop.permute.xlu0 %629
        %632 = vrot.lane.b32.xlu0 %v492, 34
        %v633 = vpop.permute.xlu0 %632
        %635 = vrot.lane.b32.xlu0 %v492, 32
        %v636 = vpop.permute.xlu0 %635
        %638 = vrot.lane.b32.xlu0 %v492, 30
        %v639 = vpop.permute.xlu0 %638
        %641 = vrot.lane.b32.xlu0 %v492, 28
        %v642 = vpop.permute.xlu0 %641
        %644 = vrot.lane.b32.xlu0 %v492, 26
        %v645 = vpop.permute.xlu0 %644
        %647 = vrot.lane.b32.xlu0 %v492, 24
        %v648 = vpop.permute.xlu0 %647
        %650 = vrot.lane.b32.xlu0 %v492, 22
        %v651 = vpop.permute.xlu0 %650
        %653 = vrot.lane.b32.xlu0 %v492, 20
        %v654 = vpop.permute.xlu0 %653
        %656 = vrot.lane.b32.xlu0 %v492, 18
        %v657 = vpop.permute.xlu0 %656
        %659 = vrot.lane.b32.xlu0 %v492, 16
        %v660 = vpop.permute.xlu0 %659
        %662 = vrot.lane.b32.xlu0 %v492, 14
        %v663 = vpop.permute.xlu0 %662
        %665 = vrot.lane.b32.xlu0 %v492, 12
        %v666 = vpop.permute.xlu0 %665
        %668 = vrot.lane.b32.xlu0 %v492, 10
        %v669 = vpop.permute.xlu0 %668
        %671 = vrot.lane.b32.xlu0 %v492, 8
        %v672 = vpop.permute.xlu0 %671
        %674 = vrot.lane.b32.xlu0 %v492, 6
        %v675 = vpop.permute.xlu0 %674
        %677 = vrot.lane.b32.xlu0 %v492, 4
        %v678 = vpop.permute.xlu0 %677
        %680 = vrot.lane.b32.xlu0 %v492, 2
        %v681 = vpop.permute.xlu0 %680
        %v683 = vcombine.low %v492, %v498
        %v684 = vcombine.high %v492, %v498
        %v686 = vunpack.c.l.s4 1983009808
        %v687 = vunpack.c.0.s8 %v686
        %v688 = vlaneseq
        %v689 = vshrl.u32 %v688, 7
        %v690 = vsub.s32 %v687, %v689
        %v691 = vrot.slane %v683, %v690
        %v693 = vunpack.c.l.s4 1983009808
        %v694 = vunpack.c.0.s8 %v693
        %v695 = vlaneseq
        %v696 = vshrl.u32 %v695, 7
        %v697 = vsub.s32 %v694, %v696
        %v698 = vrot.slane %v684, %v697
        %v699 = vcombine.low %v495, %v501
        %v700 = vcombine.high %v495, %v501
        %v702 = vunpack.c.l.s4 1983009808
        %v703 = vunpack.c.0.s8 %v702
        %v704 = vlaneseq
        %v705 = vshrl.u32 %v704, 7
        %v706 = vsub.s32 %v703, %v705
        %v707 = vrot.slane %v699, %v706
        %v709 = vunpack.c.l.s4 1983009808
        %v710 = vunpack.c.0.s8 %v709
        %v711 = vlaneseq
        %v712 = vshrl.u32 %v711, 7
        %v713 = vsub.s32 %v710, %v712
        %v714 = vrot.slane %v700, %v713
        %v715 = vcombine.low %v504, %v510
        %v716 = vcombine.high %v504, %v510
        %v718 = vunpack.c.l.s4 1983009808
        %v719 = vunpack.c.0.s8 %v718
        %v720 = vlaneseq
        %v721 = vshrl.u32 %v720, 7
        %v722 = vsub.s32 %v719, %v721
        %v723 = vrot.slane %v715, %v722
        %v725 = vunpack.c.l.s4 1983009808
        %v726 = vunpack.c.0.s8 %v725
        %v727 = vlaneseq
        %v728 = vshrl.u32 %v727, 7
        %v729 = vsub.s32 %v726, %v728
        %v730 = vrot.slane %v716, %v729
        %v731 = vcombine.low %v507, %v513
        %v732 = vcombine.high %v507, %v513
        %v734 = vunpack.c.l.s4 1983009808
        %v735 = vunpack.c.0.s8 %v734
        %v736 = vlaneseq
        %v737 = vshrl.u32 %v736, 7
        %v738 = vsub.s32 %v735, %v737
        %v739 = vrot.slane %v731, %v738
        %v741 = vunpack.c.l.s4 1983009808
        %v742 = vunpack.c.0.s8 %v741
        %v743 = vlaneseq
        %v744 = vshrl.u32 %v743, 7
        %v745 = vsub.s32 %v742, %v744
        %v746 = vrot.slane %v732, %v745
        %v747 = vcombine.low %v691, %v707
        %v748 = vcombine.high %v691, %v707
        %v750 = vunpack.c.l.s4 1934713408
        %v751 = vunpack.c.0.s8 %v750
        %v752 = vlaneseq
        %v753 = vshrl.u32 %v752, 7
        %v754 = vsub.s32 %v751, %v753
        %v755 = vrot.slane %v747, %v754
        %v757 = vunpack.c.l.s4 1934713408
        %v758 = vunpack.c.0.s8 %v757
        %v759 = vlaneseq
        %v760 = vshrl.u32 %v759, 7
        %v761 = vsub.s32 %v758, %v760
        %v762 = vrot.slane %v748, %v761
        %v763 = vcombine.low %v698, %v714
        %v764 = vcombine.high %v698, %v714
        %v766 = vunpack.c.l.s4 1934713408
        %v767 = vunpack.c.0.s8 %v766
        %v768 = vlaneseq
        %v769 = vshrl.u32 %v768, 7
        %v770 = vsub.s32 %v767, %v769
        %v771 = vrot.slane %v763, %v770
        %v773 = vunpack.c.l.s4 1934713408
        %v774 = vunpack.c.0.s8 %v773
        %v775 = vlaneseq
        %v776 = vshrl.u32 %v775, 7
        %v777 = vsub.s32 %v774, %v776
        %v778 = vrot.slane %v764, %v777
        %v779 = vcombine.low %v723, %v739
        %v780 = vcombine.high %v723, %v739
        %v782 = vunpack.c.l.s4 1934713408
        %v783 = vunpack.c.0.s8 %v782
        %v784 = vlaneseq
        %v785 = vshrl.u32 %v784, 7
        %v786 = vsub.s32 %v783, %v785
        %v787 = vrot.slane %v779, %v786
        %v789 = vunpack.c.l.s4 1934713408
        %v790 = vunpack.c.0.s8 %v789
        %v791 = vlaneseq
        %v792 = vshrl.u32 %v791, 7
        %v793 = vsub.s32 %v790, %v792
        %v794 = vrot.slane %v780, %v793
        %v795 = vcombine.low %v730, %v746
        %v796 = vcombine.high %v730, %v746
        %v798 = vunpack.c.l.s4 1934713408
        %v799 = vunpack.c.0.s8 %v798
        %v800 = vlaneseq
        %v801 = vshrl.u32 %v800, 7
        %v802 = vsub.s32 %v799, %v801
        %v803 = vrot.slane %v795, %v802
        %v805 = vunpack.c.l.s4 1934713408
        %v806 = vunpack.c.0.s8 %v805
        %v807 = vlaneseq
        %v808 = vshrl.u32 %v807, 7
        %v809 = vsub.s32 %v806, %v808
        %v810 = vrot.slane %v796, %v809
        %v811 = vcombine.low %v755, %v787
        %v812 = vcombine.high %v755, %v787
        %v813 = vcombine.low %v762, %v794
        %v814 = vcombine.high %v762, %v794
        %v815 = vcombine.low %v771, %v803
        %v816 = vcombine.high %v771, %v803
        %v817 = vcombine.low %v778, %v810
        %v818 = vcombine.high %v778, %v810
        %v819 = vcombine.low %v516, %v522
        %v820 = vcombine.high %v516, %v522
        %v822 = vunpack.c.l.s4 1983009808
        %v823 = vunpack.c.0.s8 %v822
        %v824 = vlaneseq
        %v825 = vshrl.u32 %v824, 7
        %v826 = vsub.s32 %v823, %v825
        %v827 = vrot.slane %v819, %v826
        %v829 = vunpack.c.l.s4 1983009808
        %v830 = vunpack.c.0.s8 %v829
        %v831 = vlaneseq
        %v832 = vshrl.u32 %v831, 7
        %v833 = vsub.s32 %v830, %v832
        %v834 = vrot.slane %v820, %v833
        %v835 = vcombine.low %v519, %v525
        %v836 = vcombine.high %v519, %v525
        %v838 = vunpack.c.l.s4 1983009808
        %v839 = vunpack.c.0.s8 %v838
        %v840 = vlaneseq
        %v841 = vshrl.u32 %v840, 7
        %v842 = vsub.s32 %v839, %v841
        %v843 = vrot.slane %v835, %v842
        %v845 = vunpack.c.l.s4 1983009808
        %v846 = vunpack.c.0.s8 %v845
        %v847 = vlaneseq
        %v848 = vshrl.u32 %v847, 7
        %v849 = vsub.s32 %v846, %v848
        %v850 = vrot.slane %v836, %v849
        %v851 = vcombine.low %v528, %v534
        %v852 = vcombine.high %v528, %v534
        %v854 = vunpack.c.l.s4 1983009808
        %v855 = vunpack.c.0.s8 %v854
        %v856 = vlaneseq
        %v857 = vshrl.u32 %v856, 7
        %v858 = vsub.s32 %v855, %v857
        %v859 = vrot.slane %v851, %v858
        %v861 = vunpack.c.l.s4 1983009808
        %v862 = vunpack.c.0.s8 %v861
        %v863 = vlaneseq
        %v864 = vshrl.u32 %v863, 7
        %v865 = vsub.s32 %v862, %v864
        %v866 = vrot.slane %v852, %v865
        %v867 = vcombine.low %v531, %v537
        %v868 = vcombine.high %v531, %v537
        %v870 = vunpack.c.l.s4 1983009808
        %v871 = vunpack.c.0.s8 %v870
        %v872 = vlaneseq
        %v873 = vshrl.u32 %v872, 7
        %v874 = vsub.s32 %v871, %v873
        %v875 = vrot.slane %v867, %v874
        %v877 = vunpack.c.l.s4 1983009808
        %v878 = vunpack.c.0.s8 %v877
        %v879 = vlaneseq
        %v880 = vshrl.u32 %v879, 7
        %v881 = vsub.s32 %v878, %v880
        %v882 = vrot.slane %v868, %v881
        %v883 = vcombine.low %v827, %v843
        %v884 = vcombine.high %v827, %v843
        %v886 = vunpack.c.l.s4 1934713408
        %v887 = vunpack.c.0.s8 %v886
        %v888 = vlaneseq
        %v889 = vshrl.u32 %v888, 7
        %v890 = vsub.s32 %v887, %v889
        %v891 = vrot.slane %v883, %v890
        %v893 = vunpack.c.l.s4 1934713408
        %v894 = vunpack.c.0.s8 %v893
        %v895 = vlaneseq
        %v896 = vshrl.u32 %v895, 7
        %v897 = vsub.s32 %v894, %v896
        %v898 = vrot.slane %v884, %v897
        %v899 = vcombine.low %v834, %v850
        %v900 = vcombine.high %v834, %v850
        %v902 = vunpack.c.l.s4 1934713408
        %v903 = vunpack.c.0.s8 %v902
        %v904 = vlaneseq
        %v905 = vshrl.u32 %v904, 7
        %v906 = vsub.s32 %v903, %v905
        %v907 = vrot.slane %v899, %v906
        %v909 = vunpack.c.l.s4 1934713408
        %v910 = vunpack.c.0.s8 %v909
        %v911 = vlaneseq
        %v912 = vshrl.u32 %v911, 7
        %v913 = vsub.s32 %v910, %v912
        %v914 = vrot.slane %v900, %v913
        %v915 = vcombine.low %v859, %v875
        %v916 = vcombine.high %v859, %v875
        %v918 = vunpack.c.l.s4 1934713408
        %v919 = vunpack.c.0.s8 %v918
        %v920 = vlaneseq
        %v921 = vshrl.u32 %v920, 7
        %v922 = vsub.s32 %v919, %v921
        %v923 = vrot.slane %v915, %v922
        %v925 = vunpack.c.l.s4 1934713408
        %v926 = vunpack.c.0.s8 %v925
        %v927 = vlaneseq
        %v928 = vshrl.u32 %v927, 7
        %v929 = vsub.s32 %v926, %v928
        %v930 = vrot.slane %v916, %v929
        %v931 = vcombine.low %v866, %v882
        %v932 = vcombine.high %v866, %v882
        %v934 = vunpack.c.l.s4 1934713408
        %v935 = vunpack.c.0.s8 %v934
        %v936 = vlaneseq
        %v937 = vshrl.u32 %v936, 7
        %v938 = vsub.s32 %v935, %v937
        %v939 = vrot.slane %v931, %v938
        %v941 = vunpack.c.l.s4 1934713408
        %v942 = vunpack.c.0.s8 %v941
        %v943 = vlaneseq
        %v944 = vshrl.u32 %v943, 7
        %v945 = vsub.s32 %v942, %v944
        %v946 = vrot.slane %v932, %v945
        %v947 = vcombine.low %v891, %v923
        %v948 = vcombine.high %v891, %v923
        %v949 = vcombine.low %v898, %v930
        %v950 = vcombine.high %v898, %v930
        %v951 = vcombine.low %v907, %v939
        %v952 = vcombine.high %v907, %v939
        %v953 = vcombine.low %v914, %v946
        %v954 = vcombine.high %v914, %v946
        %v955 = vcombine.low %v540, %v546
        %v956 = vcombine.high %v540, %v546
        %v958 = vunpack.c.l.s4 1983009808
        %v959 = vunpack.c.0.s8 %v958
        %v960 = vlaneseq
        %v961 = vshrl.u32 %v960, 7
        %v962 = vsub.s32 %v959, %v961
        %v963 = vrot.slane %v955, %v962
        %v965 = vunpack.c.l.s4 1983009808
        %v966 = vunpack.c.0.s8 %v965
        %v967 = vlaneseq
        %v968 = vshrl.u32 %v967, 7
        %v969 = vsub.s32 %v966, %v968
        %v970 = vrot.slane %v956, %v969
        %v971 = vcombine.low %v543, %v549
        %v972 = vcombine.high %v543, %v549
        %v974 = vunpack.c.l.s4 1983009808
        %v975 = vunpack.c.0.s8 %v974
        %v976 = vlaneseq
        %v977 = vshrl.u32 %v976, 7
        %v978 = vsub.s32 %v975, %v977
        %v979 = vrot.slane %v971, %v978
        %v981 = vunpack.c.l.s4 1983009808
        %v982 = vunpack.c.0.s8 %v981
        %v983 = vlaneseq
        %v984 = vshrl.u32 %v983, 7
        %v985 = vsub.s32 %v982, %v984
        %v986 = vrot.slane %v972, %v985
        %v987 = vcombine.low %v552, %v558
        %v988 = vcombine.high %v552, %v558
        %v990 = vunpack.c.l.s4 1983009808
        %v991 = vunpack.c.0.s8 %v990
        %v992 = vlaneseq
        %v993 = vshrl.u32 %v992, 7
        %v994 = vsub.s32 %v991, %v993
        %v995 = vrot.slane %v987, %v994
        %v997 = vunpack.c.l.s4 1983009808
        %v998 = vunpack.c.0.s8 %v997
        %v999 = vlaneseq
        %v1000 = vshrl.u32 %v999, 7
        %v1001 = vsub.s32 %v998, %v1000
        %v1002 = vrot.slane %v988, %v1001
        %v1003 = vcombine.low %v555, %v561
        %v1004 = vcombine.high %v555, %v561
        %v1006 = vunpack.c.l.s4 1983009808
        %v1007 = vunpack.c.0.s8 %v1006
        %v1008 = vlaneseq
        %v1009 = vshrl.u32 %v1008, 7
        %v1010 = vsub.s32 %v1007, %v1009
        %v1011 = vrot.slane %v1003, %v1010
        %v1013 = vunpack.c.l.s4 1983009808
        %v1014 = vunpack.c.0.s8 %v1013
        %v1015 = vlaneseq
        %v1016 = vshrl.u32 %v1015, 7
        %v1017 = vsub.s32 %v1014, %v1016
        %v1018 = vrot.slane %v1004, %v1017
        %v1019 = vcombine.low %v963, %v979
        %v1020 = vcombine.high %v963, %v979
        %v1022 = vunpack.c.l.s4 1934713408
        %v1023 = vunpack.c.0.s8 %v1022
        %v1024 = vlaneseq
        %v1025 = vshrl.u32 %v1024, 7
        %v1026 = vsub.s32 %v1023, %v1025
        %v1027 = vrot.slane %v1019, %v1026
        %v1029 = vunpack.c.l.s4 1934713408
        %v1030 = vunpack.c.0.s8 %v1029
        %v1031 = vlaneseq
        %v1032 = vshrl.u32 %v1031, 7
        %v1033 = vsub.s32 %v1030, %v1032
        %v1034 = vrot.slane %v1020, %v1033
        %v1035 = vcombine.low %v970, %v986
        %v1036 = vcombine.high %v970, %v986
        %v1038 = vunpack.c.l.s4 1934713408
        %v1039 = vunpack.c.0.s8 %v1038
        %v1040 = vlaneseq
        %v1041 = vshrl.u32 %v1040, 7
        %v1042 = vsub.s32 %v1039, %v1041
        %v1043 = vrot.slane %v1035, %v1042
        %v1045 = vunpack.c.l.s4 1934713408
        %v1046 = vunpack.c.0.s8 %v1045
        %v1047 = vlaneseq
        %v1048 = vshrl.u32 %v1047, 7
        %v1049 = vsub.s32 %v1046, %v1048
        %v1050 = vrot.slane %v1036, %v1049
        %v1051 = vcombine.low %v995, %v1011
        %v1052 = vcombine.high %v995, %v1011
        %v1054 = vunpack.c.l.s4 1934713408
        %v1055 = vunpack.c.0.s8 %v1054
        %v1056 = vlaneseq
        %v1057 = vshrl.u32 %v1056, 7
        %v1058 = vsub.s32 %v1055, %v1057
        %v1059 = vrot.slane %v1051, %v1058
        %v1061 = vunpack.c.l.s4 1934713408
        %v1062 = vunpack.c.0.s8 %v1061
        %v1063 = vlaneseq
        %v1064 = vshrl.u32 %v1063, 7
        %v1065 = vsub.s32 %v1062, %v1064
        %v1066 = vrot.slane %v1052, %v1065
        %v1067 = vcombine.low %v1002, %v1018
        %v1068 = vcombine.high %v1002, %v1018
        %v1070 = vunpack.c.l.s4 1934713408
        %v1071 = vunpack.c.0.s8 %v1070
        %v1072 = vlaneseq
        %v1073 = vshrl.u32 %v1072, 7
        %v1074 = vsub.s32 %v1071, %v1073
        %v1075 = vrot.slane %v1067, %v1074
        %v1077 = vunpack.c.l.s4 1934713408
        %v1078 = vunpack.c.0.s8 %v1077
        %v1079 = vlaneseq
        %v1080 = vshrl.u32 %v1079, 7
        %v1081 = vsub.s32 %v1078, %v1080
        %v1082 = vrot.slane %v1068, %v1081
        %v1083 = vcombine.low %v1027, %v1059
        %v1084 = vcombine.high %v1027, %v1059
        %v1085 = vcombine.low %v1034, %v1066
        %v1086 = vcombine.high %v1034, %v1066
        %v1087 = vcombine.low %v1043, %v1075
        %v1088 = vcombine.high %v1043, %v1075
        %v1089 = vcombine.low %v1050, %v1082
        %v1090 = vcombine.high %v1050, %v1082
        %v1091 = vcombine.low %v564, %v570
        %v1092 = vcombine.high %v564, %v570
        %v1094 = vunpack.c.l.s4 1983009808
        %v1095 = vunpack.c.0.s8 %v1094
        %v1096 = vlaneseq
        %v1097 = vshrl.u32 %v1096, 7
        %v1098 = vsub.s32 %v1095, %v1097
        %v1099 = vrot.slane %v1091, %v1098
        %v1101 = vunpack.c.l.s4 1983009808
        %v1102 = vunpack.c.0.s8 %v1101
        %v1103 = vlaneseq
        %v1104 = vshrl.u32 %v1103, 7
        %v1105 = vsub.s32 %v1102, %v1104
        %v1106 = vrot.slane %v1092, %v1105
        %v1107 = vcombine.low %v567, %v573
        %v1108 = vcombine.high %v567, %v573
        %v1110 = vunpack.c.l.s4 1983009808
        %v1111 = vunpack.c.0.s8 %v1110
        %v1112 = vlaneseq
        %v1113 = vshrl.u32 %v1112, 7
        %v1114 = vsub.s32 %v1111, %v1113
        %v1115 = vrot.slane %v1107, %v1114
        %v1117 = vunpack.c.l.s4 1983009808
        %v1118 = vunpack.c.0.s8 %v1117
        %v1119 = vlaneseq
        %v1120 = vshrl.u32 %v1119, 7
        %v1121 = vsub.s32 %v1118, %v1120
        %v1122 = vrot.slane %v1108, %v1121
        %v1123 = vcombine.low %v576, %v582
        %v1124 = vcombine.high %v576, %v582
        %v1126 = vunpack.c.l.s4 1983009808
        %v1127 = vunpack.c.0.s8 %v1126
        %v1128 = vlaneseq
        %v1129 = vshrl.u32 %v1128, 7
        %v1130 = vsub.s32 %v1127, %v1129
        %v1131 = vrot.slane %v1123, %v1130
        %v1133 = vunpack.c.l.s4 1983009808
        %v1134 = vunpack.c.0.s8 %v1133
        %v1135 = vlaneseq
        %v1136 = vshrl.u32 %v1135, 7
        %v1137 = vsub.s32 %v1134, %v1136
        %v1138 = vrot.slane %v1124, %v1137
        %v1139 = vcombine.low %v579, %v585
        %v1140 = vcombine.high %v579, %v585
        %v1142 = vunpack.c.l.s4 1983009808
        %v1143 = vunpack.c.0.s8 %v1142
        %v1144 = vlaneseq
        %v1145 = vshrl.u32 %v1144, 7
        %v1146 = vsub.s32 %v1143, %v1145
        %v1147 = vrot.slane %v1139, %v1146
        %v1149 = vunpack.c.l.s4 1983009808
        %v1150 = vunpack.c.0.s8 %v1149
        %v1151 = vlaneseq
        %v1152 = vshrl.u32 %v1151, 7
        %v1153 = vsub.s32 %v1150, %v1152
        %v1154 = vrot.slane %v1140, %v1153
        %v1155 = vcombine.low %v1099, %v1115
        %v1156 = vcombine.high %v1099, %v1115
        %v1158 = vunpack.c.l.s4 1934713408
        %v1159 = vunpack.c.0.s8 %v1158
        %v1160 = vlaneseq
        %v1161 = vshrl.u32 %v1160, 7
        %v1162 = vsub.s32 %v1159, %v1161
        %v1163 = vrot.slane %v1155, %v1162
        %v1165 = vunpack.c.l.s4 1934713408
        %v1166 = vunpack.c.0.s8 %v1165
        %v1167 = vlaneseq
        %v1168 = vshrl.u32 %v1167, 7
        %v1169 = vsub.s32 %v1166, %v1168
        %v1170 = vrot.slane %v1156, %v1169
        %v1171 = vcombine.low %v1106, %v1122
        %v1172 = vcombine.high %v1106, %v1122
        %v1174 = vunpack.c.l.s4 1934713408
        %v1175 = vunpack.c.0.s8 %v1174
        %v1176 = vlaneseq
        %v1177 = vshrl.u32 %v1176, 7
        %v1178 = vsub.s32 %v1175, %v1177
        %v1179 = vrot.slane %v1171, %v1178
        %v1181 = vunpack.c.l.s4 1934713408
        %v1182 = vunpack.c.0.s8 %v1181
        %v1183 = vlaneseq
        %v1184 = vshrl.u32 %v1183, 7
        %v1185 = vsub.s32 %v1182, %v1184
        %v1186 = vrot.slane %v1172, %v1185
        %v1187 = vcombine.low %v1131, %v1147
        %v1188 = vcombine.high %v1131, %v1147
        %v1190 = vunpack.c.l.s4 1934713408
        %v1191 = vunpack.c.0.s8 %v1190
        %v1192 = vlaneseq
        %v1193 = vshrl.u32 %v1192, 7
        %v1194 = vsub.s32 %v1191, %v1193
        %v1195 = vrot.slane %v1187, %v1194
        %v1197 = vunpack.c.l.s4 1934713408
        %v1198 = vunpack.c.0.s8 %v1197
        %v1199 = vlaneseq
        %v1200 = vshrl.u32 %v1199, 7
        %v1201 = vsub.s32 %v1198, %v1200
        %v1202 = vrot.slane %v1188, %v1201
        %v1203 = vcombine.low %v1138, %v1154
        %v1204 = vcombine.high %v1138, %v1154
        %v1206 = vunpack.c.l.s4 1934713408
        %v1207 = vunpack.c.0.s8 %v1206
        %v1208 = vlaneseq
        %v1209 = vshrl.u32 %v1208, 7
        %v1210 = vsub.s32 %v1207, %v1209
        %v1211 = vrot.slane %v1203, %v1210
        %v1213 = vunpack.c.l.s4 1934713408
        %v1214 = vunpack.c.0.s8 %v1213
        %v1215 = vlaneseq
        %v1216 = vshrl.u32 %v1215, 7
        %v1217 = vsub.s32 %v1214, %v1216
        %v1218 = vrot.slane %v1204, %v1217
        %v1219 = vcombine.low %v1163, %v1195
        %v1220 = vcombine.high %v1163, %v1195
        %v1221 = vcombine.low %v1170, %v1202
        %v1222 = vcombine.high %v1170, %v1202
        %v1223 = vcombine.low %v1179, %v1211
        %v1224 = vcombine.high %v1179, %v1211
        %v1225 = vcombine.low %v1186, %v1218
        %v1226 = vcombine.high %v1186, %v1218
        %v1227 = vcombine.low %v588, %v594
        %v1228 = vcombine.high %v588, %v594
        %v1230 = vunpack.c.l.s4 1983009808
        %v1231 = vunpack.c.0.s8 %v1230
        %v1232 = vlaneseq
        %v1233 = vshrl.u32 %v1232, 7
        %v1234 = vsub.s32 %v1231, %v1233
        %v1235 = vrot.slane %v1227, %v1234
        %v1237 = vunpack.c.l.s4 1983009808
        %v1238 = vunpack.c.0.s8 %v1237
        %v1239 = vlaneseq
        %v1240 = vshrl.u32 %v1239, 7
        %v1241 = vsub.s32 %v1238, %v1240
        %v1242 = vrot.slane %v1228, %v1241
        %v1243 = vcombine.low %v591, %v597
        %v1244 = vcombine.high %v591, %v597
        %v1246 = vunpack.c.l.s4 1983009808
        %v1247 = vunpack.c.0.s8 %v1246
        %v1248 = vlaneseq
        %v1249 = vshrl.u32 %v1248, 7
        %v1250 = vsub.s32 %v1247, %v1249
        %v1251 = vrot.slane %v1243, %v1250
        %v1253 = vunpack.c.l.s4 1983009808
        %v1254 = vunpack.c.0.s8 %v1253
        %v1255 = vlaneseq
        %v1256 = vshrl.u32 %v1255, 7
        %v1257 = vsub.s32 %v1254, %v1256
        %v1258 = vrot.slane %v1244, %v1257
        %v1259 = vcombine.low %v600, %v606
        %v1260 = vcombine.high %v600, %v606
        %v1262 = vunpack.c.l.s4 1983009808
        %v1263 = vunpack.c.0.s8 %v1262
        %v1264 = vlaneseq
        %v1265 = vshrl.u32 %v1264, 7
        %v1266 = vsub.s32 %v1263, %v1265
        %v1267 = vrot.slane %v1259, %v1266
        %v1269 = vunpack.c.l.s4 1983009808
        %v1270 = vunpack.c.0.s8 %v1269
        %v1271 = vlaneseq
        %v1272 = vshrl.u32 %v1271, 7
        %v1273 = vsub.s32 %v1270, %v1272
        %v1274 = vrot.slane %v1260, %v1273
        %v1275 = vcombine.low %v603, %v609
        %v1276 = vcombine.high %v603, %v609
        %v1278 = vunpack.c.l.s4 1983009808
        %v1279 = vunpack.c.0.s8 %v1278
        %v1280 = vlaneseq
        %v1281 = vshrl.u32 %v1280, 7
        %v1282 = vsub.s32 %v1279, %v1281
        %v1283 = vrot.slane %v1275, %v1282
        %v1285 = vunpack.c.l.s4 1983009808
        %v1286 = vunpack.c.0.s8 %v1285
        %v1287 = vlaneseq
        %v1288 = vshrl.u32 %v1287, 7
        %v1289 = vsub.s32 %v1286, %v1288
        %v1290 = vrot.slane %v1276, %v1289
        %v1291 = vcombine.low %v1235, %v1251
        %v1292 = vcombine.high %v1235, %v1251
        %v1294 = vunpack.c.l.s4 1934713408
        %v1295 = vunpack.c.0.s8 %v1294
        %v1296 = vlaneseq
        %v1297 = vshrl.u32 %v1296, 7
        %v1298 = vsub.s32 %v1295, %v1297
        %v1299 = vrot.slane %v1291, %v1298
        %v1301 = vunpack.c.l.s4 1934713408
        %v1302 = vunpack.c.0.s8 %v1301
        %v1303 = vlaneseq
        %v1304 = vshrl.u32 %v1303, 7
        %v1305 = vsub.s32 %v1302, %v1304
        %v1306 = vrot.slane %v1292, %v1305
        %v1307 = vcombine.low %v1242, %v1258
        %v1308 = vcombine.high %v1242, %v1258
        %v1310 = vunpack.c.l.s4 1934713408
        %v1311 = vunpack.c.0.s8 %v1310
        %v1312 = vlaneseq
        %v1313 = vshrl.u32 %v1312, 7
        %v1314 = vsub.s32 %v1311, %v1313
        %v1315 = vrot.slane %v1307, %v1314
        %v1317 = vunpack.c.l.s4 1934713408
        %v1318 = vunpack.c.0.s8 %v1317
        %v1319 = vlaneseq
        %v1320 = vshrl.u32 %v1319, 7
        %v1321 = vsub.s32 %v1318, %v1320
        %v1322 = vrot.slane %v1308, %v1321
        %v1323 = vcombine.low %v1267, %v1283
        %v1324 = vcombine.high %v1267, %v1283
        %v1326 = vunpack.c.l.s4 1934713408
        %v1327 = vunpack.c.0.s8 %v1326
        %v1328 = vlaneseq
        %v1329 = vshrl.u32 %v1328, 7
        %v1330 = vsub.s32 %v1327, %v1329
        %v1331 = vrot.slane %v1323, %v1330
        %v1333 = vunpack.c.l.s4 1934713408
        %v1334 = vunpack.c.0.s8 %v1333
        %v1335 = vlaneseq
        %v1336 = vshrl.u32 %v1335, 7
        %v1337 = vsub.s32 %v1334, %v1336
        %v1338 = vrot.slane %v1324, %v1337
        %v1339 = vcombine.low %v1274, %v1290
        %v1340 = vcombine.high %v1274, %v1290
        %v1342 = vunpack.c.l.s4 1934713408
        %v1343 = vunpack.c.0.s8 %v1342
        %v1344 = vlaneseq
        %v1345 = vshrl.u32 %v1344, 7
        %v1346 = vsub.s32 %v1343, %v1345
        %v1347 = vrot.slane %v1339, %v1346
        %v1349 = vunpack.c.l.s4 1934713408
        %v1350 = vunpack.c.0.s8 %v1349
        %v1351 = vlaneseq
        %v1352 = vshrl.u32 %v1351, 7
        %v1353 = vsub.s32 %v1350, %v1352
        %v1354 = vrot.slane %v1340, %v1353
        %v1355 = vcombine.low %v1299, %v1331
        %v1356 = vcombine.high %v1299, %v1331
        %v1357 = vcombine.low %v1306, %v1338
        %v1358 = vcombine.high %v1306, %v1338
        %v1359 = vcombine.low %v1315, %v1347
        %v1360 = vcombine.high %v1315, %v1347
        %v1361 = vcombine.low %v1322, %v1354
        %v1362 = vcombine.high %v1322, %v1354
        %v1363 = vcombine.low %v612, %v618
        %v1364 = vcombine.high %v612, %v618
        %v1366 = vunpack.c.l.s4 1983009808
        %v1367 = vunpack.c.0.s8 %v1366
        %v1368 = vlaneseq
        %v1369 = vshrl.u32 %v1368, 7
        %v1370 = vsub.s32 %v1367, %v1369
        %v1371 = vrot.slane %v1363, %v1370
        %v1373 = vunpack.c.l.s4 1983009808
        %v1374 = vunpack.c.0.s8 %v1373
        %v1375 = vlaneseq
        %v1376 = vshrl.u32 %v1375, 7
        %v1377 = vsub.s32 %v1374, %v1376
        %v1378 = vrot.slane %v1364, %v1377
        %v1379 = vcombine.low %v615, %v621
        %v1380 = vcombine.high %v615, %v621
        %v1382 = vunpack.c.l.s4 1983009808
        %v1383 = vunpack.c.0.s8 %v1382
        %v1384 = vlaneseq
        %v1385 = vshrl.u32 %v1384, 7
        %v1386 = vsub.s32 %v1383, %v1385
        %v1387 = vrot.slane %v1379, %v1386
        %v1389 = vunpack.c.l.s4 1983009808
        %v1390 = vunpack.c.0.s8 %v1389
        %v1391 = vlaneseq
        %v1392 = vshrl.u32 %v1391, 7
        %v1393 = vsub.s32 %v1390, %v1392
        %v1394 = vrot.slane %v1380, %v1393
        %v1395 = vcombine.low %v624, %v630
        %v1396 = vcombine.high %v624, %v630
        %v1398 = vunpack.c.l.s4 1983009808
        %v1399 = vunpack.c.0.s8 %v1398
        %v1400 = vlaneseq
        %v1401 = vshrl.u32 %v1400, 7
        %v1402 = vsub.s32 %v1399, %v1401
        %v1403 = vrot.slane %v1395, %v1402
        %v1405 = vunpack.c.l.s4 1983009808
        %v1406 = vunpack.c.0.s8 %v1405
        %v1407 = vlaneseq
        %v1408 = vshrl.u32 %v1407, 7
        %v1409 = vsub.s32 %v1406, %v1408
        %v1410 = vrot.slane %v1396, %v1409
        %v1411 = vcombine.low %v627, %v633
        %v1412 = vcombine.high %v627, %v633
        %v1414 = vunpack.c.l.s4 1983009808
        %v1415 = vunpack.c.0.s8 %v1414
        %v1416 = vlaneseq
        %v1417 = vshrl.u32 %v1416, 7
        %v1418 = vsub.s32 %v1415, %v1417
        %v1419 = vrot.slane %v1411, %v1418
        %v1421 = vunpack.c.l.s4 1983009808
        %v1422 = vunpack.c.0.s8 %v1421
        %v1423 = vlaneseq
        %v1424 = vshrl.u32 %v1423, 7
        %v1425 = vsub.s32 %v1422, %v1424
        %v1426 = vrot.slane %v1412, %v1425
        %v1427 = vcombine.low %v1371, %v1387
        %v1428 = vcombine.high %v1371, %v1387
        %v1430 = vunpack.c.l.s4 1934713408
        %v1431 = vunpack.c.0.s8 %v1430
        %v1432 = vlaneseq
        %v1433 = vshrl.u32 %v1432, 7
        %v1434 = vsub.s32 %v1431, %v1433
        %v1435 = vrot.slane %v1427, %v1434
        %v1437 = vunpack.c.l.s4 1934713408
        %v1438 = vunpack.c.0.s8 %v1437
        %v1439 = vlaneseq
        %v1440 = vshrl.u32 %v1439, 7
        %v1441 = vsub.s32 %v1438, %v1440
        %v1442 = vrot.slane %v1428, %v1441
        %v1443 = vcombine.low %v1378, %v1394
        %v1444 = vcombine.high %v1378, %v1394
        %v1446 = vunpack.c.l.s4 1934713408
        %v1447 = vunpack.c.0.s8 %v1446
        %v1448 = vlaneseq
        %v1449 = vshrl.u32 %v1448, 7
        %v1450 = vsub.s32 %v1447, %v1449
        %v1451 = vrot.slane %v1443, %v1450
        %v1453 = vunpack.c.l.s4 1934713408
        %v1454 = vunpack.c.0.s8 %v1453
        %v1455 = vlaneseq
        %v1456 = vshrl.u32 %v1455, 7
        %v1457 = vsub.s32 %v1454, %v1456
        %v1458 = vrot.slane %v1444, %v1457
        %v1459 = vcombine.low %v1403, %v1419
        %v1460 = vcombine.high %v1403, %v1419
        %v1462 = vunpack.c.l.s4 1934713408
        %v1463 = vunpack.c.0.s8 %v1462
        %v1464 = vlaneseq
        %v1465 = vshrl.u32 %v1464, 7
        %v1466 = vsub.s32 %v1463, %v1465
        %v1467 = vrot.slane %v1459, %v1466
        %v1469 = vunpack.c.l.s4 1934713408
        %v1470 = vunpack.c.0.s8 %v1469
        %v1471 = vlaneseq
        %v1472 = vshrl.u32 %v1471, 7
        %v1473 = vsub.s32 %v1470, %v1472
        %v1474 = vrot.slane %v1460, %v1473
        %v1475 = vcombine.low %v1410, %v1426
        %v1476 = vcombine.high %v1410, %v1426
        %v1478 = vunpack.c.l.s4 1934713408
        %v1479 = vunpack.c.0.s8 %v1478
        %v1480 = vlaneseq
        %v1481 = vshrl.u32 %v1480, 7
        %v1482 = vsub.s32 %v1479, %v1481
        %v1483 = vrot.slane %v1475, %v1482
        %v1485 = vunpack.c.l.s4 1934713408
        %v1486 = vunpack.c.0.s8 %v1485
        %v1487 = vlaneseq
        %v1488 = vshrl.u32 %v1487, 7
        %v1489 = vsub.s32 %v1486, %v1488
        %v1490 = vrot.slane %v1476, %v1489
        %v1491 = vcombine.low %v1435, %v1467
        %v1492 = vcombine.high %v1435, %v1467
        %v1493 = vcombine.low %v1442, %v1474
        %v1494 = vcombine.high %v1442, %v1474
        %v1495 = vcombine.low %v1451, %v1483
        %v1496 = vcombine.high %v1451, %v1483
        %v1497 = vcombine.low %v1458, %v1490
        %v1498 = vcombine.high %v1458, %v1490
        %v1499 = vcombine.low %v636, %v642
        %v1500 = vcombine.high %v636, %v642
        %v1502 = vunpack.c.l.s4 1983009808
        %v1503 = vunpack.c.0.s8 %v1502
        %v1504 = vlaneseq
        %v1505 = vshrl.u32 %v1504, 7
        %v1506 = vsub.s32 %v1503, %v1505
        %v1507 = vrot.slane %v1499, %v1506
        %v1509 = vunpack.c.l.s4 1983009808
        %v1510 = vunpack.c.0.s8 %v1509
        %v1511 = vlaneseq
        %v1512 = vshrl.u32 %v1511, 7
        %v1513 = vsub.s32 %v1510, %v1512
        %v1514 = vrot.slane %v1500, %v1513
        %v1515 = vcombine.low %v639, %v645
        %v1516 = vcombine.high %v639, %v645
        %v1518 = vunpack.c.l.s4 1983009808
        %v1519 = vunpack.c.0.s8 %v1518
        %v1520 = vlaneseq
        %v1521 = vshrl.u32 %v1520, 7
        %v1522 = vsub.s32 %v1519, %v1521
        %v1523 = vrot.slane %v1515, %v1522
        %v1525 = vunpack.c.l.s4 1983009808
        %v1526 = vunpack.c.0.s8 %v1525
        %v1527 = vlaneseq
        %v1528 = vshrl.u32 %v1527, 7
        %v1529 = vsub.s32 %v1526, %v1528
        %v1530 = vrot.slane %v1516, %v1529
        %v1531 = vcombine.low %v648, %v654
        %v1532 = vcombine.high %v648, %v654
        %v1534 = vunpack.c.l.s4 1983009808
        %v1535 = vunpack.c.0.s8 %v1534
        %v1536 = vlaneseq
        %v1537 = vshrl.u32 %v1536, 7
        %v1538 = vsub.s32 %v1535, %v1537
        %v1539 = vrot.slane %v1531, %v1538
        %v1541 = vunpack.c.l.s4 1983009808
        %v1542 = vunpack.c.0.s8 %v1541
        %v1543 = vlaneseq
        %v1544 = vshrl.u32 %v1543, 7
        %v1545 = vsub.s32 %v1542, %v1544
        %v1546 = vrot.slane %v1532, %v1545
        %v1547 = vcombine.low %v651, %v657
        %v1548 = vcombine.high %v651, %v657
        %v1550 = vunpack.c.l.s4 1983009808
        %v1551 = vunpack.c.0.s8 %v1550
        %v1552 = vlaneseq
        %v1553 = vshrl.u32 %v1552, 7
        %v1554 = vsub.s32 %v1551, %v1553
        %v1555 = vrot.slane %v1547, %v1554
        %v1557 = vunpack.c.l.s4 1983009808
        %v1558 = vunpack.c.0.s8 %v1557
        %v1559 = vlaneseq
        %v1560 = vshrl.u32 %v1559, 7
        %v1561 = vsub.s32 %v1558, %v1560
        %v1562 = vrot.slane %v1548, %v1561
        %v1563 = vcombine.low %v1507, %v1523
        %v1564 = vcombine.high %v1507, %v1523
        %v1566 = vunpack.c.l.s4 1934713408
        %v1567 = vunpack.c.0.s8 %v1566
        %v1568 = vlaneseq
        %v1569 = vshrl.u32 %v1568, 7
        %v1570 = vsub.s32 %v1567, %v1569
        %v1571 = vrot.slane %v1563, %v1570
        %v1573 = vunpack.c.l.s4 1934713408
        %v1574 = vunpack.c.0.s8 %v1573
        %v1575 = vlaneseq
        %v1576 = vshrl.u32 %v1575, 7
        %v1577 = vsub.s32 %v1574, %v1576
        %v1578 = vrot.slane %v1564, %v1577
        %v1579 = vcombine.low %v1514, %v1530
        %v1580 = vcombine.high %v1514, %v1530
        %v1582 = vunpack.c.l.s4 1934713408
        %v1583 = vunpack.c.0.s8 %v1582
        %v1584 = vlaneseq
        %v1585 = vshrl.u32 %v1584, 7
        %v1586 = vsub.s32 %v1583, %v1585
        %v1587 = vrot.slane %v1579, %v1586
        %v1589 = vunpack.c.l.s4 1934713408
        %v1590 = vunpack.c.0.s8 %v1589
        %v1591 = vlaneseq
        %v1592 = vshrl.u32 %v1591, 7
        %v1593 = vsub.s32 %v1590, %v1592
        %v1594 = vrot.slane %v1580, %v1593
        %v1595 = vcombine.low %v1539, %v1555
        %v1596 = vcombine.high %v1539, %v1555
        %v1598 = vunpack.c.l.s4 1934713408
        %v1599 = vunpack.c.0.s8 %v1598
        %v1600 = vlaneseq
        %v1601 = vshrl.u32 %v1600, 7
        %v1602 = vsub.s32 %v1599, %v1601
        %v1603 = vrot.slane %v1595, %v1602
        %v1605 = vunpack.c.l.s4 1934713408
        %v1606 = vunpack.c.0.s8 %v1605
        %v1607 = vlaneseq
        %v1608 = vshrl.u32 %v1607, 7
        %v1609 = vsub.s32 %v1606, %v1608
        %v1610 = vrot.slane %v1596, %v1609
        %v1611 = vcombine.low %v1546, %v1562
        %v1612 = vcombine.high %v1546, %v1562
        %v1614 = vunpack.c.l.s4 1934713408
        %v1615 = vunpack.c.0.s8 %v1614
        %v1616 = vlaneseq
        %v1617 = vshrl.u32 %v1616, 7
        %v1618 = vsub.s32 %v1615, %v1617
        %v1619 = vrot.slane %v1611, %v1618
        %v1621 = vunpack.c.l.s4 1934713408
        %v1622 = vunpack.c.0.s8 %v1621
        %v1623 = vlaneseq
        %v1624 = vshrl.u32 %v1623, 7
        %v1625 = vsub.s32 %v1622, %v1624
        %v1626 = vrot.slane %v1612, %v1625
        %v1627 = vcombine.low %v1571, %v1603
        %v1628 = vcombine.high %v1571, %v1603
        %v1629 = vcombine.low %v1578, %v1610
        %v1630 = vcombine.high %v1578, %v1610
        %v1631 = vcombine.low %v1587, %v1619
        %v1632 = vcombine.high %v1587, %v1619
        %v1633 = vcombine.low %v1594, %v1626
        %v1634 = vcombine.high %v1594, %v1626
        %v1635 = vcombine.low %v660, %v666
        %v1636 = vcombine.high %v660, %v666
        %v1638 = vunpack.c.l.s4 1983009808
        %v1639 = vunpack.c.0.s8 %v1638
        %v1640 = vlaneseq
        %v1641 = vshrl.u32 %v1640, 7
        %v1642 = vsub.s32 %v1639, %v1641
        %v1643 = vrot.slane %v1635, %v1642
        %v1645 = vunpack.c.l.s4 1983009808
        %v1646 = vunpack.c.0.s8 %v1645
        %v1647 = vlaneseq
        %v1648 = vshrl.u32 %v1647, 7
        %v1649 = vsub.s32 %v1646, %v1648
        %v1650 = vrot.slane %v1636, %v1649
        %v1651 = vcombine.low %v663, %v669
        %v1652 = vcombine.high %v663, %v669
        %v1654 = vunpack.c.l.s4 1983009808
        %v1655 = vunpack.c.0.s8 %v1654
        %v1656 = vlaneseq
        %v1657 = vshrl.u32 %v1656, 7
        %v1658 = vsub.s32 %v1655, %v1657
        %v1659 = vrot.slane %v1651, %v1658
        %v1661 = vunpack.c.l.s4 1983009808
        %v1662 = vunpack.c.0.s8 %v1661
        %v1663 = vlaneseq
        %v1664 = vshrl.u32 %v1663, 7
        %v1665 = vsub.s32 %v1662, %v1664
        %v1666 = vrot.slane %v1652, %v1665
        %v1667 = vcombine.low %v672, %v678
        %v1668 = vcombine.high %v672, %v678
        %v1670 = vunpack.c.l.s4 1983009808
        %v1671 = vunpack.c.0.s8 %v1670
        %v1672 = vlaneseq
        %v1673 = vshrl.u32 %v1672, 7
        %v1674 = vsub.s32 %v1671, %v1673
        %v1675 = vrot.slane %v1667, %v1674
        %v1677 = vunpack.c.l.s4 1983009808
        %v1678 = vunpack.c.0.s8 %v1677
        %v1679 = vlaneseq
        %v1680 = vshrl.u32 %v1679, 7
        %v1681 = vsub.s32 %v1678, %v1680
        %v1682 = vrot.slane %v1668, %v1681
        %v1683 = vcombine.low %v675, %v681
        %v1684 = vcombine.high %v675, %v681
        %v1686 = vunpack.c.l.s4 1983009808
        %v1687 = vunpack.c.0.s8 %v1686
        %v1688 = vlaneseq
        %v1689 = vshrl.u32 %v1688, 7
        %v1690 = vsub.s32 %v1687, %v1689
        %v1691 = vrot.slane %v1683, %v1690
        %v1693 = vunpack.c.l.s4 1983009808
        %v1694 = vunpack.c.0.s8 %v1693
        %v1695 = vlaneseq
        %v1696 = vshrl.u32 %v1695, 7
        %v1697 = vsub.s32 %v1694, %v1696
        %v1698 = vrot.slane %v1684, %v1697
        %v1699 = vcombine.low %v1643, %v1659
        %v1700 = vcombine.high %v1643, %v1659
        %v1702 = vunpack.c.l.s4 1934713408
        %v1703 = vunpack.c.0.s8 %v1702
        %v1704 = vlaneseq
        %v1705 = vshrl.u32 %v1704, 7
        %v1706 = vsub.s32 %v1703, %v1705
        %v1707 = vrot.slane %v1699, %v1706
        %v1709 = vunpack.c.l.s4 1934713408
        %v1710 = vunpack.c.0.s8 %v1709
        %v1711 = vlaneseq
        %v1712 = vshrl.u32 %v1711, 7
        %v1713 = vsub.s32 %v1710, %v1712
        %v1714 = vrot.slane %v1700, %v1713
        %v1715 = vcombine.low %v1650, %v1666
        %v1716 = vcombine.high %v1650, %v1666
        %v1718 = vunpack.c.l.s4 1934713408
        %v1719 = vunpack.c.0.s8 %v1718
        %v1720 = vlaneseq
        %v1721 = vshrl.u32 %v1720, 7
        %v1722 = vsub.s32 %v1719, %v1721
        %v1723 = vrot.slane %v1715, %v1722
        %v1725 = vunpack.c.l.s4 1934713408
        %v1726 = vunpack.c.0.s8 %v1725
        %v1727 = vlaneseq
        %v1728 = vshrl.u32 %v1727, 7
        %v1729 = vsub.s32 %v1726, %v1728
        %v1730 = vrot.slane %v1716, %v1729
        %v1731 = vcombine.low %v1675, %v1691
        %v1732 = vcombine.high %v1675, %v1691
        %v1734 = vunpack.c.l.s4 1934713408
        %v1735 = vunpack.c.0.s8 %v1734
        %v1736 = vlaneseq
        %v1737 = vshrl.u32 %v1736, 7
        %v1738 = vsub.s32 %v1735, %v1737
        %v1739 = vrot.slane %v1731, %v1738
        %v1741 = vunpack.c.l.s4 1934713408
        %v1742 = vunpack.c.0.s8 %v1741
        %v1743 = vlaneseq
        %v1744 = vshrl.u32 %v1743, 7
        %v1745 = vsub.s32 %v1742, %v1744
        %v1746 = vrot.slane %v1732, %v1745
        %v1747 = vcombine.low %v1682, %v1698
        %v1748 = vcombine.high %v1682, %v1698
        %v1750 = vunpack.c.l.s4 1934713408
        %v1751 = vunpack.c.0.s8 %v1750
        %v1752 = vlaneseq
        %v1753 = vshrl.u32 %v1752, 7
        %v1754 = vsub.s32 %v1751, %v1753
        %v1755 = vrot.slane %v1747, %v1754
        %v1757 = vunpack.c.l.s4 1934713408
        %v1758 = vunpack.c.0.s8 %v1757
        %v1759 = vlaneseq
        %v1760 = vshrl.u32 %v1759, 7
        %v1761 = vsub.s32 %v1758, %v1760
        %v1762 = vrot.slane %v1748, %v1761
        %v1763 = vcombine.low %v1707, %v1739
        %v1764 = vcombine.high %v1707, %v1739
        %v1765 = vcombine.low %v1714, %v1746
        %v1766 = vcombine.high %v1714, %v1746
        %v1767 = vcombine.low %v1723, %v1755
        %v1768 = vcombine.high %v1723, %v1755
        %v1769 = vcombine.low %v1730, %v1762
        %v1770 = vcombine.high %v1730, %v1762
        %vm1771 = vcmask 15360
        %v1772 = vsel %vm1771, %v811, -inf
        %1773 = vmax.xlane.f32.xlu0 %v1772
        %v1774 = vpop.xlane.xlu0 %1773
        %v1775 = vsel %vm1771, %v947, -inf
        %1776 = vmax.xlane.f32.xlu0 %v1775
        %v1777 = vpop.xlane.xlu0 %1776
        %v1778 = vsel %vm1771, %v1083, -inf
        %1779 = vmax.xlane.f32.xlu0 %v1778
        %v1780 = vpop.xlane.xlu0 %1779
        %v1781 = vsel %vm1771, %v1219, -inf
        %1782 = vmax.xlane.f32.xlu0 %v1781
        %v1783 = vpop.xlane.xlu0 %1782
        %v1784 = vsel %vm1771, %v1355, -inf
        %1785 = vmax.xlane.f32.xlu0 %v1784
        %v1786 = vpop.xlane.xlu0 %1785
        %v1787 = vsel %vm1771, %v1491, -inf
        %1788 = vmax.xlane.f32.xlu0 %v1787
        %v1789 = vpop.xlane.xlu0 %1788
        %v1790 = vsel %vm1771, %v1627, -inf
        %1791 = vmax.xlane.f32.xlu0 %v1790
        %v1792 = vpop.xlane.xlu0 %1791
        %v1793 = vsel %vm1771, %v1763, -inf
        %1794 = vmax.xlane.f32.xlu0 %v1793
        %v1795 = vpop.xlane.xlu0 %1794
        %v1796 = vsel %vm1771, %v812, -inf
        %1797 = vmax.xlane.f32.xlu0 %v1796
        %v1798 = vpop.xlane.xlu0 %1797
        %v1799 = vsel %vm1771, %v948, -inf
        %1800 = vmax.xlane.f32.xlu0 %v1799
        %v1801 = vpop.xlane.xlu0 %1800
        %v1802 = vsel %vm1771, %v1084, -inf
        %1803 = vmax.xlane.f32.xlu0 %v1802
        %v1804 = vpop.xlane.xlu0 %1803
        %v1805 = vsel %vm1771, %v1220, -inf
        %1806 = vmax.xlane.f32.xlu0 %v1805
        %v1807 = vpop.xlane.xlu0 %1806
        %v1808 = vsel %vm1771, %v1356, -inf
        %1809 = vmax.xlane.f32.xlu0 %v1808
        %v1810 = vpop.xlane.xlu0 %1809
        %v1811 = vsel %vm1771, %v1492, -inf
        %1812 = vmax.xlane.f32.xlu0 %v1811
        %v1813 = vpop.xlane.xlu0 %1812
        %v1814 = vsel %vm1771, %v1628, -inf
        %1815 = vmax.xlane.f32.xlu0 %v1814
        %v1816 = vpop.xlane.xlu0 %1815
        %v1817 = vsel %vm1771, %v1764, -inf
        %1818 = vmax.xlane.f32.xlu0 %v1817
        %v1819 = vpop.xlane.xlu0 %1818
        %v1820 = vsel %vm1771, %v813, -inf
        %1821 = vmax.xlane.f32.xlu0 %v1820
        %v1822 = vpop.xlane.xlu0 %1821
        %v1823 = vsel %vm1771, %v949, -inf
        %1824 = vmax.xlane.f32.xlu0 %v1823
        %v1825 = vpop.xlane.xlu0 %1824
        %v1826 = vsel %vm1771, %v1085, -inf
        %1827 = vmax.xlane.f32.xlu0 %v1826
        %v1828 = vpop.xlane.xlu0 %1827
        %v1829 = vsel %vm1771, %v1221, -inf
        %1830 = vmax.xlane.f32.xlu0 %v1829
        %v1831 = vpop.xlane.xlu0 %1830
        %v1832 = vsel %vm1771, %v1357, -inf
        %1833 = vmax.xlane.f32.xlu0 %v1832
        %v1834 = vpop.xlane.xlu0 %1833
        %v1835 = vsel %vm1771, %v1493, -inf
        %1836 = vmax.xlane.f32.xlu0 %v1835
        %v1837 = vpop.xlane.xlu0 %1836
        %v1838 = vsel %vm1771, %v1629, -inf
        %1839 = vmax.xlane.f32.xlu0 %v1838
        %v1840 = vpop.xlane.xlu0 %1839
        %v1841 = vsel %vm1771, %v1765, -inf
        %1842 = vmax.xlane.f32.xlu0 %v1841
        %v1843 = vpop.xlane.xlu0 %1842
        %v1844 = vsel %vm1771, %v814, -inf
        %1845 = vmax.xlane.f32.xlu0 %v1844
        %v1846 = vpop.xlane.xlu0 %1845
        %v1847 = vsel %vm1771, %v950, -inf
        %1848 = vmax.xlane.f32.xlu0 %v1847
        %v1849 = vpop.xlane.xlu0 %1848
        %v1850 = vsel %vm1771, %v1086, -inf
        %1851 = vmax.xlane.f32.xlu0 %v1850
        %v1852 = vpop.xlane.xlu0 %1851
        %v1853 = vsel %vm1771, %v1222, -inf
        %1854 = vmax.xlane.f32.xlu0 %v1853
        %v1855 = vpop.xlane.xlu0 %1854
        %v1856 = vsel %vm1771, %v1358, -inf
        %1857 = vmax.xlane.f32.xlu0 %v1856
        %v1858 = vpop.xlane.xlu0 %1857
        %v1859 = vsel %vm1771, %v1494, -inf
        %1860 = vmax.xlane.f32.xlu0 %v1859
        %v1861 = vpop.xlane.xlu0 %1860
        %v1862 = vsel %vm1771, %v1630, -inf
        %1863 = vmax.xlane.f32.xlu0 %v1862
        %v1864 = vpop.xlane.xlu0 %1863
        %v1865 = vsel %vm1771, %v1766, -inf
        %1866 = vmax.xlane.f32.xlu0 %v1865
        %v1867 = vpop.xlane.xlu0 %1866
        %v1868 = vsel %vm1771, %v815, -inf
        %1869 = vmax.xlane.f32.xlu0 %v1868
        %v1870 = vpop.xlane.xlu0 %1869
        %v1871 = vsel %vm1771, %v951, -inf
        %1872 = vmax.xlane.f32.xlu0 %v1871
        %v1873 = vpop.xlane.xlu0 %1872
        %v1874 = vsel %vm1771, %v1087, -inf
        %1875 = vmax.xlane.f32.xlu0 %v1874
        %v1876 = vpop.xlane.xlu0 %1875
        %v1877 = vsel %vm1771, %v1223, -inf
        %1878 = vmax.xlane.f32.xlu0 %v1877
        %v1879 = vpop.xlane.xlu0 %1878
        %v1880 = vsel %vm1771, %v1359, -inf
        %1881 = vmax.xlane.f32.xlu0 %v1880
        %v1882 = vpop.xlane.xlu0 %1881
        %v1883 = vsel %vm1771, %v1495, -inf
        %1884 = vmax.xlane.f32.xlu0 %v1883
        %v1885 = vpop.xlane.xlu0 %1884
        %v1886 = vsel %vm1771, %v1631, -inf
        %1887 = vmax.xlane.f32.xlu0 %v1886
        %v1888 = vpop.xlane.xlu0 %1887
        %v1889 = vsel %vm1771, %v1767, -inf
        %1890 = vmax.xlane.f32.xlu0 %v1889
        %v1891 = vpop.xlane.xlu0 %1890
        %v1892 = vsel %vm1771, %v816, -inf
        %1893 = vmax.xlane.f32.xlu0 %v1892
        %v1894 = vpop.xlane.xlu0 %1893
        %v1895 = vsel %vm1771, %v952, -inf
        %1896 = vmax.xlane.f32.xlu0 %v1895
        %v1897 = vpop.xlane.xlu0 %1896
        %v1898 = vsel %vm1771, %v1088, -inf
        %1899 = vmax.xlane.f32.xlu0 %v1898
        %v1900 = vpop.xlane.xlu0 %1899
        %v1901 = vsel %vm1771, %v1224, -inf
        %1902 = vmax.xlane.f32.xlu0 %v1901
        %v1903 = vpop.xlane.xlu0 %1902
        %v1904 = vsel %vm1771, %v1360, -inf
        %1905 = vmax.xlane.f32.xlu0 %v1904
        %v1906 = vpop.xlane.xlu0 %1905
        %v1907 = vsel %vm1771, %v1496, -inf
        %1908 = vmax.xlane.f32.xlu0 %v1907
        %v1909 = vpop.xlane.xlu0 %1908
        %v1910 = vsel %vm1771, %v1632, -inf
        %1911 = vmax.xlane.f32.xlu0 %v1910
        %v1912 = vpop.xlane.xlu0 %1911
        %v1913 = vsel %vm1771, %v1768, -inf
        %1914 = vmax.xlane.f32.xlu0 %v1913
        %v1915 = vpop.xlane.xlu0 %1914
        %v1916 = vsel %vm1771, %v817, -inf
        %1917 = vmax.xlane.f32.xlu0 %v1916
        %v1918 = vpop.xlane.xlu0 %1917
        %v1919 = vsel %vm1771, %v953, -inf
        %1920 = vmax.xlane.f32.xlu0 %v1919
        %v1921 = vpop.xlane.xlu0 %1920
        %v1922 = vsel %vm1771, %v1089, -inf
        %1923 = vmax.xlane.f32.xlu0 %v1922
        %v1924 = vpop.xlane.xlu0 %1923
        %v1925 = vsel %vm1771, %v1225, -inf
        %1926 = vmax.xlane.f32.xlu0 %v1925
        %v1927 = vpop.xlane.xlu0 %1926
        %v1928 = vsel %vm1771, %v1361, -inf
        %1929 = vmax.xlane.f32.xlu0 %v1928
        %v1930 = vpop.xlane.xlu0 %1929
        %v1931 = vsel %vm1771, %v1497, -inf
        %1932 = vmax.xlane.f32.xlu0 %v1931
        %v1933 = vpop.xlane.xlu0 %1932
        %v1934 = vsel %vm1771, %v1633, -inf
        %1935 = vmax.xlane.f32.xlu0 %v1934
        %v1936 = vpop.xlane.xlu0 %1935
        %v1937 = vsel %vm1771, %v1769, -inf
        %1938 = vmax.xlane.f32.xlu0 %v1937
        %v1939 = vpop.xlane.xlu0 %1938
        %v1940 = vsel %vm1771, %v818, -inf
        %1941 = vmax.xlane.f32.xlu0 %v1940
        %v1942 = vpop.xlane.xlu0 %1941
        %v1943 = vsel %vm1771, %v954, -inf
        %1944 = vmax.xlane.f32.xlu0 %v1943
        %v1945 = vpop.xlane.xlu0 %1944
        %v1946 = vsel %vm1771, %v1090, -inf
        %1947 = vmax.xlane.f32.xlu0 %v1946
        %v1948 = vpop.xlane.xlu0 %1947
        %v1949 = vsel %vm1771, %v1226, -inf
        %1950 = vmax.xlane.f32.xlu0 %v1949
        %v1951 = vpop.xlane.xlu0 %1950
        %v1952 = vsel %vm1771, %v1362, -inf
        %1953 = vmax.xlane.f32.xlu0 %v1952
        %v1954 = vpop.xlane.xlu0 %1953
        %v1955 = vsel %vm1771, %v1498, -inf
        %1956 = vmax.xlane.f32.xlu0 %v1955
        %v1957 = vpop.xlane.xlu0 %1956
        %v1958 = vsel %vm1771, %v1634, -inf
        %1959 = vmax.xlane.f32.xlu0 %v1958
        %v1960 = vpop.xlane.xlu0 %1959
        %v1961 = vsel %vm1771, %v1770, -inf
        %1962 = vmax.xlane.f32.xlu0 %v1961
        %v1963 = vpop.xlane.xlu0 %1962
        %vm1964 = vcmask 31744
        %1965 = vst.msk [vmem:[#allocation2] sm:$0xff] %vm1964, 0.0
        %vm1966 = vcmask 359712
        %1967 = vst.msk [vmem:[#allocation2] sm:$0xff] %vm1966, 0.0
        %vm1968 = vcmask 654944
        %1969 = vst.msk [vmem:[#allocation2] sm:$0xff] %vm1968, 0.0
        %v2002 = vlaneseq
        %v2003 = vand.u32 %v2002, 127
        %v2004 = vadd.s32 %v2003, 4294967292
        %v2005 = vlaneseq
        %v2006 = vshrl.u32 %v2005, 7
        %v2007 = vsub.s32 %v2004, %v2006
        %v2008 = vrot.slane %v1774, %v2007
        %v2009 = vadd.s32 %v2003, 4294967284
        %v2010 = vlaneseq
        %v2011 = vshrl.u32 %v2010, 7
        %v2012 = vsub.s32 %v2009, %v2011
        %v2013 = vrot.slane %v1777, %v2012
        %vm2014 = vcmask 162912
        %v2015 = vsel %vm2014, %v2013, %v2008
        %v2016 = vadd.s32 %v2003, 4294967276
        %v2017 = vlaneseq
        %v2018 = vshrl.u32 %v2017, 7
        %v2019 = vsub.s32 %v2016, %v2018
        %v2020 = vrot.slane %v1780, %v2019
        %vm2021 = vcmask 228512
        %v2022 = vsel %vm2021, %v2020, %v2015
        %v2023 = vadd.s32 %v2003, 4294967268
        %v2024 = vlaneseq
        %v2025 = vshrl.u32 %v2024, 7
        %v2026 = vsub.s32 %v2023, %v2025
        %v2027 = vrot.slane %v1783, %v2026
        %vm2028 = vcmask 294112
        %v2029 = vsel %vm2028, %v2027, %v2022
        %v2030 = vlaneseq
        %v2031 = vshrl.u32 %v2030, 7
        %v2032 = vsub.s32 %v2004, %v2031
        %v2033 = vrot.slane %v1798, %v2032
        %v2034 = vlaneseq
        %v2035 = vshrl.u32 %v2034, 7
        %v2036 = vsub.s32 %v2009, %v2035
        %v2037 = vrot.slane %v1801, %v2036
        %v2038 = vsel %vm2014, %v2037, %v2033
        %v2039 = vlaneseq
        %v2040 = vshrl.u32 %v2039, 7
        %v2041 = vsub.s32 %v2016, %v2040
        %v2042 = vrot.slane %v1804, %v2041
        %v2043 = vsel %vm2021, %v2042, %v2038
        %v2044 = vlaneseq
        %v2045 = vshrl.u32 %v2044, 7
        %v2046 = vsub.s32 %v2023, %v2045
        %v2047 = vrot.slane %v1807, %v2046
        %v2048 = vsel %vm2028, %v2047, %v2043
        %v2049 = vlaneseq
        %v2050 = vshrl.u32 %v2049, 7
        %v2051 = vsub.s32 %v2004, %v2050
        %v2052 = vrot.slane %v1822, %v2051
        %v2053 = vlaneseq
        %v2054 = vshrl.u32 %v2053, 7
        %v2055 = vsub.s32 %v2009, %v2054
        %v2056 = vrot.slane %v1825, %v2055
        %v2057 = vsel %vm2014, %v2056, %v2052
        %v2058 = vlaneseq
        %v2059 = vshrl.u32 %v2058, 7
        %v2060 = vsub.s32 %v2016, %v2059
        %v2061 = vrot.slane %v1828, %v2060
        %v2062 = vsel %vm2021, %v2061, %v2057
        %v2063 = vlaneseq
        %v2064 = vshrl.u32 %v2063, 7
        %v2065 = vsub.s32 %v2023, %v2064
        %v2066 = vrot.slane %v1831, %v2065
        %v2067 = vsel %vm2028, %v2066, %v2062
        %v2068 = vlaneseq
        %v2069 = vshrl.u32 %v2068, 7
        %v2070 = vsub.s32 %v2004, %v2069
        %v2071 = vrot.slane %v1846, %v2070
        %v2072 = vlaneseq
        %v2073 = vshrl.u32 %v2072, 7
        %v2074 = vsub.s32 %v2009, %v2073
        %v2075 = vrot.slane %v1849, %v2074
        %v2076 = vsel %vm2014, %v2075, %v2071
        %v2077 = vlaneseq
        %v2078 = vshrl.u32 %v2077, 7
        %v2079 = vsub.s32 %v2016, %v2078
        %v2080 = vrot.slane %v1852, %v2079
        %v2081 = vsel %vm2021, %v2080, %v2076
        %v2082 = vlaneseq
        %v2083 = vshrl.u32 %v2082, 7
        %v2084 = vsub.s32 %v2023, %v2083
        %v2085 = vrot.slane %v1855, %v2084
        %v2086 = vsel %vm2028, %v2085, %v2081
        %v2087 = vlaneseq
        %v2088 = vshrl.u32 %v2087, 7
        %v2089 = vsub.s32 %v2004, %v2088
        %v2090 = vrot.slane %v1870, %v2089
        %v2091 = vlaneseq
        %v2092 = vshrl.u32 %v2091, 7
        %v2093 = vsub.s32 %v2009, %v2092
        %v2094 = vrot.slane %v1873, %v2093
        %v2095 = vsel %vm2014, %v2094, %v2090
        %v2096 = vlaneseq
        %v2097 = vshrl.u32 %v2096, 7
        %v2098 = vsub.s32 %v2016, %v2097
        %v2099 = vrot.slane %v1876, %v2098
        %v2100 = vsel %vm2021, %v2099, %v2095
        %v2101 = vlaneseq
        %v2102 = vshrl.u32 %v2101, 7
        %v2103 = vsub.s32 %v2023, %v2102
        %v2104 = vrot.slane %v1879, %v2103
        %v2105 = vsel %vm2028, %v2104, %v2100
        %v2106 = vlaneseq
        %v2107 = vshrl.u32 %v2106, 7
        %v2108 = vsub.s32 %v2004, %v2107
        %v2109 = vrot.slane %v1894, %v2108
        %v2110 = vlaneseq
        %v2111 = vshrl.u32 %v2110, 7
        %v2112 = vsub.s32 %v2009, %v2111
        %v2113 = vrot.slane %v1897, %v2112
        %v2114 = vsel %vm2014, %v2113, %v2109
        %v2115 = vlaneseq
        %v2116 = vshrl.u32 %v2115, 7
        %v2117 = vsub.s32 %v2016, %v2116
        %v2118 = vrot.slane %v1900, %v2117
        %v2119 = vsel %vm2021, %v2118, %v2114
        %v2120 = vlaneseq
        %v2121 = vshrl.u32 %v2120, 7
        %v2122 = vsub.s32 %v2023, %v2121
        %v2123 = vrot.slane %v1903, %v2122
        %v2124 = vsel %vm2028, %v2123, %v2119
        %v2125 = vlaneseq
        %v2126 = vshrl.u32 %v2125, 7
        %v2127 = vsub.s32 %v2004, %v2126
        %v2128 = vrot.slane %v1918, %v2127
        %v2129 = vlaneseq
        %v2130 = vshrl.u32 %v2129, 7
        %v2131 = vsub.s32 %v2009, %v2130
        %v2132 = vrot.slane %v1921, %v2131
        %v2133 = vsel %vm2014, %v2132, %v2128
        %v2134 = vlaneseq
        %v2135 = vshrl.u32 %v2134, 7
        %v2136 = vsub.s32 %v2016, %v2135
        %v2137 = vrot.slane %v1924, %v2136
        %v2138 = vsel %vm2021, %v2137, %v2133
        %v2139 = vlaneseq
        %v2140 = vshrl.u32 %v2139, 7
        %v2141 = vsub.s32 %v2023, %v2140
        %v2142 = vrot.slane %v1927, %v2141
        %v2143 = vsel %vm2028, %v2142, %v2138
        %v2144 = vlaneseq
        %v2145 = vshrl.u32 %v2144, 7
        %v2146 = vsub.s32 %v2004, %v2145
        %v2147 = vrot.slane %v1942, %v2146
        %v2148 = vlaneseq
        %v2149 = vshrl.u32 %v2148, 7
        %v2150 = vsub.s32 %v2009, %v2149
        %v2151 = vrot.slane %v1945, %v2150
        %v2152 = vsel %vm2014, %v2151, %v2147
        %v2153 = vlaneseq
        %v2154 = vshrl.u32 %v2153, 7
        %v2155 = vsub.s32 %v2016, %v2154
        %v2156 = vrot.slane %v1948, %v2155
        %v2157 = vsel %vm2021, %v2156, %v2152
        %v2158 = vlaneseq
        %v2159 = vshrl.u32 %v2158, 7
        %v2160 = vsub.s32 %v2023, %v2159
        %v2161 = vrot.slane %v1951, %v2160
        %v2162 = vsel %vm2028, %v2161, %v2157
        %vm2163 = vcmask 1041409
        %v2164 = vsel %vm2163, %v2048, %v2029
        %vm2165 = vcmask 1042434
        %v2166 = vsel %vm2165, %v2067, %v2164
        %vm2167 = vcmask 1043459
        %v2168 = vsel %vm2167, %v2086, %v2166
        %vm2169 = vcmask 1044484
        %v2170 = vsel %vm2169, %v2105, %v2168
        %vm2171 = vcmask 1045509
        %v2172 = vsel %vm2171, %v2124, %v2170
        %vm2173 = vcmask 1046534
        %v2174 = vsel %vm2173, %v2143, %v2172
        %vm2175 = vcmask 1047559
        %v2176 = vsel %vm2175, %v2162, %v2174
        %vm2178 = vcmask 293920
        %2179 = vst.msk [vmem:[#allocation2] sm:$0xff] %vm2178, %v2176
        %v2212 = vadd.s32 %v2003, 4294967252
        %v2213 = vlaneseq
        %v2214 = vshrl.u32 %v2213, 7
        %v2215 = vsub.s32 %v2212, %v2214
        %v2216 = vrot.slane %v1786, %v2215
        %v2217 = vadd.s32 %v2003, 4294967244
        %v2218 = vlaneseq
        %v2219 = vshrl.u32 %v2218, 7
        %v2220 = vsub.s32 %v2217, %v2219
        %v2221 = vrot.slane %v1789, %v2220
        %vm2222 = vcmask 490912
        %v2223 = vsel %vm2222, %v2221, %v2216
        %v2224 = vadd.s32 %v2003, 4294967236
        %v2225 = vlaneseq
        %v2226 = vshrl.u32 %v2225, 7
        %v2227 = vsub.s32 %v2224, %v2226
        %v2228 = vrot.slane %v1792, %v2227
        %vm2229 = vcmask 556512
        %v2230 = vsel %vm2229, %v2228, %v2223
        %v2231 = vadd.s32 %v2003, 4294967228
        %v2232 = vlaneseq
        %v2233 = vshrl.u32 %v2232, 7
        %v2234 = vsub.s32 %v2231, %v2233
        %v2235 = vrot.slane %v1795, %v2234
        %vm2236 = vcmask 622112
        %v2237 = vsel %vm2236, %v2235, %v2230
        %v2238 = vlaneseq
        %v2239 = vshrl.u32 %v2238, 7
        %v2240 = vsub.s32 %v2212, %v2239
        %v2241 = vrot.slane %v1810, %v2240
        %v2242 = vlaneseq
        %v2243 = vshrl.u32 %v2242, 7
        %v2244 = vsub.s32 %v2217, %v2243
        %v2245 = vrot.slane %v1813, %v2244
        %v2246 = vsel %vm2222, %v2245, %v2241
        %v2247 = vlaneseq
        %v2248 = vshrl.u32 %v2247, 7
        %v2249 = vsub.s32 %v2224, %v2248
        %v2250 = vrot.slane %v1816, %v2249
        %v2251 = vsel %vm2229, %v2250, %v2246
        %v2252 = vlaneseq
        %v2253 = vshrl.u32 %v2252, 7
        %v2254 = vsub.s32 %v2231, %v2253
        %v2255 = vrot.slane %v1819, %v2254
        %v2256 = vsel %vm2236, %v2255, %v2251
        %v2257 = vlaneseq
        %v2258 = vshrl.u32 %v2257, 7
        %v2259 = vsub.s32 %v2212, %v2258
        %v2260 = vrot.slane %v1834, %v2259
        %v2261 = vlaneseq
        %v2262 = vshrl.u32 %v2261, 7
        %v2263 = vsub.s32 %v2217, %v2262
        %v2264 = vrot.slane %v1837, %v2263
        %v2265 = vsel %vm2222, %v2264, %v2260
        %v2266 = vlaneseq
        %v2267 = vshrl.u32 %v2266, 7
        %v2268 = vsub.s32 %v2224, %v2267
        %v2269 = vrot.slane %v1840, %v2268
        %v2270 = vsel %vm2229, %v2269, %v2265
        %v2271 = vlaneseq
        %v2272 = vshrl.u32 %v2271, 7
        %v2273 = vsub.s32 %v2231, %v2272
        %v2274 = vrot.slane %v1843, %v2273
        %v2275 = vsel %vm2236, %v2274, %v2270
        %v2276 = vlaneseq
        %v2277 = vshrl.u32 %v2276, 7
        %v2278 = vsub.s32 %v2212, %v2277
        %v2279 = vrot.slane %v1858, %v2278
        %v2280 = vlaneseq
        %v2281 = vshrl.u32 %v2280, 7
        %v2282 = vsub.s32 %v2217, %v2281
        %v2283 = vrot.slane %v1861, %v2282
        %v2284 = vsel %vm2222, %v2283, %v2279
        %v2285 = vlaneseq
        %v2286 = vshrl.u32 %v2285, 7
        %v2287 = vsub.s32 %v2224, %v2286
        %v2288 = vrot.slane %v1864, %v2287
        %v2289 = vsel %vm2229, %v2288, %v2284
        %v2290 = vlaneseq
        %v2291 = vshrl.u32 %v2290, 7
        %v2292 = vsub.s32 %v2231, %v2291
        %v2293 = vrot.slane %v1867, %v2292
        %v2294 = vsel %vm2236, %v2293, %v2289
        %v2295 = vlaneseq
        %v2296 = vshrl.u32 %v2295, 7
        %v2297 = vsub.s32 %v2212, %v2296
        %v2298 = vrot.slane %v1882, %v2297
        %v2299 = vlaneseq
        %v2300 = vshrl.u32 %v2299, 7
        %v2301 = vsub.s32 %v2217, %v2300
        %v2302 = vrot.slane %v1885, %v2301
        %v2303 = vsel %vm2222, %v2302, %v2298
        %v2304 = vlaneseq
        %v2305 = vshrl.u32 %v2304, 7
        %v2306 = vsub.s32 %v2224, %v2305
        %v2307 = vrot.slane %v1888, %v2306
        %v2308 = vsel %vm2229, %v2307, %v2303
        %v2309 = vlaneseq
        %v2310 = vshrl.u32 %v2309, 7
        %v2311 = vsub.s32 %v2231, %v2310
        %v2312 = vrot.slane %v1891, %v2311
        %v2313 = vsel %vm2236, %v2312, %v2308
        %v2314 = vlaneseq
        %v2315 = vshrl.u32 %v2314, 7
        %v2316 = vsub.s32 %v2212, %v2315
        %v2317 = vrot.slane %v1906, %v2316
        %v2318 = vlaneseq
        %v2319 = vshrl.u32 %v2318, 7
        %v2320 = vsub.s32 %v2217, %v2319
        %v2321 = vrot.slane %v1909, %v2320
        %v2322 = vsel %vm2222, %v2321, %v2317
        %v2323 = vlaneseq
        %v2324 = vshrl.u32 %v2323, 7
        %v2325 = vsub.s32 %v2224, %v2324
        %v2326 = vrot.slane %v1912, %v2325
        %v2327 = vsel %vm2229, %v2326, %v2322
        %v2328 = vlaneseq
        %v2329 = vshrl.u32 %v2328, 7
        %v2330 = vsub.s32 %v2231, %v2329
        %v2331 = vrot.slane %v1915, %v2330
        %v2332 = vsel %vm2236, %v2331, %v2327
        %v2333 = vlaneseq
        %v2334 = vshrl.u32 %v2333, 7
        %v2335 = vsub.s32 %v2212, %v2334
        %v2336 = vrot.slane %v1930, %v2335
        %v2337 = vlaneseq
        %v2338 = vshrl.u32 %v2337, 7
        %v2339 = vsub.s32 %v2217, %v2338
        %v2340 = vrot.slane %v1933, %v2339
        %v2341 = vsel %vm2222, %v2340, %v2336
        %v2342 = vlaneseq
        %v2343 = vshrl.u32 %v2342, 7
        %v2344 = vsub.s32 %v2224, %v2343
        %v2345 = vrot.slane %v1936, %v2344
        %v2346 = vsel %vm2229, %v2345, %v2341
        %v2347 = vlaneseq
        %v2348 = vshrl.u32 %v2347, 7
        %v2349 = vsub.s32 %v2231, %v2348
        %v2350 = vrot.slane %v1939, %v2349
        %v2351 = vsel %vm2236, %v2350, %v2346
        %v2352 = vlaneseq
        %v2353 = vshrl.u32 %v2352, 7
        %v2354 = vsub.s32 %v2212, %v2353
        %v2355 = vrot.slane %v1954, %v2354
        %v2356 = vlaneseq
        %v2357 = vshrl.u32 %v2356, 7
        %v2358 = vsub.s32 %v2217, %v2357
        %v2359 = vrot.slane %v1957, %v2358
        %v2360 = vsel %vm2222, %v2359, %v2355
        %v2361 = vlaneseq
        %v2362 = vshrl.u32 %v2361, 7
        %v2363 = vsub.s32 %v2224, %v2362
        %v2364 = vrot.slane %v1960, %v2363
        %v2365 = vsel %vm2229, %v2364, %v2360
        %v2366 = vlaneseq
        %v2367 = vshrl.u32 %v2366, 7
        %v2368 = vsub.s32 %v2231, %v2367
        %v2369 = vrot.slane %v1963, %v2368
        %v2370 = vsel %vm2236, %v2369, %v2365
        %v2371 = vsel %vm2163, %v2256, %v2237
        %v2372 = vsel %vm2165, %v2275, %v2371
        %v2373 = vsel %vm2167, %v2294, %v2372
        %v2374 = vsel %vm2169, %v2313, %v2373
        %v2375 = vsel %vm2171, %v2332, %v2374
        %v2376 = vsel %vm2173, %v2351, %v2375
        %v2377 = vsel %vm2175, %v2370, %v2376
        %vm2379 = vcmask 621920
        %2380 = vst.msk [vmem:[#allocation2] sm:$0xff] %vm2379, %v2377
        %v2381 = vld [vmem:[#allocation2] sm:$0xff]
        %vm2382 = vcmask 261120
        %2383 = vst.msk [vmem:[#allocation3] sm:$0xff] %vm2382, %v2381
        %v2384 = vld [vmem:[#allocation2] sm:$0xff]
        %2386 = vrot.lane.b32.xlu0 %v2384, 120
        %v2387 = vpop.permute.xlu0 %2386
        %vm2389 = vcmask 523520
        %2390 = vst.msk [vmem:[#allocation3] sm:$0xff] %vm2389, %v2387
        %v2391 = vld [vmem:[#allocation2] sm:$0xff]
        %2393 = vrot.lane.b32.xlu0 %v2391, 126
        %v2394 = vpop.permute.xlu0 %2393
        %2396 = vst.msk [vmem:[#allocation3 + $0x8] sm:$0xff] %vm2382, %v2394
        %v2397 = vld [vmem:[#allocation2] sm:$0xff]
        %2399 = vrot.lane.b32.xlu0 %v2397, 118
        %v2400 = vpop.permute.xlu0 %2399
        %2402 = vst.msk [vmem:[#allocation3 + $0x8] sm:$0xff] %vm2389, %v2400
        %v2403 = vld [vmem:[#allocation2] sm:$0xff]
        %2405 = vrot.lane.b32.xlu0 %v2403, 125
        %v2406 = vpop.permute.xlu0 %2405
        %2408 = vst.msk [vmem:[#allocation3 + $0x10] sm:$0xff] %vm2382, %v2406
        %v2409 = vld [vmem:[#allocation2] sm:$0xff]
        %2411 = vrot.lane.b32.xlu0 %v2409, 117
        %v2412 = vpop.permute.xlu0 %2411
        %2414 = vst.msk [vmem:[#allocation3 + $0x10] sm:$0xff] %vm2389, %v2412
        %v2415 = vld [vmem:[#allocation2] sm:$0xff]
        %2417 = vrot.lane.b32.xlu0 %v2415, 124
        %v2418 = vpop.permute.xlu0 %2417
        %2420 = vst.msk [vmem:[#allocation3 + $0x18] sm:$0xff] %vm2382, %v2418
        %v2421 = vld [vmem:[#allocation2] sm:$0xff]
        %2423 = vrot.lane.b32.xlu0 %v2421, 116
        %v2424 = vpop.permute.xlu0 %2423
        %2426 = vst.msk [vmem:[#allocation3 + $0x18] sm:$0xff] %vm2389, %v2424
        %v2427 = vld [vmem:[#allocation2] sm:$0xff]
        %2429 = vrot.lane.b32.xlu0 %v2427, 123
        %v2430 = vpop.permute.xlu0 %2429
        %2432 = vst.msk [vmem:[#allocation3 + $0x20] sm:$0xff] %vm2382, %v2430
        %v2433 = vld [vmem:[#allocation2] sm:$0xff]
        %2435 = vrot.lane.b32.xlu0 %v2433, 115
        %v2436 = vpop.permute.xlu0 %2435
        %2438 = vst.msk [vmem:[#allocation3 + $0x20] sm:$0xff] %vm2389, %v2436
        %v2439 = vld [vmem:[#allocation2] sm:$0xff]
        %2441 = vrot.lane.b32.xlu0 %v2439, 122
        %v2442 = vpop.permute.xlu0 %2441
        %2444 = vst.msk [vmem:[#allocation3 + $0x28] sm:$0xff] %vm2382, %v2442
        %v2445 = vld [vmem:[#allocation2] sm:$0xff]
        %2447 = vrot.lane.b32.xlu0 %v2445, 114
        %v2448 = vpop.permute.xlu0 %2447
        %2450 = vst.msk [vmem:[#allocation3 + $0x28] sm:$0xff] %vm2389, %v2448
        %v2451 = vld [vmem:[#allocation2] sm:$0xff]
        %2453 = vrot.lane.b32.xlu0 %v2451, 120
        %v2454 = vpop.permute.xlu0 %2453
        %2456 = vst.msk [vmem:[#allocation3 + $0x30] sm:$0xff] %vm2382, %v2454
        %v2457 = vld [vmem:[#allocation2] sm:$0xff]
        %2459 = vrot.lane.b32.xlu0 %v2457, 112
        %v2460 = vpop.permute.xlu0 %2459
        %2462 = vst.msk [vmem:[#allocation3 + $0x30] sm:$0xff] %vm2389, %v2460
        %s2463 = scalar_lea.vmem %s176, 16 [#allocation4]
        %v2464 = vld [vmem:[%s2463] sm:$0xff]
        %v2465 = vld [vmem:[%s2463 + $0x8] sm:$0xff]
        %v2466 = vld [vmem:[%s208] sm:$0xff]
        %v2467 = vld [vmem:[%s208 + $0x8] sm:$0xff]
        %v2468 = vld [vmem:[#allocation3] sm:$0xff]
        %v2469 = vld [vmem:[#allocation3 + $0x8] sm:$0xff]
        %v2470 = vld [vmem:[#allocation3 + $0x10] sm:$0xff]
        %v2471 = vld [vmem:[#allocation3 + $0x18] sm:$0xff]
        %v2472 = vld [vmem:[#allocation3 + $0x20] sm:$0xff]
        %v2473 = vld [vmem:[#allocation3 + $0x28] sm:$0xff]
        %v2474 = vld [vmem:[#allocation3 + $0x30] sm:$0xff]
        %2476 = vset.pattern.permute.xlu0 3
        %2477 = vperm.xlu0 %2476, %v2466
        %v2478 = vpop.permute.xlu0 %2477
        %2481 = vset.pattern.permute.xlu0 3
        %2482 = vperm.xlu0 %2481, %v2467
        %v2483 = vpop.permute.xlu0 %2482
        %vm2485 = vcmask 457728
        %v2487 = vsel %vm2485, %v2464, 0
        %v2490 = vsel %vm2485, %v2465, 0
        %2492 = vmatprep.subr.mxu0 0.0
        %2493 = vmatpush1.msra.mxu0 %v2468
        %2494 = vmatprep.subr.mxu0 0.0
        %2495 = vmatpush1.msra.mxu0 %v2469
        %2496 = vmatprep.subr.mxu0 0.0
        %2497 = vmatpush1.msra.mxu0 %v2470
        %2498 = vmatprep.subr.mxu0 0.0
        %2499 = vmatpush1.msra.mxu0 %v2471
        %2500 = vmatprep.subr.mxu0 0.0
        %2501 = vmatpush1.msra.mxu0 %v2472
        %2502 = vmatprep.subr.mxu0 0.0
        %2503 = vmatpush1.msra.mxu0 %v2473
        %2504 = vmatprep.subr.mxu0 0.0
        %2505 = vmatpush1.msra.mxu0 %v2474
        %2506 = vmatprep.subr.mxu0 0.0
        %2507 = vmatpush1.msra.mxu0 0.0
        %2508 = vmatprep.subr.mxu0 0.0
        %2509 = vmatpush1.msra.mxu0 0.0
        %2510 = vmatprep.subr.mxu0 0.0
        %2511 = vmatpush1.msra.mxu0 0.0
        %2512 = vmatprep.subr.mxu0 0.0
        %2513 = vmatpush1.msra.mxu0 0.0
        %2514 = vmatprep.subr.mxu0 0.0
        %2515 = vmatpush1.msra.mxu0 0.0
        %2516 = vmatprep.subr.mxu0 0.0
        %2517 = vmatpush1.msra.mxu0 0.0
        %2518 = vmatprep.subr.mxu0 0.0
        %2519 = vmatpush1.msra.mxu0 0.0
        %2520 = vmatprep.subr.mxu0 0.0
        %2521 = vmatpush1.msra.mxu0 0.0
        %2522 = vmatprep.subr.mxu0 0.0
        %2523 = vmatpush1.msra.mxu0 0.0
        %2524 = vmatprep.subr.mxu0 0.0
        %2525 = vmatpush1.msra.mxu0 0.0
        %2526 = vmatprep.subr.mxu0 0.0
        %2527 = vmatpush1.msra.mxu0 0.0
        %2528 = vmatprep.subr.mxu0 0.0
        %2529 = vmatpush1.msra.mxu0 0.0
        %2530 = vmatprep.subr.mxu0 0.0
        %2531 = vmatpush1.msra.mxu0 0.0
        %2532 = vmatprep.subr.mxu0 0.0
        %2533 = vmatpush1.msra.mxu0 0.0
        %2534 = vmatprep.subr.mxu0 0.0
        %2535 = vmatpush1.msra.mxu0 0.0
        %2536 = vmatprep.subr.mxu0 0.0
        %2537 = vmatpush1.msra.mxu0 0.0
        %2538 = vmatprep.subr.mxu0 0.0
        %2539 = vmatpush1.msra.mxu0 0.0
        %2540 = vmatprep.subr.mxu0 0.0
        %2541 = vmatpush1.msra.mxu0 0.0
        %2542 = vmatprep.subr.mxu0 0.0
        %2543 = vmatpush1.msra.mxu0 0.0
        %2544 = vmatprep.subr.mxu0 0.0
        %2545 = vmatpush1.msra.mxu0 0.0
        %2546 = vmatprep.subr.mxu0 0.0
        %2547 = vmatpush1.msra.mxu0 0.0
        %2548 = vmatprep.subr.mxu0 0.0
        %2549 = vmatpush1.msra.mxu0 0.0
        %2550 = vmatprep.subr.mxu0 0.0
        %2551 = vmatpush1.msra.mxu0 0.0
        %2552 = vmatprep.subr.mxu0 0.0
        %2553 = vmatpush1.msra.mxu0 0.0
        %2554 = vmatprep.subr.mxu0 0.0
        %2555 = vmatpush1.msra.mxu0 0.0
        %2556 = vmatprep.mubr.f32.mxu0 0.0
        %2557 = vmatmul.mubr.f32.gmra.mrb[0].mxu0 %v2487
        %v2558 = vpop.f32.mrb[0].mxu0
        %v2559 = vadd.f32 %v2478, %v2558
        %v2560 = vpop.f32.mrb[0].mxu0
        %2561 = vmatprep.mubr.f32.mxu0 0.0
        %2562 = vmatmul.mubr.f32.gmra.mrb[0].mxu0 %v2490
        %v2563 = vpop.f32.mrb[0].mxu0
        %v2564 = vadd.f32 %v2483, %v2563
        %v2565 = vpop.f32.mrb[0].mxu0
        %2566 = vdwg.mxu0
        %v2567 = vmax.f32 %v2559, 0.0
        %v2568 = vmax.f32 %v2564, 0.0
        %vm2569 = vcmask 64512
        %2570 = vst.msk [vmem:[#allocation2] sm:$0xff] %vm2569, 0.0
        %2571 = vst.msk [vmem:[#allocation2 + $0x10] sm:$0xff] %vm2569, 0.0
        %vm2572 = vcmask 458048
        %2573 = vst.msk [vmem:[#allocation2] sm:$0xff] %vm2572, 0.0
        %2574 = vst.msk [vmem:[#allocation2 + $0x10] sm:$0xff] %vm2572, 0.0
        %vm2575 = vcmask 786112
        %2576 = vst.msk [vmem:[#allocation2] sm:$0xff] %vm2575, 0.0
        %2577 = vst.msk [vmem:[#allocation2 + $0x10] sm:$0xff] %vm2575, 0.0
        %2580 = vrot.lane.b32.xlu0 %v2567, 8
        %v2581 = vpop.permute.xlu0 %2580
        %2582 = vrot.lane.b32.xlu0 %v2568, 8
        %v2583 = vpop.permute.xlu0 %2582
        %vm2586 = vcmask 326720
        %2587 = vst.msk [vmem:[#allocation2] sm:$0xff] %vm2586, %v2581
        %2588 = vst.msk [vmem:[#allocation2 + $0x10] sm:$0xff] %vm2586, %v2583
        %2589 = vrot.lane.b32.xlu0 %v2567, 24
        %v2590 = vpop.permute.xlu0 %2589
        %2591 = vrot.lane.b32.xlu0 %v2568, 24
        %v2592 = vpop.permute.xlu0 %2591
        %vm2595 = vcmask 720320
        %2596 = vst.msk [vmem:[#allocation2] sm:$0xff] %vm2595, %v2590
        %2597 = vst.msk [vmem:[#allocation2 + $0x10] sm:$0xff] %vm2595, %v2592
        %v2598 = vld [vmem:[#allocation2] sm:$0xff]
        %v2599 = vld [vmem:[#allocation2 + $0x10] sm:$0xff]
        %2600 = vst.msk [vmem:[#allocation3] sm:$0xff] %vm2382, %v2598
        %2601 = vst.msk [vmem:[#allocation3 + $0x8] sm:$0xff] %vm2382, %v2599
        %v2602 = vld [vmem:[#allocation2] sm:$0xff]
        %v2603 = vld [vmem:[#allocation2 + $0x10] sm:$0xff]
        %2606 = vrot.lane.b32.xlu0 %v2602, 112
        %v2607 = vpop.permute.xlu0 %2606
        %2608 = vrot.lane.b32.xlu0 %v2603, 112
        %v2609 = vpop.permute.xlu0 %2608
        %2612 = vst.msk [vmem:[#allocation3] sm:$0xff] %vm2389, %v2607
        %2613 = vst.msk [vmem:[#allocation3 + $0x8] sm:$0xff] %vm2389, %v2609
        %v2614 = vld [vmem:[#allocation2] sm:$0xff]
        %v2615 = vld [vmem:[#allocation2 + $0x10] sm:$0xff]
        %2618 = vrot.lane.b32.xlu0 %v2614, 124
        %v2619 = vpop.permute.xlu0 %2618
        %2620 = vrot.lane.b32.xlu0 %v2615, 124
        %v2621 = vpop.permute.xlu0 %2620
        %2624 = vst.msk [vmem:[#allocation3 + $0x10] sm:$0xff] %vm2382, %v2619
        %2625 = vst.msk [vmem:[#allocation3 + $0x18] sm:$0xff] %vm2382, %v2621
        %v2626 = vld [vmem:[#allocation2] sm:$0xff]
        %v2627 = vld [vmem:[#allocation2 + $0x10] sm:$0xff]
        %2630 = vrot.lane.b32.xlu0 %v2626, 108
        %v2631 = vpop.permute.xlu0 %2630
        %2632 = vrot.lane.b32.xlu0 %v2627, 108
        %v2633 = vpop.permute.xlu0 %2632
        %2636 = vst.msk [vmem:[#allocation3 + $0x10] sm:$0xff] %vm2389, %v2631
        %2637 = vst.msk [vmem:[#allocation3 + $0x18] sm:$0xff] %vm2389, %v2633
        %v2638 = vld [vmem:[#allocation2] sm:$0xff]
        %v2639 = vld [vmem:[#allocation2 + $0x10] sm:$0xff]
        %2642 = vrot.lane.b32.xlu0 %v2638, 121
        %v2643 = vpop.permute.xlu0 %2642
        %2644 = vrot.lane.b32.xlu0 %v2639, 121
        %v2645 = vpop.permute.xlu0 %2644
        %2648 = vst.msk [vmem:[#allocation3 + $0x20] sm:$0xff] %vm2382, %v2643
        %2649 = vst.msk [vmem:[#allocation3 + $0x28] sm:$0xff] %vm2382, %v2645
        %v2650 = vld [vmem:[#allocation2] sm:$0xff]
        %v2651 = vld [vmem:[#allocation2 + $0x10] sm:$0xff]
        %2654 = vrot.lane.b32.xlu0 %v2650, 105
        %v2655 = vpop.permute.xlu0 %2654
        %2656 = vrot.lane.b32.xlu0 %v2651, 105
        %v2657 = vpop.permute.xlu0 %2656
        %2660 = vst.msk [vmem:[#allocation3 + $0x20] sm:$0xff] %vm2389, %v2655
        %2661 = vst.msk [vmem:[#allocation3 + $0x28] sm:$0xff] %vm2389, %v2657
        %v2662 = vld [vmem:[#allocation2] sm:$0xff]
        %v2663 = vld [vmem:[#allocation2 + $0x10] sm:$0xff]
        %2666 = vrot.lane.b32.xlu0 %v2662, 120
        %v2667 = vpop.permute.xlu0 %2666
        %2668 = vrot.lane.b32.xlu0 %v2663, 120
        %v2669 = vpop.permute.xlu0 %2668
        %2672 = vst.msk [vmem:[#allocation3 + $0x30] sm:$0xff] %vm2382, %v2667
        %2673 = vst.msk [vmem:[#allocation3 + $0x38] sm:$0xff] %vm2382, %v2669
        %v2674 = vld [vmem:[#allocation2] sm:$0xff]
        %v2675 = vld [vmem:[#allocation2 + $0x10] sm:$0xff]
        %2678 = vrot.lane.b32.xlu0 %v2674, 104
        %v2679 = vpop.permute.xlu0 %2678
        %2680 = vrot.lane.b32.xlu0 %v2675, 104
        %v2681 = vpop.permute.xlu0 %2680
        %2684 = vst.msk [vmem:[#allocation3 + $0x30] sm:$0xff] %vm2389, %v2679
        %2685 = vst.msk [vmem:[#allocation3 + $0x38] sm:$0xff] %vm2389, %v2681
        %v2686 = vld [vmem:[#allocation2] sm:$0xff]
        %v2687 = vld [vmem:[#allocation2 + $0x10] sm:$0xff]
        %2690 = vrot.lane.b32.xlu0 %v2686, 119
        %v2691 = vpop.permute.xlu0 %2690
        %2692 = vrot.lane.b32.xlu0 %v2687, 119
        %v2693 = vpop.permute.xlu0 %2692
        %2696 = vst.msk [vmem:[#allocation3 + $0x40] sm:$0xff] %vm2382, %v2691
        %2697 = vst.msk [vmem:[#allocation3 + $0x48] sm:$0xff] %vm2382, %v2693
        %v2698 = vld [vmem:[#allocation2] sm:$0xff]
        %v2699 = vld [vmem:[#allocation2 + $0x10] sm:$0xff]
        %2702 = vrot.lane.b32.xlu0 %v2698, 103
        %v2703 = vpop.permute.xlu0 %2702
        %2704 = vrot.lane.b32.xlu0 %v2699, 103
        %v2705 = vpop.permute.xlu0 %2704
        %2708 = vst.msk [vmem:[#allocation3 + $0x40] sm:$0xff] %vm2389, %v2703
        %2709 = vst.msk [vmem:[#allocation3 + $0x48] sm:$0xff] %vm2389, %v2705
        %v2710 = vld [vmem:[#allocation2] sm:$0xff]
        %v2711 = vld [vmem:[#allocation2 + $0x10] sm:$0xff]
        %2714 = vrot.lane.b32.xlu0 %v2710, 116
        %v2715 = vpop.permute.xlu0 %2714
        %2716 = vrot.lane.b32.xlu0 %v2711, 116
        %v2717 = vpop.permute.xlu0 %2716
        %2720 = vst.msk [vmem:[#allocation3 + $0x50] sm:$0xff] %vm2382, %v2715
        %2721 = vst.msk [vmem:[#allocation3 + $0x58] sm:$0xff] %vm2382, %v2717
        %v2722 = vld [vmem:[#allocation2] sm:$0xff]
        %v2723 = vld [vmem:[#allocation2 + $0x10] sm:$0xff]
        %2726 = vrot.lane.b32.xlu0 %v2722, 100
        %v2727 = vpop.permute.xlu0 %2726
        %2728 = vrot.lane.b32.xlu0 %v2723, 100
        %v2729 = vpop.permute.xlu0 %2728
        %2732 = vst.msk [vmem:[#allocation3 + $0x50] sm:$0xff] %vm2389, %v2727
        %2733 = vst.msk [vmem:[#allocation3 + $0x58] sm:$0xff] %vm2389, %v2729
        %v2734 = vld [vmem:[#allocation2] sm:$0xff]
        %v2735 = vld [vmem:[#allocation2 + $0x10] sm:$0xff]
        %2738 = vrot.lane.b32.xlu0 %v2734, 112
        %v2739 = vpop.permute.xlu0 %2738
        %2740 = vrot.lane.b32.xlu0 %v2735, 112
        %v2741 = vpop.permute.xlu0 %2740
        %2744 = vst.msk [vmem:[#allocation3 + $0x60] sm:$0xff] %vm2382, %v2739
        %2745 = vst.msk [vmem:[#allocation3 + $0x68] sm:$0xff] %vm2382, %v2741
        %v2746 = vld [vmem:[#allocation2] sm:$0xff]
        %v2747 = vld [vmem:[#allocation2 + $0x10] sm:$0xff]
        %2750 = vrot.lane.b32.xlu0 %v2746, 96
        %v2751 = vpop.permute.xlu0 %2750
        %2752 = vrot.lane.b32.xlu0 %v2747, 96
        %v2753 = vpop.permute.xlu0 %2752
        %2756 = vst.msk [vmem:[#allocation3 + $0x60] sm:$0xff] %vm2389, %v2751
        %2757 = vst.msk [vmem:[#allocation3 + $0x68] sm:$0xff] %vm2389, %v2753
        %s2758 = scalar_lea.vmem %s176, 32 [#allocation4]
        %v2759 = vld [vmem:[%s2758] sm:$0xff]
        %v2760 = vld [vmem:[%s2758 + $0x8] sm:$0xff]
        %v2761 = vld [vmem:[%s208] sm:$0xff]
        %v2762 = vld [vmem:[%s208 + $0x8] sm:$0xff]
        %v2763 = vld [vmem:[#allocation3] sm:$0xff]
        %v2764 = vld [vmem:[#allocation3 + $0x8] sm:$0xff]
        %v2765 = vld [vmem:[#allocation3 + $0x10] sm:$0xff]
        %v2766 = vld [vmem:[#allocation3 + $0x18] sm:$0xff]
        %v2767 = vld [vmem:[#allocation3 + $0x20] sm:$0xff]
        %v2768 = vld [vmem:[#allocation3 + $0x28] sm:$0xff]
        %v2769 = vld [vmem:[#allocation3 + $0x30] sm:$0xff]
        %v2770 = vld [vmem:[#allocation3 + $0x38] sm:$0xff]
        %v2771 = vld [vmem:[#allocation3 + $0x40] sm:$0xff]
        %v2772 = vld [vmem:[#allocation3 + $0x48] sm:$0xff]
        %v2773 = vld [vmem:[#allocation3 + $0x50] sm:$0xff]
        %v2774 = vld [vmem:[#allocation3 + $0x58] sm:$0xff]
        %v2775 = vld [vmem:[#allocation3 + $0x60] sm:$0xff]
        %v2776 = vld [vmem:[#allocation3 + $0x68] sm:$0xff]
        %2778 = vset.pattern.permute.xlu0 4
        %2779 = vperm.xlu0 %2778, %v2761
        %v2780 = vpop.permute.xlu0 %2779
        %2783 = vset.pattern.permute.xlu0 4
        %2784 = vperm.xlu0 %2783, %v2762
        %v2785 = vpop.permute.xlu0 %2784
        %v2788 = vsel %vm243, %v2759, 0
        %v2791 = vsel %vm243, %v2760, 0
        %2793 = vmatprep.subr.mxu0 0.0
        %2794 = vmatpush1.msra.mxu0 %v2763
        %2795 = vmatprep.subr.mxu0 0.0
        %2796 = vmatpush1.msra.mxu0 %v2764
        %2797 = vmatprep.subr.mxu0 0.0
        %2798 = vmatpush1.msra.mxu0 %v2765
        %2799 = vmatprep.subr.mxu0 0.0
        %2800 = vmatpush1.msra.mxu0 %v2766
        %2801 = vmatprep.subr.mxu0 0.0
        %2802 = vmatpush1.msra.mxu0 %v2767
        %2803 = vmatprep.subr.mxu0 0.0
        %2804 = vmatpush1.msra.mxu0 %v2768
        %2805 = vmatprep.subr.mxu0 0.0
        %2806 = vmatpush1.msra.mxu0 %v2769
        %2807 = vmatprep.subr.mxu0 0.0
        %2808 = vmatpush1.msra.mxu0 %v2770
        %2809 = vmatprep.subr.mxu0 0.0
        %2810 = vmatpush1.msra.mxu0 %v2771
        %2811 = vmatprep.subr.mxu0 0.0
        %2812 = vmatpush1.msra.mxu0 %v2772
        %2813 = vmatprep.subr.mxu0 0.0
        %2814 = vmatpush1.msra.mxu0 %v2773
        %2815 = vmatprep.subr.mxu0 0.0
        %2816 = vmatpush1.msra.mxu0 %v2774
        %2817 = vmatprep.subr.mxu0 0.0
        %2818 = vmatpush1.msra.mxu0 %v2775
        %2819 = vmatprep.subr.mxu0 0.0
        %2820 = vmatpush1.msra.mxu0 %v2776
        %2821 = vmatprep.subr.mxu0 0.0
        %2822 = vmatpush1.msra.mxu0 0.0
        %2823 = vmatprep.subr.mxu0 0.0
        %2824 = vmatpush1.msra.mxu0 0.0
        %2825 = vmatprep.subr.mxu0 0.0
        %2826 = vmatpush1.msra.mxu0 0.0
        %2827 = vmatprep.subr.mxu0 0.0
        %2828 = vmatpush1.msra.mxu0 0.0
        %2829 = vmatprep.subr.mxu0 0.0
        %2830 = vmatpush1.msra.mxu0 0.0
        %2831 = vmatprep.subr.mxu0 0.0
        %2832 = vmatpush1.msra.mxu0 0.0
        %2833 = vmatprep.subr.mxu0 0.0
        %2834 = vmatpush1.msra.mxu0 0.0
        %2835 = vmatprep.subr.mxu0 0.0
        %2836 = vmatpush1.msra.mxu0 0.0
        %2837 = vmatprep.subr.mxu0 0.0
        %2838 = vmatpush1.msra.mxu0 0.0
        %2839 = vmatprep.subr.mxu0 0.0
        %2840 = vmatpush1.msra.mxu0 0.0
        %2841 = vmatprep.subr.mxu0 0.0
        %2842 = vmatpush1.msra.mxu0 0.0
        %2843 = vmatprep.subr.mxu0 0.0
        %2844 = vmatpush1.msra.mxu0 0.0
        %2845 = vmatprep.subr.mxu0 0.0
        %2846 = vmatpush1.msra.mxu0 0.0
        %2847 = vmatprep.subr.mxu0 0.0
        %2848 = vmatpush1.msra.mxu0 0.0
        %2849 = vmatprep.subr.mxu0 0.0
        %2850 = vmatpush1.msra.mxu0 0.0
        %2851 = vmatprep.subr.mxu0 0.0
        %2852 = vmatpush1.msra.mxu0 0.0
        %2853 = vmatprep.subr.mxu0 0.0
        %2854 = vmatpush1.msra.mxu0 0.0
        %2855 = vmatprep.subr.mxu0 0.0
        %2856 = vmatpush1.msra.mxu0 0.0
        %2857 = vmatprep.mubr.f32.mxu0 0.0
        %2858 = vmatmul.mubr.f32.gmra.mrb[0].mxu0 %v2788
        %v2859 = vpop.f32.mrb[0].mxu0
        %v2860 = vadd.f32 %v2780, %v2859
        %v2861 = vpop.f32.mrb[0].mxu0
        %2862 = vmatprep.mubr.f32.mxu0 0.0
        %2863 = vmatmul.mubr.f32.gmra.mrb[0].mxu0 %v2791
        %v2864 = vpop.f32.mrb[0].mxu0
        %v2865 = vadd.f32 %v2785, %v2864
        %v2866 = vpop.f32.mrb[0].mxu0
        %2867 = vdwg.mxu0
        %v2868 = vmax.f32 %v2860, 0.0
        %v2869 = vmax.f32 %v2865, 0.0
        %2870 = vset.pattern.permute.xlu0 5
        %2871 = vperm.xlu0 %2870, %v2761
        %v2872 = vpop.permute.xlu0 %2871
        %2874 = vset.pattern.permute.xlu0 5
        %2875 = vperm.xlu0 %2874, %v2762
        %v2876 = vpop.permute.xlu0 %2875
        %v2878 = vmul.f32 %v2868, %v2872
        %v2879 = vmul.f32 %v2869, %v2876
        %2880 = vset.pattern.permute.xlu0 6
        %2881 = vperm.xlu0 %2880, %v2761
        %v2882 = vpop.permute.xlu0 %2881
        %2884 = vset.pattern.permute.xlu0 6
        %2885 = vperm.xlu0 %2884, %v2762
        %v2886 = vpop.permute.xlu0 %2885
        %v2888 = vadd.f32 %v2878, %v2882
        %v2889 = vadd.f32 %v2879, %v2886
        %2892 = vrot.lane.b32.xlu0 %v2888, 126
        %v2893 = vpop.permute.xlu0 %2892
        %2894 = vrot.lane.b32.xlu0 %v2889, 126
        %v2895 = vpop.permute.xlu0 %2894
        %2898 = vrot.lane.b32.xlu0 %v2888, 124
        %v2899 = vpop.permute.xlu0 %2898
        %2900 = vrot.lane.b32.xlu0 %v2889, 124
        %v2901 = vpop.permute.xlu0 %2900
        %2904 = vrot.lane.b32.xlu0 %v2888, 122
        %v2905 = vpop.permute.xlu0 %2904
        %2906 = vrot.lane.b32.xlu0 %v2889, 122
        %v2907 = vpop.permute.xlu0 %2906
        %2910 = vrot.lane.b32.xlu0 %v2888, 120
        %v2911 = vpop.permute.xlu0 %2910
        %2912 = vrot.lane.b32.xlu0 %v2889, 120
        %v2913 = vpop.permute.xlu0 %2912
        %2916 = vrot.lane.b32.xlu0 %v2888, 118
        %v2917 = vpop.permute.xlu0 %2916
        %2918 = vrot.lane.b32.xlu0 %v2889, 118
        %v2919 = vpop.permute.xlu0 %2918
        %2922 = vrot.lane.b32.xlu0 %v2888, 116
        %v2923 = vpop.permute.xlu0 %2922
        %2924 = vrot.lane.b32.xlu0 %v2889, 116
        %v2925 = vpop.permute.xlu0 %2924
        %2928 = vrot.lane.b32.xlu0 %v2888, 114
        %v2929 = vpop.permute.xlu0 %2928
        %2930 = vrot.lane.b32.xlu0 %v2889, 114
        %v2931 = vpop.permute.xlu0 %2930
        %2934 = vrot.lane.b32.xlu0 %v2888, 112
        %v2935 = vpop.permute.xlu0 %2934
        %2936 = vrot.lane.b32.xlu0 %v2889, 112
        %v2937 = vpop.permute.xlu0 %2936
        %2940 = vrot.lane.b32.xlu0 %v2888, 110
        %v2941 = vpop.permute.xlu0 %2940
        %2942 = vrot.lane.b32.xlu0 %v2889, 110
        %v2943 = vpop.permute.xlu0 %2942
        %2946 = vrot.lane.b32.xlu0 %v2888, 108
        %v2947 = vpop.permute.xlu0 %2946
        %2948 = vrot.lane.b32.xlu0 %v2889, 108
        %v2949 = vpop.permute.xlu0 %2948
        %2952 = vrot.lane.b32.xlu0 %v2888, 106
        %v2953 = vpop.permute.xlu0 %2952
        %2954 = vrot.lane.b32.xlu0 %v2889, 106
        %v2955 = vpop.permute.xlu0 %2954
        %2958 = vrot.lane.b32.xlu0 %v2888, 104
        %v2959 = vpop.permute.xlu0 %2958
        %2960 = vrot.lane.b32.xlu0 %v2889, 104
        %v2961 = vpop.permute.xlu0 %2960
        %2964 = vrot.lane.b32.xlu0 %v2888, 102
        %v2965 = vpop.permute.xlu0 %2964
        %2966 = vrot.lane.b32.xlu0 %v2889, 102
        %v2967 = vpop.permute.xlu0 %2966
        %2970 = vrot.lane.b32.xlu0 %v2888, 100
        %v2971 = vpop.permute.xlu0 %2970
        %2972 = vrot.lane.b32.xlu0 %v2889, 100
        %v2973 = vpop.permute.xlu0 %2972
        %2976 = vrot.lane.b32.xlu0 %v2888, 98
        %v2977 = vpop.permute.xlu0 %2976
        %2978 = vrot.lane.b32.xlu0 %v2889, 98
        %v2979 = vpop.permute.xlu0 %2978
        %2982 = vrot.lane.b32.xlu0 %v2888, 96
        %v2983 = vpop.permute.xlu0 %2982
        %2984 = vrot.lane.b32.xlu0 %v2889, 96
        %v2985 = vpop.permute.xlu0 %2984
        %2988 = vrot.lane.b32.xlu0 %v2888, 94
        %v2989 = vpop.permute.xlu0 %2988
        %2990 = vrot.lane.b32.xlu0 %v2889, 94
        %v2991 = vpop.permute.xlu0 %2990
        %2994 = vrot.lane.b32.xlu0 %v2888, 92
        %v2995 = vpop.permute.xlu0 %2994
        %2996 = vrot.lane.b32.xlu0 %v2889, 92
        %v2997 = vpop.permute.xlu0 %2996
        %3000 = vrot.lane.b32.xlu0 %v2888, 90
        %v3001 = vpop.permute.xlu0 %3000
        %3002 = vrot.lane.b32.xlu0 %v2889, 90
        %v3003 = vpop.permute.xlu0 %3002
        %3006 = vrot.lane.b32.xlu0 %v2888, 88
        %v3007 = vpop.permute.xlu0 %3006
        %3008 = vrot.lane.b32.xlu0 %v2889, 88
        %v3009 = vpop.permute.xlu0 %3008
        %3012 = vrot.lane.b32.xlu0 %v2888, 86
        %v3013 = vpop.permute.xlu0 %3012
        %3014 = vrot.lane.b32.xlu0 %v2889, 86
        %v3015 = vpop.permute.xlu0 %3014
        %3018 = vrot.lane.b32.xlu0 %v2888, 84
        %v3019 = vpop.permute.xlu0 %3018
        %3020 = vrot.lane.b32.xlu0 %v2889, 84
        %v3021 = vpop.permute.xlu0 %3020
        %3024 = vrot.lane.b32.xlu0 %v2888, 82
        %v3025 = vpop.permute.xlu0 %3024
        %3026 = vrot.lane.b32.xlu0 %v2889, 82
        %v3027 = vpop.permute.xlu0 %3026
        %3030 = vrot.lane.b32.xlu0 %v2888, 80
        %v3031 = vpop.permute.xlu0 %3030
        %3032 = vrot.lane.b32.xlu0 %v2889, 80
        %v3033 = vpop.permute.xlu0 %3032
        %3036 = vrot.lane.b32.xlu0 %v2888, 78
        %v3037 = vpop.permute.xlu0 %3036
        %3038 = vrot.lane.b32.xlu0 %v2889, 78
        %v3039 = vpop.permute.xlu0 %3038
        %3042 = vrot.lane.b32.xlu0 %v2888, 76
        %v3043 = vpop.permute.xlu0 %3042
        %3044 = vrot.lane.b32.xlu0 %v2889, 76
        %v3045 = vpop.permute.xlu0 %3044
        %3048 = vrot.lane.b32.xlu0 %v2888, 74
        %v3049 = vpop.permute.xlu0 %3048
        %3050 = vrot.lane.b32.xlu0 %v2889, 74
        %v3051 = vpop.permute.xlu0 %3050
        %3054 = vrot.lane.b32.xlu0 %v2888, 72
        %v3055 = vpop.permute.xlu0 %3054
        %3056 = vrot.lane.b32.xlu0 %v2889, 72
        %v3057 = vpop.permute.xlu0 %3056
        %3060 = vrot.lane.b32.xlu0 %v2888, 70
        %v3061 = vpop.permute.xlu0 %3060
        %3062 = vrot.lane.b32.xlu0 %v2889, 70
        %v3063 = vpop.permute.xlu0 %3062
        %3066 = vrot.lane.b32.xlu0 %v2888, 68
        %v3067 = vpop.permute.xlu0 %3066
        %3068 = vrot.lane.b32.xlu0 %v2889, 68
        %v3069 = vpop.permute.xlu0 %3068
        %3072 = vrot.lane.b32.xlu0 %v2888, 66
        %v3073 = vpop.permute.xlu0 %3072
        %3074 = vrot.lane.b32.xlu0 %v2889, 66
        %v3075 = vpop.permute.xlu0 %3074
        %v3078 = vcombine.low %v2888, %v2899
        %v3079 = vcombine.high %v2888, %v2899
        %v3081 = vunpack.c.l.s4 1983009808
        %v3082 = vunpack.c.0.s8 %v3081
        %v3083 = vlaneseq
        %v3084 = vshrl.u32 %v3083, 7
        %v3085 = vsub.s32 %v3082, %v3084
        %v3086 = vrot.slane %v3078, %v3085
        %v3088 = vunpack.c.l.s4 1983009808
        %v3089 = vunpack.c.0.s8 %v3088
        %v3090 = vlaneseq
        %v3091 = vshrl.u32 %v3090, 7
        %v3092 = vsub.s32 %v3089, %v3091
        %v3093 = vrot.slane %v3079, %v3092
        %v3094 = vcombine.low %v2893, %v2905
        %v3095 = vcombine.high %v2893, %v2905
        %v3097 = vunpack.c.l.s4 1983009808
        %v3098 = vunpack.c.0.s8 %v3097
        %v3099 = vlaneseq
        %v3100 = vshrl.u32 %v3099, 7
        %v3101 = vsub.s32 %v3098, %v3100
        %v3102 = vrot.slane %v3094, %v3101
        %v3104 = vunpack.c.l.s4 1983009808
        %v3105 = vunpack.c.0.s8 %v3104
        %v3106 = vlaneseq
        %v3107 = vshrl.u32 %v3106, 7
        %v3108 = vsub.s32 %v3105, %v3107
        %v3109 = vrot.slane %v3095, %v3108
        %v3110 = vcombine.low %v2911, %v2923
        %v3111 = vcombine.high %v2911, %v2923
        %v3113 = vunpack.c.l.s4 1983009808
        %v3114 = vunpack.c.0.s8 %v3113
        %v3115 = vlaneseq
        %v3116 = vshrl.u32 %v3115, 7
        %v3117 = vsub.s32 %v3114, %v3116
        %v3118 = vrot.slane %v3110, %v3117
        %v3120 = vunpack.c.l.s4 1983009808
        %v3121 = vunpack.c.0.s8 %v3120
        %v3122 = vlaneseq
        %v3123 = vshrl.u32 %v3122, 7
        %v3124 = vsub.s32 %v3121, %v3123
        %v3125 = vrot.slane %v3111, %v3124
        %v3126 = vcombine.low %v2917, %v2929
        %v3127 = vcombine.high %v2917, %v2929
        %v3129 = vunpack.c.l.s4 1983009808
        %v3130 = vunpack.c.0.s8 %v3129
        %v3131 = vlaneseq
        %v3132 = vshrl.u32 %v3131, 7
        %v3133 = vsub.s32 %v3130, %v3132
        %v3134 = vrot.slane %v3126, %v3133
        %v3136 = vunpack.c.l.s4 1983009808
        %v3137 = vunpack.c.0.s8 %v3136
        %v3138 = vlaneseq
        %v3139 = vshrl.u32 %v3138, 7
        %v3140 = vsub.s32 %v3137, %v3139
        %v3141 = vrot.slane %v3127, %v3140
        %v3142 = vcombine.low %v3086, %v3102
        %v3143 = vcombine.high %v3086, %v3102
        %v3145 = vunpack.c.l.s4 1934713408
        %v3146 = vunpack.c.0.s8 %v3145
        %v3147 = vlaneseq
        %v3148 = vshrl.u32 %v3147, 7
        %v3149 = vsub.s32 %v3146, %v3148
        %v3150 = vrot.slane %v3142, %v3149
        %v3152 = vunpack.c.l.s4 1934713408
        %v3153 = vunpack.c.0.s8 %v3152
        %v3154 = vlaneseq
        %v3155 = vshrl.u32 %v3154, 7
        %v3156 = vsub.s32 %v3153, %v3155
        %v3157 = vrot.slane %v3143, %v3156
        %v3158 = vcombine.low %v3093, %v3109
        %v3159 = vcombine.high %v3093, %v3109
        %v3161 = vunpack.c.l.s4 1934713408
        %v3162 = vunpack.c.0.s8 %v3161
        %v3163 = vlaneseq
        %v3164 = vshrl.u32 %v3163, 7
        %v3165 = vsub.s32 %v3162, %v3164
        %v3166 = vrot.slane %v3158, %v3165
        %v3168 = vunpack.c.l.s4 1934713408
        %v3169 = vunpack.c.0.s8 %v3168
        %v3170 = vlaneseq
        %v3171 = vshrl.u32 %v3170, 7
        %v3172 = vsub.s32 %v3169, %v3171
        %v3173 = vrot.slane %v3159, %v3172
        %v3174 = vcombine.low %v3118, %v3134
        %v3175 = vcombine.high %v3118, %v3134
        %v3177 = vunpack.c.l.s4 1934713408
        %v3178 = vunpack.c.0.s8 %v3177
        %v3179 = vlaneseq
        %v3180 = vshrl.u32 %v3179, 7
        %v3181 = vsub.s32 %v3178, %v3180
        %v3182 = vrot.slane %v3174, %v3181
        %v3184 = vunpack.c.l.s4 1934713408
        %v3185 = vunpack.c.0.s8 %v3184
        %v3186 = vlaneseq
        %v3187 = vshrl.u32 %v3186, 7
        %v3188 = vsub.s32 %v3185, %v3187
        %v3189 = vrot.slane %v3175, %v3188
        %v3190 = vcombine.low %v3125, %v3141
        %v3191 = vcombine.high %v3125, %v3141
        %v3193 = vunpack.c.l.s4 1934713408
        %v3194 = vunpack.c.0.s8 %v3193
        %v3195 = vlaneseq
        %v3196 = vshrl.u32 %v3195, 7
        %v3197 = vsub.s32 %v3194, %v3196
        %v3198 = vrot.slane %v3190, %v3197
        %v3200 = vunpack.c.l.s4 1934713408
        %v3201 = vunpack.c.0.s8 %v3200
        %v3202 = vlaneseq
        %v3203 = vshrl.u32 %v3202, 7
        %v3204 = vsub.s32 %v3201, %v3203
        %v3205 = vrot.slane %v3191, %v3204
        %v3206 = vcombine.low %v3150, %v3182
        %v3207 = vcombine.high %v3150, %v3182
        %v3208 = vcombine.low %v3157, %v3189
        %v3209 = vcombine.high %v3157, %v3189
        %v3210 = vcombine.low %v3166, %v3198
        %v3211 = vcombine.high %v3166, %v3198
        %v3212 = vcombine.low %v3173, %v3205
        %v3213 = vcombine.high %v3173, %v3205
        %v3214 = vcombine.low %v2935, %v2947
        %v3215 = vcombine.high %v2935, %v2947
        %v3217 = vunpack.c.l.s4 1983009808
        %v3218 = vunpack.c.0.s8 %v3217
        %v3219 = vlaneseq
        %v3220 = vshrl.u32 %v3219, 7
        %v3221 = vsub.s32 %v3218, %v3220
        %v3222 = vrot.slane %v3214, %v3221
        %v3224 = vunpack.c.l.s4 1983009808
        %v3225 = vunpack.c.0.s8 %v3224
        %v3226 = vlaneseq
        %v3227 = vshrl.u32 %v3226, 7
        %v3228 = vsub.s32 %v3225, %v3227
        %v3229 = vrot.slane %v3215, %v3228
        %v3230 = vcombine.low %v2941, %v2953
        %v3231 = vcombine.high %v2941, %v2953
        %v3233 = vunpack.c.l.s4 1983009808
        %v3234 = vunpack.c.0.s8 %v3233
        %v3235 = vlaneseq
        %v3236 = vshrl.u32 %v3235, 7
        %v3237 = vsub.s32 %v3234, %v3236
        %v3238 = vrot.slane %v3230, %v3237
        %v3240 = vunpack.c.l.s4 1983009808
        %v3241 = vunpack.c.0.s8 %v3240
        %v3242 = vlaneseq
        %v3243 = vshrl.u32 %v3242, 7
        %v3244 = vsub.s32 %v3241, %v3243
        %v3245 = vrot.slane %v3231, %v3244
        %v3246 = vcombine.low %v2959, %v2971
        %v3247 = vcombine.high %v2959, %v2971
        %v3249 = vunpack.c.l.s4 1983009808
        %v3250 = vunpack.c.0.s8 %v3249
        %v3251 = vlaneseq
        %v3252 = vshrl.u32 %v3251, 7
        %v3253 = vsub.s32 %v3250, %v3252
        %v3254 = vrot.slane %v3246, %v3253
        %v3256 = vunpack.c.l.s4 1983009808
        %v3257 = vunpack.c.0.s8 %v3256
        %v3258 = vlaneseq
        %v3259 = vshrl.u32 %v3258, 7
        %v3260 = vsub.s32 %v3257, %v3259
        %v3261 = vrot.slane %v3247, %v3260
        %v3262 = vcombine.low %v2965, %v2977
        %v3263 = vcombine.high %v2965, %v2977
        %v3265 = vunpack.c.l.s4 1983009808
        %v3266 = vunpack.c.0.s8 %v3265
        %v3267 = vlaneseq
        %v3268 = vshrl.u32 %v3267, 7
        %v3269 = vsub.s32 %v3266, %v3268
        %v3270 = vrot.slane %v3262, %v3269
        %v3272 = vunpack.c.l.s4 1983009808
        %v3273 = vunpack.c.0.s8 %v3272
        %v3274 = vlaneseq
        %v3275 = vshrl.u32 %v3274, 7
        %v3276 = vsub.s32 %v3273, %v3275
        %v3277 = vrot.slane %v3263, %v3276
        %v3278 = vcombine.low %v3222, %v3238
        %v3279 = vcombine.high %v3222, %v3238
        %v3281 = vunpack.c.l.s4 1934713408
        %v3282 = vunpack.c.0.s8 %v3281
        %v3283 = vlaneseq
        %v3284 = vshrl.u32 %v3283, 7
        %v3285 = vsub.s32 %v3282, %v3284
        %v3286 = vrot.slane %v3278, %v3285
        %v3288 = vunpack.c.l.s4 1934713408
        %v3289 = vunpack.c.0.s8 %v3288
        %v3290 = vlaneseq
        %v3291 = vshrl.u32 %v3290, 7
        %v3292 = vsub.s32 %v3289, %v3291
        %v3293 = vrot.slane %v3279, %v3292
        %v3294 = vcombine.low %v3229, %v3245
        %v3295 = vcombine.high %v3229, %v3245
        %v3297 = vunpack.c.l.s4 1934713408
        %v3298 = vunpack.c.0.s8 %v3297
        %v3299 = vlaneseq
        %v3300 = vshrl.u32 %v3299, 7
        %v3301 = vsub.s32 %v3298, %v3300
        %v3302 = vrot.slane %v3294, %v3301
        %v3304 = vunpack.c.l.s4 1934713408
        %v3305 = vunpack.c.0.s8 %v3304
        %v3306 = vlaneseq
        %v3307 = vshrl.u32 %v3306, 7
        %v3308 = vsub.s32 %v3305, %v3307
        %v3309 = vrot.slane %v3295, %v3308
        %v3310 = vcombine.low %v3254, %v3270
        %v3311 = vcombine.high %v3254, %v3270
        %v3313 = vunpack.c.l.s4 1934713408
        %v3314 = vunpack.c.0.s8 %v3313
        %v3315 = vlaneseq
        %v3316 = vshrl.u32 %v3315, 7
        %v3317 = vsub.s32 %v3314, %v3316
        %v3318 = vrot.slane %v3310, %v3317
        %v3320 = vunpack.c.l.s4 1934713408
        %v3321 = vunpack.c.0.s8 %v3320
        %v3322 = vlaneseq
        %v3323 = vshrl.u32 %v3322, 7
        %v3324 = vsub.s32 %v3321, %v3323
        %v3325 = vrot.slane %v3311, %v3324
        %v3326 = vcombine.low %v3261, %v3277
        %v3327 = vcombine.high %v3261, %v3277
        %v3329 = vunpack.c.l.s4 1934713408
        %v3330 = vunpack.c.0.s8 %v3329
        %v3331 = vlaneseq
        %v3332 = vshrl.u32 %v3331, 7
        %v3333 = vsub.s32 %v3330, %v3332
        %v3334 = vrot.slane %v3326, %v3333
        %v3336 = vunpack.c.l.s4 1934713408
        %v3337 = vunpack.c.0.s8 %v3336
        %v3338 = vlaneseq
        %v3339 = vshrl.u32 %v3338, 7
        %v3340 = vsub.s32 %v3337, %v3339
        %v3341 = vrot.slane %v3327, %v3340
        %v3342 = vcombine.low %v3286, %v3318
        %v3343 = vcombine.high %v3286, %v3318
        %v3344 = vcombine.low %v3293, %v3325
        %v3345 = vcombine.high %v3293, %v3325
        %v3346 = vcombine.low %v3302, %v3334
        %v3347 = vcombine.high %v3302, %v3334
        %v3348 = vcombine.low %v3309, %v3341
        %v3349 = vcombine.high %v3309, %v3341
        %v3350 = vcombine.low %v2983, %v2995
        %v3351 = vcombine.high %v2983, %v2995
        %v3353 = vunpack.c.l.s4 1983009808
        %v3354 = vunpack.c.0.s8 %v3353
        %v3355 = vlaneseq
        %v3356 = vshrl.u32 %v3355, 7
        %v3357 = vsub.s32 %v3354, %v3356
        %v3358 = vrot.slane %v3350, %v3357
        %v3360 = vunpack.c.l.s4 1983009808
        %v3361 = vunpack.c.0.s8 %v3360
        %v3362 = vlaneseq
        %v3363 = vshrl.u32 %v3362, 7
        %v3364 = vsub.s32 %v3361, %v3363
        %v3365 = vrot.slane %v3351, %v3364
        %v3366 = vcombine.low %v2989, %v3001
        %v3367 = vcombine.high %v2989, %v3001
        %v3369 = vunpack.c.l.s4 1983009808
        %v3370 = vunpack.c.0.s8 %v3369
        %v3371 = vlaneseq
        %v3372 = vshrl.u32 %v3371, 7
        %v3373 = vsub.s32 %v3370, %v3372
        %v3374 = vrot.slane %v3366, %v3373
        %v3376 = vunpack.c.l.s4 1983009808
        %v3377 = vunpack.c.0.s8 %v3376
        %v3378 = vlaneseq
        %v3379 = vshrl.u32 %v3378, 7
        %v3380 = vsub.s32 %v3377, %v3379
        %v3381 = vrot.slane %v3367, %v3380
        %v3382 = vcombine.low %v3007, %v3019
        %v3383 = vcombine.high %v3007, %v3019
        %v3385 = vunpack.c.l.s4 1983009808
        %v3386 = vunpack.c.0.s8 %v3385
        %v3387 = vlaneseq
        %v3388 = vshrl.u32 %v3387, 7
        %v3389 = vsub.s32 %v3386, %v3388
        %v3390 = vrot.slane %v3382, %v3389
        %v3392 = vunpack.c.l.s4 1983009808
        %v3393 = vunpack.c.0.s8 %v3392
        %v3394 = vlaneseq
        %v3395 = vshrl.u32 %v3394, 7
        %v3396 = vsub.s32 %v3393, %v3395
        %v3397 = vrot.slane %v3383, %v3396
        %v3398 = vcombine.low %v3013, %v3025
        %v3399 = vcombine.high %v3013, %v3025
        %v3401 = vunpack.c.l.s4 1983009808
        %v3402 = vunpack.c.0.s8 %v3401
        %v3403 = vlaneseq
        %v3404 = vshrl.u32 %v3403, 7
        %v3405 = vsub.s32 %v3402, %v3404
        %v3406 = vrot.slane %v3398, %v3405
        %v3408 = vunpack.c.l.s4 1983009808
        %v3409 = vunpack.c.0.s8 %v3408
        %v3410 = vlaneseq
        %v3411 = vshrl.u32 %v3410, 7
        %v3412 = vsub.s32 %v3409, %v3411
        %v3413 = vrot.slane %v3399, %v3412
        %v3414 = vcombine.low %v3358, %v3374
        %v3415 = vcombine.high %v3358, %v3374
        %v3417 = vunpack.c.l.s4 1934713408
        %v3418 = vunpack.c.0.s8 %v3417
        %v3419 = vlaneseq
        %v3420 = vshrl.u32 %v3419, 7
        %v3421 = vsub.s32 %v3418, %v3420
        %v3422 = vrot.slane %v3414, %v3421
        %v3424 = vunpack.c.l.s4 1934713408
        %v3425 = vunpack.c.0.s8 %v3424
        %v3426 = vlaneseq
        %v3427 = vshrl.u32 %v3426, 7
        %v3428 = vsub.s32 %v3425, %v3427
        %v3429 = vrot.slane %v3415, %v3428
        %v3430 = vcombine.low %v3365, %v3381
        %v3431 = vcombine.high %v3365, %v3381
        %v3433 = vunpack.c.l.s4 1934713408
        %v3434 = vunpack.c.0.s8 %v3433
        %v3435 = vlaneseq
        %v3436 = vshrl.u32 %v3435, 7
        %v3437 = vsub.s32 %v3434, %v3436
        %v3438 = vrot.slane %v3430, %v3437
        %v3440 = vunpack.c.l.s4 1934713408
        %v3441 = vunpack.c.0.s8 %v3440
        %v3442 = vlaneseq
        %v3443 = vshrl.u32 %v3442, 7
        %v3444 = vsub.s32 %v3441, %v3443
        %v3445 = vrot.slane %v3431, %v3444
        %v3446 = vcombine.low %v3390, %v3406
        %v3447 = vcombine.high %v3390, %v3406
        %v3449 = vunpack.c.l.s4 1934713408
        %v3450 = vunpack.c.0.s8 %v3449
        %v3451 = vlaneseq
        %v3452 = vshrl.u32 %v3451, 7
        %v3453 = vsub.s32 %v3450, %v3452
        %v3454 = vrot.slane %v3446, %v3453
        %v3456 = vunpack.c.l.s4 1934713408
        %v3457 = vunpack.c.0.s8 %v3456
        %v3458 = vlaneseq
        %v3459 = vshrl.u32 %v3458, 7
        %v3460 = vsub.s32 %v3457, %v3459
        %v3461 = vrot.slane %v3447, %v3460
        %v3462 = vcombine.low %v3397, %v3413
        %v3463 = vcombine.high %v3397, %v3413
        %v3465 = vunpack.c.l.s4 1934713408
        %v3466 = vunpack.c.0.s8 %v3465
        %v3467 = vlaneseq
        %v3468 = vshrl.u32 %v3467, 7
        %v3469 = vsub.s32 %v3466, %v3468
        %v3470 = vrot.slane %v3462, %v3469
        %v3472 = vunpack.c.l.s4 1934713408
        %v3473 = vunpack.c.0.s8 %v3472
        %v3474 = vlaneseq
        %v3475 = vshrl.u32 %v3474, 7
        %v3476 = vsub.s32 %v3473, %v3475
        %v3477 = vrot.slane %v3463, %v3476
        %v3478 = vcombine.low %v3422, %v3454
        %v3479 = vcombine.high %v3422, %v3454
        %v3480 = vcombine.low %v3429, %v3461
        %v3481 = vcombine.high %v3429, %v3461
        %v3482 = vcombine.low %v3438, %v3470
        %v3483 = vcombine.high %v3438, %v3470
        %v3484 = vcombine.low %v3445, %v3477
        %v3485 = vcombine.high %v3445, %v3477
        %v3486 = vcombine.low %v3031, %v3043
        %v3487 = vcombine.high %v3031, %v3043
        %v3489 = vunpack.c.l.s4 1983009808
        %v3490 = vunpack.c.0.s8 %v3489
        %v3491 = vlaneseq
        %v3492 = vshrl.u32 %v3491, 7
        %v3493 = vsub.s32 %v3490, %v3492
        %v3494 = vrot.slane %v3486, %v3493
        %v3496 = vunpack.c.l.s4 1983009808
        %v3497 = vunpack.c.0.s8 %v3496
        %v3498 = vlaneseq
        %v3499 = vshrl.u32 %v3498, 7
        %v3500 = vsub.s32 %v3497, %v3499
        %v3501 = vrot.slane %v3487, %v3500
        %v3502 = vcombine.low %v3037, %v3049
        %v3503 = vcombine.high %v3037, %v3049
        %v3505 = vunpack.c.l.s4 1983009808
        %v3506 = vunpack.c.0.s8 %v3505
        %v3507 = vlaneseq
        %v3508 = vshrl.u32 %v3507, 7
        %v3509 = vsub.s32 %v3506, %v3508
        %v3510 = vrot.slane %v3502, %v3509
        %v3512 = vunpack.c.l.s4 1983009808
        %v3513 = vunpack.c.0.s8 %v3512
        %v3514 = vlaneseq
        %v3515 = vshrl.u32 %v3514, 7
        %v3516 = vsub.s32 %v3513, %v3515
        %v3517 = vrot.slane %v3503, %v3516
        %v3518 = vcombine.low %v3055, %v3067
        %v3519 = vcombine.high %v3055, %v3067
        %v3521 = vunpack.c.l.s4 1983009808
        %v3522 = vunpack.c.0.s8 %v3521
        %v3523 = vlaneseq
        %v3524 = vshrl.u32 %v3523, 7
        %v3525 = vsub.s32 %v3522, %v3524
        %v3526 = vrot.slane %v3518, %v3525
        %v3528 = vunpack.c.l.s4 1983009808
        %v3529 = vunpack.c.0.s8 %v3528
        %v3530 = vlaneseq
        %v3531 = vshrl.u32 %v3530, 7
        %v3532 = vsub.s32 %v3529, %v3531
        %v3533 = vrot.slane %v3519, %v3532
        %v3534 = vcombine.low %v3061, %v3073
        %v3535 = vcombine.high %v3061, %v3073
        %v3537 = vunpack.c.l.s4 1983009808
        %v3538 = vunpack.c.0.s8 %v3537
        %v3539 = vlaneseq
        %v3540 = vshrl.u32 %v3539, 7
        %v3541 = vsub.s32 %v3538, %v3540
        %v3542 = vrot.slane %v3534, %v3541
        %v3544 = vunpack.c.l.s4 1983009808
        %v3545 = vunpack.c.0.s8 %v3544
        %v3546 = vlaneseq
        %v3547 = vshrl.u32 %v3546, 7
        %v3548 = vsub.s32 %v3545, %v3547
        %v3549 = vrot.slane %v3535, %v3548
        %v3550 = vcombine.low %v3494, %v3510
        %v3551 = vcombine.high %v3494, %v3510
        %v3553 = vunpack.c.l.s4 1934713408
        %v3554 = vunpack.c.0.s8 %v3553
        %v3555 = vlaneseq
        %v3556 = vshrl.u32 %v3555, 7
        %v3557 = vsub.s32 %v3554, %v3556
        %v3558 = vrot.slane %v3550, %v3557
        %v3560 = vunpack.c.l.s4 1934713408
        %v3561 = vunpack.c.0.s8 %v3560
        %v3562 = vlaneseq
        %v3563 = vshrl.u32 %v3562, 7
        %v3564 = vsub.s32 %v3561, %v3563
        %v3565 = vrot.slane %v3551, %v3564
        %v3566 = vcombine.low %v3501, %v3517
        %v3567 = vcombine.high %v3501, %v3517
        %v3569 = vunpack.c.l.s4 1934713408
        %v3570 = vunpack.c.0.s8 %v3569
        %v3571 = vlaneseq
        %v3572 = vshrl.u32 %v3571, 7
        %v3573 = vsub.s32 %v3570, %v3572
        %v3574 = vrot.slane %v3566, %v3573
        %v3576 = vunpack.c.l.s4 1934713408
        %v3577 = vunpack.c.0.s8 %v3576
        %v3578 = vlaneseq
        %v3579 = vshrl.u32 %v3578, 7
        %v3580 = vsub.s32 %v3577, %v3579
        %v3581 = vrot.slane %v3567, %v3580
        %v3582 = vcombine.low %v3526, %v3542
        %v3583 = vcombine.high %v3526, %v3542
        %v3585 = vunpack.c.l.s4 1934713408
        %v3586 = vunpack.c.0.s8 %v3585
        %v3587 = vlaneseq
        %v3588 = vshrl.u32 %v3587, 7
        %v3589 = vsub.s32 %v3586, %v3588
        %v3590 = vrot.slane %v3582, %v3589
        %v3592 = vunpack.c.l.s4 1934713408
        %v3593 = vunpack.c.0.s8 %v3592
        %v3594 = vlaneseq
        %v3595 = vshrl.u32 %v3594, 7
        %v3596 = vsub.s32 %v3593, %v3595
        %v3597 = vrot.slane %v3583, %v3596
        %v3598 = vcombine.low %v3533, %v3549
        %v3599 = vcombine.high %v3533, %v3549
        %v3601 = vunpack.c.l.s4 1934713408
        %v3602 = vunpack.c.0.s8 %v3601
        %v3603 = vlaneseq
        %v3604 = vshrl.u32 %v3603, 7
        %v3605 = vsub.s32 %v3602, %v3604
        %v3606 = vrot.slane %v3598, %v3605
        %v3608 = vunpack.c.l.s4 1934713408
        %v3609 = vunpack.c.0.s8 %v3608
        %v3610 = vlaneseq
        %v3611 = vshrl.u32 %v3610, 7
        %v3612 = vsub.s32 %v3609, %v3611
        %v3613 = vrot.slane %v3599, %v3612
        %v3614 = vcombine.low %v3558, %v3590
        %v3615 = vcombine.high %v3558, %v3590
        %v3616 = vcombine.low %v3565, %v3597
        %v3617 = vcombine.high %v3565, %v3597
        %v3618 = vcombine.low %v3574, %v3606
        %v3619 = vcombine.high %v3574, %v3606
        %v3620 = vcombine.low %v3581, %v3613
        %v3621 = vcombine.high %v3581, %v3613
        %v3622 = vcombine.low %v2889, %v2901
        %v3623 = vcombine.high %v2889, %v2901
        %v3625 = vunpack.c.l.s4 1983009808
        %v3626 = vunpack.c.0.s8 %v3625
        %v3627 = vlaneseq
        %v3628 = vshrl.u32 %v3627, 7
        %v3629 = vsub.s32 %v3626, %v3628
        %v3630 = vrot.slane %v3622, %v3629
        %v3632 = vunpack.c.l.s4 1983009808
        %v3633 = vunpack.c.0.s8 %v3632
        %v3634 = vlaneseq
        %v3635 = vshrl.u32 %v3634, 7
        %v3636 = vsub.s32 %v3633, %v3635
        %v3637 = vrot.slane %v3623, %v3636
        %v3638 = vcombine.low %v2895, %v2907
        %v3639 = vcombine.high %v2895, %v2907
        %v3641 = vunpack.c.l.s4 1983009808
        %v3642 = vunpack.c.0.s8 %v3641
        %v3643 = vlaneseq
        %v3644 = vshrl.u32 %v3643, 7
        %v3645 = vsub.s32 %v3642, %v3644
        %v3646 = vrot.slane %v3638, %v3645
        %v3648 = vunpack.c.l.s4 1983009808
        %v3649 = vunpack.c.0.s8 %v3648
        %v3650 = vlaneseq
        %v3651 = vshrl.u32 %v3650, 7
        %v3652 = vsub.s32 %v3649, %v3651
        %v3653 = vrot.slane %v3639, %v3652
        %v3654 = vcombine.low %v2913, %v2925
        %v3655 = vcombine.high %v2913, %v2925
        %v3657 = vunpack.c.l.s4 1983009808
        %v3658 = vunpack.c.0.s8 %v3657
        %v3659 = vlaneseq
        %v3660 = vshrl.u32 %v3659, 7
        %v3661 = vsub.s32 %v3658, %v3660
        %v3662 = vrot.slane %v3654, %v3661
        %v3664 = vunpack.c.l.s4 1983009808
        %v3665 = vunpack.c.0.s8 %v3664
        %v3666 = vlaneseq
        %v3667 = vshrl.u32 %v3666, 7
        %v3668 = vsub.s32 %v3665, %v3667
        %v3669 = vrot.slane %v3655, %v3668
        %v3670 = vcombine.low %v2919, %v2931
        %v3671 = vcombine.high %v2919, %v2931
        %v3673 = vunpack.c.l.s4 1983009808
        %v3674 = vunpack.c.0.s8 %v3673
        %v3675 = vlaneseq
        %v3676 = vshrl.u32 %v3675, 7
        %v3677 = vsub.s32 %v3674, %v3676
        %v3678 = vrot.slane %v3670, %v3677
        %v3680 = vunpack.c.l.s4 1983009808
        %v3681 = vunpack.c.0.s8 %v3680
        %v3682 = vlaneseq
        %v3683 = vshrl.u32 %v3682, 7
        %v3684 = vsub.s32 %v3681, %v3683
        %v3685 = vrot.slane %v3671, %v3684
        %v3686 = vcombine.low %v3630, %v3646
        %v3687 = vcombine.high %v3630, %v3646
        %v3689 = vunpack.c.l.s4 1934713408
        %v3690 = vunpack.c.0.s8 %v3689
        %v3691 = vlaneseq
        %v3692 = vshrl.u32 %v3691, 7
        %v3693 = vsub.s32 %v3690, %v3692
        %v3694 = vrot.slane %v3686, %v3693
        %v3696 = vunpack.c.l.s4 1934713408
        %v3697 = vunpack.c.0.s8 %v3696
        %v3698 = vlaneseq
        %v3699 = vshrl.u32 %v3698, 7
        %v3700 = vsub.s32 %v3697, %v3699
        %v3701 = vrot.slane %v3687, %v3700
        %v3702 = vcombine.low %v3637, %v3653
        %v3703 = vcombine.high %v3637, %v3653
        %v3705 = vunpack.c.l.s4 1934713408
        %v3706 = vunpack.c.0.s8 %v3705
        %v3707 = vlaneseq
        %v3708 = vshrl.u32 %v3707, 7
        %v3709 = vsub.s32 %v3706, %v3708
        %v3710 = vrot.slane %v3702, %v3709
        %v3712 = vunpack.c.l.s4 1934713408
        %v3713 = vunpack.c.0.s8 %v3712
        %v3714 = vlaneseq
        %v3715 = vshrl.u32 %v3714, 7
        %v3716 = vsub.s32 %v3713, %v3715
        %v3717 = vrot.slane %v3703, %v3716
        %v3718 = vcombine.low %v3662, %v3678
        %v3719 = vcombine.high %v3662, %v3678
        %v3721 = vunpack.c.l.s4 1934713408
        %v3722 = vunpack.c.0.s8 %v3721
        %v3723 = vlaneseq
        %v3724 = vshrl.u32 %v3723, 7
        %v3725 = vsub.s32 %v3722, %v3724
        %v3726 = vrot.slane %v3718, %v3725
        %v3728 = vunpack.c.l.s4 1934713408
        %v3729 = vunpack.c.0.s8 %v3728
        %v3730 = vlaneseq
        %v3731 = vshrl.u32 %v3730, 7
        %v3732 = vsub.s32 %v3729, %v3731
        %v3733 = vrot.slane %v3719, %v3732
        %v3734 = vcombine.low %v3669, %v3685
        %v3735 = vcombine.high %v3669, %v3685
        %v3737 = vunpack.c.l.s4 1934713408
        %v3738 = vunpack.c.0.s8 %v3737
        %v3739 = vlaneseq
        %v3740 = vshrl.u32 %v3739, 7
        %v3741 = vsub.s32 %v3738, %v3740
        %v3742 = vrot.slane %v3734, %v3741
        %v3744 = vunpack.c.l.s4 1934713408
        %v3745 = vunpack.c.0.s8 %v3744
        %v3746 = vlaneseq
        %v3747 = vshrl.u32 %v3746, 7
        %v3748 = vsub.s32 %v3745, %v3747
        %v3749 = vrot.slane %v3735, %v3748
        %v3750 = vcombine.low %v3694, %v3726
        %v3751 = vcombine.high %v3694, %v3726
        %v3752 = vcombine.low %v3701, %v3733
        %v3753 = vcombine.high %v3701, %v3733
        %v3754 = vcombine.low %v3710, %v3742
        %v3755 = vcombine.high %v3710, %v3742
        %v3756 = vcombine.low %v3717, %v3749
        %v3757 = vcombine.high %v3717, %v3749
        %v3758 = vcombine.low %v2937, %v2949
        %v3759 = vcombine.high %v2937, %v2949
        %v3761 = vunpack.c.l.s4 1983009808
        %v3762 = vunpack.c.0.s8 %v3761
        %v3763 = vlaneseq
        %v3764 = vshrl.u32 %v3763, 7
        %v3765 = vsub.s32 %v3762, %v3764
        %v3766 = vrot.slane %v3758, %v3765
        %v3768 = vunpack.c.l.s4 1983009808
        %v3769 = vunpack.c.0.s8 %v3768
        %v3770 = vlaneseq
        %v3771 = vshrl.u32 %v3770, 7
        %v3772 = vsub.s32 %v3769, %v3771
        %v3773 = vrot.slane %v3759, %v3772
        %v3774 = vcombine.low %v2943, %v2955
        %v3775 = vcombine.high %v2943, %v2955
        %v3777 = vunpack.c.l.s4 1983009808
        %v3778 = vunpack.c.0.s8 %v3777
        %v3779 = vlaneseq
        %v3780 = vshrl.u32 %v3779, 7
        %v3781 = vsub.s32 %v3778, %v3780
        %v3782 = vrot.slane %v3774, %v3781
        %v3784 = vunpack.c.l.s4 1983009808
        %v3785 = vunpack.c.0.s8 %v3784
        %v3786 = vlaneseq
        %v3787 = vshrl.u32 %v3786, 7
        %v3788 = vsub.s32 %v3785, %v3787
        %v3789 = vrot.slane %v3775, %v3788
        %v3790 = vcombine.low %v2961, %v2973
        %v3791 = vcombine.high %v2961, %v2973
        %v3793 = vunpack.c.l.s4 1983009808
        %v3794 = vunpack.c.0.s8 %v3793
        %v3795 = vlaneseq
        %v3796 = vshrl.u32 %v3795, 7
        %v3797 = vsub.s32 %v3794, %v3796
        %v3798 = vrot.slane %v3790, %v3797
        %v3800 = vunpack.c.l.s4 1983009808
        %v3801 = vunpack.c.0.s8 %v3800
        %v3802 = vlaneseq
        %v3803 = vshrl.u32 %v3802, 7
        %v3804 = vsub.s32 %v3801, %v3803
        %v3805 = vrot.slane %v3791, %v3804
        %v3806 = vcombine.low %v2967, %v2979
        %v3807 = vcombine.high %v2967, %v2979
        %v3809 = vunpack.c.l.s4 1983009808
        %v3810 = vunpack.c.0.s8 %v3809
        %v3811 = vlaneseq
        %v3812 = vshrl.u32 %v3811, 7
        %v3813 = vsub.s32 %v3810, %v3812
        %v3814 = vrot.slane %v3806, %v3813
        %v3816 = vunpack.c.l.s4 1983009808
        %v3817 = vunpack.c.0.s8 %v3816
        %v3818 = vlaneseq
        %v3819 = vshrl.u32 %v3818, 7
        %v3820 = vsub.s32 %v3817, %v3819
        %v3821 = vrot.slane %v3807, %v3820
        %v3822 = vcombine.low %v3766, %v3782
        %v3823 = vcombine.high %v3766, %v3782
        %v3825 = vunpack.c.l.s4 1934713408
        %v3826 = vunpack.c.0.s8 %v3825
        %v3827 = vlaneseq
        %v3828 = vshrl.u32 %v3827, 7
        %v3829 = vsub.s32 %v3826, %v3828
        %v3830 = vrot.slane %v3822, %v3829
        %v3832 = vunpack.c.l.s4 1934713408
        %v3833 = vunpack.c.0.s8 %v3832
        %v3834 = vlaneseq
        %v3835 = vshrl.u32 %v3834, 7
        %v3836 = vsub.s32 %v3833, %v3835
        %v3837 = vrot.slane %v3823, %v3836
        %v3838 = vcombine.low %v3773, %v3789
        %v3839 = vcombine.high %v3773, %v3789
        %v3841 = vunpack.c.l.s4 1934713408
        %v3842 = vunpack.c.0.s8 %v3841
        %v3843 = vlaneseq
        %v3844 = vshrl.u32 %v3843, 7
        %v3845 = vsub.s32 %v3842, %v3844
        %v3846 = vrot.slane %v3838, %v3845
        %v3848 = vunpack.c.l.s4 1934713408
        %v3849 = vunpack.c.0.s8 %v3848
        %v3850 = vlaneseq
        %v3851 = vshrl.u32 %v3850, 7
        %v3852 = vsub.s32 %v3849, %v3851
        %v3853 = vrot.slane %v3839, %v3852
        %v3854 = vcombine.low %v3798, %v3814
        %v3855 = vcombine.high %v3798, %v3814
        %v3857 = vunpack.c.l.s4 1934713408
        %v3858 = vunpack.c.0.s8 %v3857
        %v3859 = vlaneseq
        %v3860 = vshrl.u32 %v3859, 7
        %v3861 = vsub.s32 %v3858, %v3860
        %v3862 = vrot.slane %v3854, %v3861
        %v3864 = vunpack.c.l.s4 1934713408
        %v3865 = vunpack.c.0.s8 %v3864
        %v3866 = vlaneseq
        %v3867 = vshrl.u32 %v3866, 7
        %v3868 = vsub.s32 %v3865, %v3867
        %v3869 = vrot.slane %v3855, %v3868
        %v3870 = vcombine.low %v3805, %v3821
        %v3871 = vcombine.high %v3805, %v3821
        %v3873 = vunpack.c.l.s4 1934713408
        %v3874 = vunpack.c.0.s8 %v3873
        %v3875 = vlaneseq
        %v3876 = vshrl.u32 %v3875, 7
        %v3877 = vsub.s32 %v3874, %v3876
        %v3878 = vrot.slane %v3870, %v3877
        %v3880 = vunpack.c.l.s4 1934713408
        %v3881 = vunpack.c.0.s8 %v3880
        %v3882 = vlaneseq
        %v3883 = vshrl.u32 %v3882, 7
        %v3884 = vsub.s32 %v3881, %v3883
        %v3885 = vrot.slane %v3871, %v3884
        %v3886 = vcombine.low %v3830, %v3862
        %v3887 = vcombine.high %v3830, %v3862
        %v3888 = vcombine.low %v3837, %v3869
        %v3889 = vcombine.high %v3837, %v3869
        %v3890 = vcombine.low %v3846, %v3878
        %v3891 = vcombine.high %v3846, %v3878
        %v3892 = vcombine.low %v3853, %v3885
        %v3893 = vcombine.high %v3853, %v3885
        %v3894 = vcombine.low %v2985, %v2997
        %v3895 = vcombine.high %v2985, %v2997
        %v3897 = vunpack.c.l.s4 1983009808
        %v3898 = vunpack.c.0.s8 %v3897
        %v3899 = vlaneseq
        %v3900 = vshrl.u32 %v3899, 7
        %v3901 = vsub.s32 %v3898, %v3900
        %v3902 = vrot.slane %v3894, %v3901
        %v3904 = vunpack.c.l.s4 1983009808
        %v3905 = vunpack.c.0.s8 %v3904
        %v3906 = vlaneseq
        %v3907 = vshrl.u32 %v3906, 7
        %v3908 = vsub.s32 %v3905, %v3907
        %v3909 = vrot.slane %v3895, %v3908
        %v3910 = vcombine.low %v2991, %v3003
        %v3911 = vcombine.high %v2991, %v3003
        %v3913 = vunpack.c.l.s4 1983009808
        %v3914 = vunpack.c.0.s8 %v3913
        %v3915 = vlaneseq
        %v3916 = vshrl.u32 %v3915, 7
        %v3917 = vsub.s32 %v3914, %v3916
        %v3918 = vrot.slane %v3910, %v3917
        %v3920 = vunpack.c.l.s4 1983009808
        %v3921 = vunpack.c.0.s8 %v3920
        %v3922 = vlaneseq
        %v3923 = vshrl.u32 %v3922, 7
        %v3924 = vsub.s32 %v3921, %v3923
        %v3925 = vrot.slane %v3911, %v3924
        %v3926 = vcombine.low %v3009, %v3021
        %v3927 = vcombine.high %v3009, %v3021
        %v3929 = vunpack.c.l.s4 1983009808
        %v3930 = vunpack.c.0.s8 %v3929
        %v3931 = vlaneseq
        %v3932 = vshrl.u32 %v3931, 7
        %v3933 = vsub.s32 %v3930, %v3932
        %v3934 = vrot.slane %v3926, %v3933
        %v3936 = vunpack.c.l.s4 1983009808
        %v3937 = vunpack.c.0.s8 %v3936
        %v3938 = vlaneseq
        %v3939 = vshrl.u32 %v3938, 7
        %v3940 = vsub.s32 %v3937, %v3939
        %v3941 = vrot.slane %v3927, %v3940
        %v3942 = vcombine.low %v3015, %v3027
        %v3943 = vcombine.high %v3015, %v3027
        %v3945 = vunpack.c.l.s4 1983009808
        %v3946 = vunpack.c.0.s8 %v3945
        %v3947 = vlaneseq
        %v3948 = vshrl.u32 %v3947, 7
        %v3949 = vsub.s32 %v3946, %v3948
        %v3950 = vrot.slane %v3942, %v3949
        %v3952 = vunpack.c.l.s4 1983009808
        %v3953 = vunpack.c.0.s8 %v3952
        %v3954 = vlaneseq
        %v3955 = vshrl.u32 %v3954, 7
        %v3956 = vsub.s32 %v3953, %v3955
        %v3957 = vrot.slane %v3943, %v3956
        %v3958 = vcombine.low %v3902, %v3918
        %v3959 = vcombine.high %v3902, %v3918
        %v3961 = vunpack.c.l.s4 1934713408
        %v3962 = vunpack.c.0.s8 %v3961
        %v3963 = vlaneseq
        %v3964 = vshrl.u32 %v3963, 7
        %v3965 = vsub.s32 %v3962, %v3964
        %v3966 = vrot.slane %v3958, %v3965
        %v3968 = vunpack.c.l.s4 1934713408
        %v3969 = vunpack.c.0.s8 %v3968
        %v3970 = vlaneseq
        %v3971 = vshrl.u32 %v3970, 7
        %v3972 = vsub.s32 %v3969, %v3971
        %v3973 = vrot.slane %v3959, %v3972
        %v3974 = vcombine.low %v3909, %v3925
        %v3975 = vcombine.high %v3909, %v3925
        %v3977 = vunpack.c.l.s4 1934713408
        %v3978 = vunpack.c.0.s8 %v3977
        %v3979 = vlaneseq
        %v3980 = vshrl.u32 %v3979, 7
        %v3981 = vsub.s32 %v3978, %v3980
        %v3982 = vrot.slane %v3974, %v3981
        %v3984 = vunpack.c.l.s4 1934713408
        %v3985 = vunpack.c.0.s8 %v3984
        %v3986 = vlaneseq
        %v3987 = vshrl.u32 %v3986, 7
        %v3988 = vsub.s32 %v3985, %v3987
        %v3989 = vrot.slane %v3975, %v3988
        %v3990 = vcombine.low %v3934, %v3950
        %v3991 = vcombine.high %v3934, %v3950
        %v3993 = vunpack.c.l.s4 1934713408
        %v3994 = vunpack.c.0.s8 %v3993
        %v3995 = vlaneseq
        %v3996 = vshrl.u32 %v3995, 7
        %v3997 = vsub.s32 %v3994, %v3996
        %v3998 = vrot.slane %v3990, %v3997
        %v4000 = vunpack.c.l.s4 1934713408
        %v4001 = vunpack.c.0.s8 %v4000
        %v4002 = vlaneseq
        %v4003 = vshrl.u32 %v4002, 7
        %v4004 = vsub.s32 %v4001, %v4003
        %v4005 = vrot.slane %v3991, %v4004
        %v4006 = vcombine.low %v3941, %v3957
        %v4007 = vcombine.high %v3941, %v3957
        %v4009 = vunpack.c.l.s4 1934713408
        %v4010 = vunpack.c.0.s8 %v4009
        %v4011 = vlaneseq
        %v4012 = vshrl.u32 %v4011, 7
        %v4013 = vsub.s32 %v4010, %v4012
        %v4014 = vrot.slane %v4006, %v4013
        %v4016 = vunpack.c.l.s4 1934713408
        %v4017 = vunpack.c.0.s8 %v4016
        %v4018 = vlaneseq
        %v4019 = vshrl.u32 %v4018, 7
        %v4020 = vsub.s32 %v4017, %v4019
        %v4021 = vrot.slane %v4007, %v4020
        %v4022 = vcombine.low %v3966, %v3998
        %v4023 = vcombine.high %v3966, %v3998
        %v4024 = vcombine.low %v3973, %v4005
        %v4025 = vcombine.high %v3973, %v4005
        %v4026 = vcombine.low %v3982, %v4014
        %v4027 = vcombine.high %v3982, %v4014
        %v4028 = vcombine.low %v3989, %v4021
        %v4029 = vcombine.high %v3989, %v4021
        %v4030 = vcombine.low %v3033, %v3045
        %v4031 = vcombine.high %v3033, %v3045
        %v4033 = vunpack.c.l.s4 1983009808
        %v4034 = vunpack.c.0.s8 %v4033
        %v4035 = vlaneseq
        %v4036 = vshrl.u32 %v4035, 7
        %v4037 = vsub.s32 %v4034, %v4036
        %v4038 = vrot.slane %v4030, %v4037
        %v4040 = vunpack.c.l.s4 1983009808
        %v4041 = vunpack.c.0.s8 %v4040
        %v4042 = vlaneseq
        %v4043 = vshrl.u32 %v4042, 7
        %v4044 = vsub.s32 %v4041, %v4043
        %v4045 = vrot.slane %v4031, %v4044
        %v4046 = vcombine.low %v3039, %v3051
        %v4047 = vcombine.high %v3039, %v3051
        %v4049 = vunpack.c.l.s4 1983009808
        %v4050 = vunpack.c.0.s8 %v4049
        %v4051 = vlaneseq
        %v4052 = vshrl.u32 %v4051, 7
        %v4053 = vsub.s32 %v4050, %v4052
        %v4054 = vrot.slane %v4046, %v4053
        %v4056 = vunpack.c.l.s4 1983009808
        %v4057 = vunpack.c.0.s8 %v4056
        %v4058 = vlaneseq
        %v4059 = vshrl.u32 %v4058, 7
        %v4060 = vsub.s32 %v4057, %v4059
        %v4061 = vrot.slane %v4047, %v4060
        %v4062 = vcombine.low %v3057, %v3069
        %v4063 = vcombine.high %v3057, %v3069
        %v4065 = vunpack.c.l.s4 1983009808
        %v4066 = vunpack.c.0.s8 %v4065
        %v4067 = vlaneseq
        %v4068 = vshrl.u32 %v4067, 7
        %v4069 = vsub.s32 %v4066, %v4068
        %v4070 = vrot.slane %v4062, %v4069
        %v4072 = vunpack.c.l.s4 1983009808
        %v4073 = vunpack.c.0.s8 %v4072
        %v4074 = vlaneseq
        %v4075 = vshrl.u32 %v4074, 7
        %v4076 = vsub.s32 %v4073, %v4075
        %v4077 = vrot.slane %v4063, %v4076
        %v4078 = vcombine.low %v3063, %v3075
        %v4079 = vcombine.high %v3063, %v3075
        %v4081 = vunpack.c.l.s4 1983009808
        %v4082 = vunpack.c.0.s8 %v4081
        %v4083 = vlaneseq
        %v4084 = vshrl.u32 %v4083, 7
        %v4085 = vsub.s32 %v4082, %v4084
        %v4086 = vrot.slane %v4078, %v4085
        %v4088 = vunpack.c.l.s4 1983009808
        %v4089 = vunpack.c.0.s8 %v4088
        %v4090 = vlaneseq
        %v4091 = vshrl.u32 %v4090, 7
        %v4092 = vsub.s32 %v4089, %v4091
        %v4093 = vrot.slane %v4079, %v4092
        %v4094 = vcombine.low %v4038, %v4054
        %v4095 = vcombine.high %v4038, %v4054
        %v4097 = vunpack.c.l.s4 1934713408
        %v4098 = vunpack.c.0.s8 %v4097
        %v4099 = vlaneseq
        %v4100 = vshrl.u32 %v4099, 7
        %v4101 = vsub.s32 %v4098, %v4100
        %v4102 = vrot.slane %v4094, %v4101
        %v4104 = vunpack.c.l.s4 1934713408
        %v4105 = vunpack.c.0.s8 %v4104
        %v4106 = vlaneseq
        %v4107 = vshrl.u32 %v4106, 7
        %v4108 = vsub.s32 %v4105, %v4107
        %v4109 = vrot.slane %v4095, %v4108
        %v4110 = vcombine.low %v4045, %v4061
        %v4111 = vcombine.high %v4045, %v4061
        %v4113 = vunpack.c.l.s4 1934713408
        %v4114 = vunpack.c.0.s8 %v4113
        %v4115 = vlaneseq
        %v4116 = vshrl.u32 %v4115, 7
        %v4117 = vsub.s32 %v4114, %v4116
        %v4118 = vrot.slane %v4110, %v4117
        %v4120 = vunpack.c.l.s4 1934713408
        %v4121 = vunpack.c.0.s8 %v4120
        %v4122 = vlaneseq
        %v4123 = vshrl.u32 %v4122, 7
        %v4124 = vsub.s32 %v4121, %v4123
        %v4125 = vrot.slane %v4111, %v4124
        %v4126 = vcombine.low %v4070, %v4086
        %v4127 = vcombine.high %v4070, %v4086
        %v4129 = vunpack.c.l.s4 1934713408
        %v4130 = vunpack.c.0.s8 %v4129
        %v4131 = vlaneseq
        %v4132 = vshrl.u32 %v4131, 7
        %v4133 = vsub.s32 %v4130, %v4132
        %v4134 = vrot.slane %v4126, %v4133
        %v4136 = vunpack.c.l.s4 1934713408
        %v4137 = vunpack.c.0.s8 %v4136
        %v4138 = vlaneseq
        %v4139 = vshrl.u32 %v4138, 7
        %v4140 = vsub.s32 %v4137, %v4139
        %v4141 = vrot.slane %v4127, %v4140
        %v4142 = vcombine.low %v4077, %v4093
        %v4143 = vcombine.high %v4077, %v4093
        %v4145 = vunpack.c.l.s4 1934713408
        %v4146 = vunpack.c.0.s8 %v4145
        %v4147 = vlaneseq
        %v4148 = vshrl.u32 %v4147, 7
        %v4149 = vsub.s32 %v4146, %v4148
        %v4150 = vrot.slane %v4142, %v4149
        %v4152 = vunpack.c.l.s4 1934713408
        %v4153 = vunpack.c.0.s8 %v4152
        %v4154 = vlaneseq
        %v4155 = vshrl.u32 %v4154, 7
        %v4156 = vsub.s32 %v4153, %v4155
        %v4157 = vrot.slane %v4143, %v4156
        %v4158 = vcombine.low %v4102, %v4134
        %v4159 = vcombine.high %v4102, %v4134
        %v4160 = vcombine.low %v4109, %v4141
        %v4161 = vcombine.high %v4109, %v4141
        %v4162 = vcombine.low %v4118, %v4150
        %v4163 = vcombine.high %v4118, %v4150
        %v4164 = vcombine.low %v4125, %v4157
        %v4165 = vcombine.high %v4125, %v4157
        %v4166 = vsel %vm1771, %v3206, -inf
        %4167 = vmax.xlane.f32.xlu0 %v4166
        %v4168 = vpop.xlane.xlu0 %4167
        %v4169 = vsel %vm1771, %v3342, -inf
        %4170 = vmax.xlane.f32.xlu0 %v4169
        %v4171 = vpop.xlane.xlu0 %4170
        %v4172 = vsel %vm1771, %v3478, -inf
        %4173 = vmax.xlane.f32.xlu0 %v4172
        %v4174 = vpop.xlane.xlu0 %4173
        %v4175 = vsel %vm1771, %v3614, -inf
        %4176 = vmax.xlane.f32.xlu0 %v4175
        %v4177 = vpop.xlane.xlu0 %4176
        %v4178 = vsel %vm1771, %v3207, -inf
        %4179 = vmax.xlane.f32.xlu0 %v4178
        %v4180 = vpop.xlane.xlu0 %4179
        %v4181 = vsel %vm1771, %v3343, -inf
        %4182 = vmax.xlane.f32.xlu0 %v4181
        %v4183 = vpop.xlane.xlu0 %4182
        %v4184 = vsel %vm1771, %v3479, -inf
        %4185 = vmax.xlane.f32.xlu0 %v4184
        %v4186 = vpop.xlane.xlu0 %4185
        %v4187 = vsel %vm1771, %v3615, -inf
        %4188 = vmax.xlane.f32.xlu0 %v4187
        %v4189 = vpop.xlane.xlu0 %4188
        %v4190 = vsel %vm1771, %v3208, -inf
        %4191 = vmax.xlane.f32.xlu0 %v4190
        %v4192 = vpop.xlane.xlu0 %4191
        %v4193 = vsel %vm1771, %v3344, -inf
        %4194 = vmax.xlane.f32.xlu0 %v4193
        %v4195 = vpop.xlane.xlu0 %4194
        %v4196 = vsel %vm1771, %v3480, -inf
        %4197 = vmax.xlane.f32.xlu0 %v4196
        %v4198 = vpop.xlane.xlu0 %4197
        %v4199 = vsel %vm1771, %v3616, -inf
        %4200 = vmax.xlane.f32.xlu0 %v4199
        %v4201 = vpop.xlane.xlu0 %4200
        %v4202 = vsel %vm1771, %v3209, -inf
        %4203 = vmax.xlane.f32.xlu0 %v4202
        %v4204 = vpop.xlane.xlu0 %4203
        %v4205 = vsel %vm1771, %v3345, -inf
        %4206 = vmax.xlane.f32.xlu0 %v4205
        %v4207 = vpop.xlane.xlu0 %4206
        %v4208 = vsel %vm1771, %v3481, -inf
        %4209 = vmax.xlane.f32.xlu0 %v4208
        %v4210 = vpop.xlane.xlu0 %4209
        %v4211 = vsel %vm1771, %v3617, -inf
        %4212 = vmax.xlane.f32.xlu0 %v4211
        %v4213 = vpop.xlane.xlu0 %4212
        %v4214 = vsel %vm1771, %v3210, -inf
        %4215 = vmax.xlane.f32.xlu0 %v4214
        %v4216 = vpop.xlane.xlu0 %4215
        %v4217 = vsel %vm1771, %v3346, -inf
        %4218 = vmax.xlane.f32.xlu0 %v4217
        %v4219 = vpop.xlane.xlu0 %4218
        %v4220 = vsel %vm1771, %v3482, -inf
        %4221 = vmax.xlane.f32.xlu0 %v4220
        %v4222 = vpop.xlane.xlu0 %4221
        %v4223 = vsel %vm1771, %v3618, -inf
        %4224 = vmax.xlane.f32.xlu0 %v4223
        %v4225 = vpop.xlane.xlu0 %4224
        %v4226 = vsel %vm1771, %v3211, -inf
        %4227 = vmax.xlane.f32.xlu0 %v4226
        %v4228 = vpop.xlane.xlu0 %4227
        %v4229 = vsel %vm1771, %v3347, -inf
        %4230 = vmax.xlane.f32.xlu0 %v4229
        %v4231 = vpop.xlane.xlu0 %4230
        %v4232 = vsel %vm1771, %v3483, -inf
        %4233 = vmax.xlane.f32.xlu0 %v4232
        %v4234 = vpop.xlane.xlu0 %4233
        %v4235 = vsel %vm1771, %v3619, -inf
        %4236 = vmax.xlane.f32.xlu0 %v4235
        %v4237 = vpop.xlane.xlu0 %4236
        %v4238 = vsel %vm1771, %v3212, -inf
        %4239 = vmax.xlane.f32.xlu0 %v4238
        %v4240 = vpop.xlane.xlu0 %4239
        %v4241 = vsel %vm1771, %v3348, -inf
        %4242 = vmax.xlane.f32.xlu0 %v4241
        %v4243 = vpop.xlane.xlu0 %4242
        %v4244 = vsel %vm1771, %v3484, -inf
        %4245 = vmax.xlane.f32.xlu0 %v4244
        %v4246 = vpop.xlane.xlu0 %4245
        %v4247 = vsel %vm1771, %v3620, -inf
        %4248 = vmax.xlane.f32.xlu0 %v4247
        %v4249 = vpop.xlane.xlu0 %4248
        %v4250 = vsel %vm1771, %v3213, -inf
        %4251 = vmax.xlane.f32.xlu0 %v4250
        %v4252 = vpop.xlane.xlu0 %4251
        %v4253 = vsel %vm1771, %v3349, -inf
        %4254 = vmax.xlane.f32.xlu0 %v4253
        %v4255 = vpop.xlane.xlu0 %4254
        %v4256 = vsel %vm1771, %v3485, -inf
        %4257 = vmax.xlane.f32.xlu0 %v4256
        %v4258 = vpop.xlane.xlu0 %4257
        %v4259 = vsel %vm1771, %v3621, -inf
        %4260 = vmax.xlane.f32.xlu0 %v4259
        %v4261 = vpop.xlane.xlu0 %4260
        %v4262 = vsel %vm1771, %v3750, -inf
        %4263 = vmax.xlane.f32.xlu0 %v4262
        %v4264 = vpop.xlane.xlu0 %4263
        %v4265 = vsel %vm1771, %v3886, -inf
        %4266 = vmax.xlane.f32.xlu0 %v4265
        %v4267 = vpop.xlane.xlu0 %4266
        %v4268 = vsel %vm1771, %v4022, -inf
        %4269 = vmax.xlane.f32.xlu0 %v4268
        %v4270 = vpop.xlane.xlu0 %4269
        %v4271 = vsel %vm1771, %v4158, -inf
        %4272 = vmax.xlane.f32.xlu0 %v4271
        %v4273 = vpop.xlane.xlu0 %4272
        %v4274 = vsel %vm1771, %v3751, -inf
        %4275 = vmax.xlane.f32.xlu0 %v4274
        %v4276 = vpop.xlane.xlu0 %4275
        %v4277 = vsel %vm1771, %v3887, -inf
        %4278 = vmax.xlane.f32.xlu0 %v4277
        %v4279 = vpop.xlane.xlu0 %4278
        %v4280 = vsel %vm1771, %v4023, -inf
        %4281 = vmax.xlane.f32.xlu0 %v4280
        %v4282 = vpop.xlane.xlu0 %4281
        %v4283 = vsel %vm1771, %v4159, -inf
        %4284 = vmax.xlane.f32.xlu0 %v4283
        %v4285 = vpop.xlane.xlu0 %4284
        %v4286 = vsel %vm1771, %v3752, -inf
        %4287 = vmax.xlane.f32.xlu0 %v4286
        %v4288 = vpop.xlane.xlu0 %4287
        %v4289 = vsel %vm1771, %v3888, -inf
        %4290 = vmax.xlane.f32.xlu0 %v4289
        %v4291 = vpop.xlane.xlu0 %4290
        %v4292 = vsel %vm1771, %v4024, -inf
        %4293 = vmax.xlane.f32.xlu0 %v4292
        %v4294 = vpop.xlane.xlu0 %4293
        %v4295 = vsel %vm1771, %v4160, -inf
        %4296 = vmax.xlane.f32.xlu0 %v4295
        %v4297 = vpop.xlane.xlu0 %4296
        %v4298 = vsel %vm1771, %v3753, -inf
        %4299 = vmax.xlane.f32.xlu0 %v4298
        %v4300 = vpop.xlane.xlu0 %4299
        %v4301 = vsel %vm1771, %v3889, -inf
        %4302 = vmax.xlane.f32.xlu0 %v4301
        %v4303 = vpop.xlane.xlu0 %4302
        %v4304 = vsel %vm1771, %v4025, -inf
        %4305 = vmax.xlane.f32.xlu0 %v4304
        %v4306 = vpop.xlane.xlu0 %4305
        %v4307 = vsel %vm1771, %v4161, -inf
        %4308 = vmax.xlane.f32.xlu0 %v4307
        %v4309 = vpop.xlane.xlu0 %4308
        %v4310 = vsel %vm1771, %v3754, -inf
        %4311 = vmax.xlane.f32.xlu0 %v4310
        %v4312 = vpop.xlane.xlu0 %4311
        %v4313 = vsel %vm1771, %v3890, -inf
        %4314 = vmax.xlane.f32.xlu0 %v4313
        %v4315 = vpop.xlane.xlu0 %4314
        %v4316 = vsel %vm1771, %v4026, -inf
        %4317 = vmax.xlane.f32.xlu0 %v4316
        %v4318 = vpop.xlane.xlu0 %4317
        %v4319 = vsel %vm1771, %v4162, -inf
        %4320 = vmax.xlane.f32.xlu0 %v4319
        %v4321 = vpop.xlane.xlu0 %4320
        %v4322 = vsel %vm1771, %v3755, -inf
        %4323 = vmax.xlane.f32.xlu0 %v4322
        %v4324 = vpop.xlane.xlu0 %4323
        %v4325 = vsel %vm1771, %v3891, -inf
        %4326 = vmax.xlane.f32.xlu0 %v4325
        %v4327 = vpop.xlane.xlu0 %4326
        %v4328 = vsel %vm1771, %v4027, -inf
        %4329 = vmax.xlane.f32.xlu0 %v4328
        %v4330 = vpop.xlane.xlu0 %4329
        %v4331 = vsel %vm1771, %v4163, -inf
        %4332 = vmax.xlane.f32.xlu0 %v4331
        %v4333 = vpop.xlane.xlu0 %4332
        %v4334 = vsel %vm1771, %v3756, -inf
        %4335 = vmax.xlane.f32.xlu0 %v4334
        %v4336 = vpop.xlane.xlu0 %4335
        %v4337 = vsel %vm1771, %v3892, -inf
        %4338 = vmax.xlane.f32.xlu0 %v4337
        %v4339 = vpop.xlane.xlu0 %4338
        %v4340 = vsel %vm1771, %v4028, -inf
        %4341 = vmax.xlane.f32.xlu0 %v4340
        %v4342 = vpop.xlane.xlu0 %4341
        %v4343 = vsel %vm1771, %v4164, -inf
        %4344 = vmax.xlane.f32.xlu0 %v4343
        %v4345 = vpop.xlane.xlu0 %4344
        %v4346 = vsel %vm1771, %v3757, -inf
        %4347 = vmax.xlane.f32.xlu0 %v4346
        %v4348 = vpop.xlane.xlu0 %4347
        %v4349 = vsel %vm1771, %v3893, -inf
        %4350 = vmax.xlane.f32.xlu0 %v4349
        %v4351 = vpop.xlane.xlu0 %4350
        %v4352 = vsel %vm1771, %v4029, -inf
        %4353 = vmax.xlane.f32.xlu0 %v4352
        %v4354 = vpop.xlane.xlu0 %4353
        %v4355 = vsel %vm1771, %v4165, -inf
        %4356 = vmax.xlane.f32.xlu0 %v4355
        %v4357 = vpop.xlane.xlu0 %4356
        %v4422 = vlaneseq
        %v4423 = vshrl.u32 %v4422, 7
        %v4424 = vsub.s32 %v2003, %v4423
        %v4425 = vrot.slane %v4168, %v4424
        %v4426 = vadd.s32 %v2003, 4294967288
        %v4427 = vlaneseq
        %v4428 = vshrl.u32 %v4427, 7
        %v4429 = vsub.s32 %v4426, %v4428
        %v4430 = vrot.slane %v4171, %v4429
        %vm4431 = vcmask 130112
        %v4432 = vsel %vm4431, %v4430, %v4425
        %v4433 = vadd.s32 %v2003, 4294967280
        %v4434 = vlaneseq
        %v4435 = vshrl.u32 %v4434, 7
        %v4436 = vsub.s32 %v4433, %v4435
        %v4437 = vrot.slane %v4174, %v4436
        %vm4438 = vcmask 195712
        %v4439 = vsel %vm4438, %v4437, %v4432
        %v4440 = vadd.s32 %v2003, 4294967272
        %v4441 = vlaneseq
        %v4442 = vshrl.u32 %v4441, 7
        %v4443 = vsub.s32 %v4440, %v4442
        %v4444 = vrot.slane %v4177, %v4443
        %vm4445 = vcmask 261312
        %v4446 = vsel %vm4445, %v4444, %v4439
        %v4447 = vlaneseq
        %v4448 = vshrl.u32 %v4447, 7
        %v4449 = vsub.s32 %v2003, %v4448
        %v4450 = vrot.slane %v4180, %v4449
        %v4451 = vlaneseq
        %v4452 = vshrl.u32 %v4451, 7
        %v4453 = vsub.s32 %v4426, %v4452
        %v4454 = vrot.slane %v4183, %v4453
        %v4455 = vsel %vm4431, %v4454, %v4450
        %v4456 = vlaneseq
        %v4457 = vshrl.u32 %v4456, 7
        %v4458 = vsub.s32 %v4433, %v4457
        %v4459 = vrot.slane %v4186, %v4458
        %v4460 = vsel %vm4438, %v4459, %v4455
        %v4461 = vlaneseq
        %v4462 = vshrl.u32 %v4461, 7
        %v4463 = vsub.s32 %v4440, %v4462
        %v4464 = vrot.slane %v4189, %v4463
        %v4465 = vsel %vm4445, %v4464, %v4460
        %v4466 = vlaneseq
        %v4467 = vshrl.u32 %v4466, 7
        %v4468 = vsub.s32 %v2003, %v4467
        %v4469 = vrot.slane %v4192, %v4468
        %v4470 = vlaneseq
        %v4471 = vshrl.u32 %v4470, 7
        %v4472 = vsub.s32 %v4426, %v4471
        %v4473 = vrot.slane %v4195, %v4472
        %v4474 = vsel %vm4431, %v4473, %v4469
        %v4475 = vlaneseq
        %v4476 = vshrl.u32 %v4475, 7
        %v4477 = vsub.s32 %v4433, %v4476
        %v4478 = vrot.slane %v4198, %v4477
        %v4479 = vsel %vm4438, %v4478, %v4474
        %v4480 = vlaneseq
        %v4481 = vshrl.u32 %v4480, 7
        %v4482 = vsub.s32 %v4440, %v4481
        %v4483 = vrot.slane %v4201, %v4482
        %v4484 = vsel %vm4445, %v4483, %v4479
        %v4485 = vlaneseq
        %v4486 = vshrl.u32 %v4485, 7
        %v4487 = vsub.s32 %v2003, %v4486
        %v4488 = vrot.slane %v4204, %v4487
        %v4489 = vlaneseq
        %v4490 = vshrl.u32 %v4489, 7
        %v4491 = vsub.s32 %v4426, %v4490
        %v4492 = vrot.slane %v4207, %v4491
        %v4493 = vsel %vm4431, %v4492, %v4488
        %v4494 = vlaneseq
        %v4495 = vshrl.u32 %v4494, 7
        %v4496 = vsub.s32 %v4433, %v4495
        %v4497 = vrot.slane %v4210, %v4496
        %v4498 = vsel %vm4438, %v4497, %v4493
        %v4499 = vlaneseq
        %v4500 = vshrl.u32 %v4499, 7
        %v4501 = vsub.s32 %v4440, %v4500
        %v4502 = vrot.slane %v4213, %v4501
        %v4503 = vsel %vm4445, %v4502, %v4498
        %v4504 = vlaneseq
        %v4505 = vshrl.u32 %v4504, 7
        %v4506 = vsub.s32 %v2003, %v4505
        %v4507 = vrot.slane %v4216, %v4506
        %v4508 = vlaneseq
        %v4509 = vshrl.u32 %v4508, 7
        %v4510 = vsub.s32 %v4426, %v4509
        %v4511 = vrot.slane %v4219, %v4510
        %v4512 = vsel %vm4431, %v4511, %v4507
        %v4513 = vlaneseq
        %v4514 = vshrl.u32 %v4513, 7
        %v4515 = vsub.s32 %v4433, %v4514
        %v4516 = vrot.slane %v4222, %v4515
        %v4517 = vsel %vm4438, %v4516, %v4512
        %v4518 = vlaneseq
        %v4519 = vshrl.u32 %v4518, 7
        %v4520 = vsub.s32 %v4440, %v4519
        %v4521 = vrot.slane %v4225, %v4520
        %v4522 = vsel %vm4445, %v4521, %v4517
        %v4523 = vlaneseq
        %v4524 = vshrl.u32 %v4523, 7
        %v4525 = vsub.s32 %v2003, %v4524
        %v4526 = vrot.slane %v4228, %v4525
        %v4527 = vlaneseq
        %v4528 = vshrl.u32 %v4527, 7
        %v4529 = vsub.s32 %v4426, %v4528
        %v4530 = vrot.slane %v4231, %v4529
        %v4531 = vsel %vm4431, %v4530, %v4526
        %v4532 = vlaneseq
        %v4533 = vshrl.u32 %v4532, 7
        %v4534 = vsub.s32 %v4433, %v4533
        %v4535 = vrot.slane %v4234, %v4534
        %v4536 = vsel %vm4438, %v4535, %v4531
        %v4537 = vlaneseq
        %v4538 = vshrl.u32 %v4537, 7
        %v4539 = vsub.s32 %v4440, %v4538
        %v4540 = vrot.slane %v4237, %v4539
        %v4541 = vsel %vm4445, %v4540, %v4536
        %v4542 = vlaneseq
        %v4543 = vshrl.u32 %v4542, 7
        %v4544 = vsub.s32 %v2003, %v4543
        %v4545 = vrot.slane %v4240, %v4544
        %v4546 = vlaneseq
        %v4547 = vshrl.u32 %v4546, 7
        %v4548 = vsub.s32 %v4426, %v4547
        %v4549 = vrot.slane %v4243, %v4548
        %v4550 = vsel %vm4431, %v4549, %v4545
        %v4551 = vlaneseq
        %v4552 = vshrl.u32 %v4551, 7
        %v4553 = vsub.s32 %v4433, %v4552
        %v4554 = vrot.slane %v4246, %v4553
        %v4555 = vsel %vm4438, %v4554, %v4550
        %v4556 = vlaneseq
        %v4557 = vshrl.u32 %v4556, 7
        %v4558 = vsub.s32 %v4440, %v4557
        %v4559 = vrot.slane %v4249, %v4558
        %v4560 = vsel %vm4445, %v4559, %v4555
        %v4561 = vlaneseq
        %v4562 = vshrl.u32 %v4561, 7
        %v4563 = vsub.s32 %v2003, %v4562
        %v4564 = vrot.slane %v4252, %v4563
        %v4565 = vlaneseq
        %v4566 = vshrl.u32 %v4565, 7
        %v4567 = vsub.s32 %v4426, %v4566
        %v4568 = vrot.slane %v4255, %v4567
        %v4569 = vsel %vm4431, %v4568, %v4564
        %v4570 = vlaneseq
        %v4571 = vshrl.u32 %v4570, 7
        %v4572 = vsub.s32 %v4433, %v4571
        %v4573 = vrot.slane %v4258, %v4572
        %v4574 = vsel %vm4438, %v4573, %v4569
        %v4575 = vlaneseq
        %v4576 = vshrl.u32 %v4575, 7
        %v4577 = vsub.s32 %v4440, %v4576
        %v4578 = vrot.slane %v4261, %v4577
        %v4579 = vsel %vm4445, %v4578, %v4574
        %v4580 = vlaneseq
        %v4581 = vshrl.u32 %v4580, 7
        %v4582 = vsub.s32 %v2003, %v4581
        %v4583 = vrot.slane %v4264, %v4582
        %v4584 = vlaneseq
        %v4585 = vshrl.u32 %v4584, 7
        %v4586 = vsub.s32 %v4426, %v4585
        %v4587 = vrot.slane %v4267, %v4586
        %v4588 = vsel %vm4431, %v4587, %v4583
        %v4589 = vlaneseq
        %v4590 = vshrl.u32 %v4589, 7
        %v4591 = vsub.s32 %v4433, %v4590
        %v4592 = vrot.slane %v4270, %v4591
        %v4593 = vsel %vm4438, %v4592, %v4588
        %v4594 = vlaneseq
        %v4595 = vshrl.u32 %v4594, 7
        %v4596 = vsub.s32 %v4440, %v4595
        %v4597 = vrot.slane %v4273, %v4596
        %v4598 = vsel %vm4445, %v4597, %v4593
        %v4599 = vlaneseq
        %v4600 = vshrl.u32 %v4599, 7
        %v4601 = vsub.s32 %v2003, %v4600
        %v4602 = vrot.slane %v4276, %v4601
        %v4603 = vlaneseq
        %v4604 = vshrl.u32 %v4603, 7
        %v4605 = vsub.s32 %v4426, %v4604
        %v4606 = vrot.slane %v4279, %v4605
        %v4607 = vsel %vm4431, %v4606, %v4602
        %v4608 = vlaneseq
        %v4609 = vshrl.u32 %v4608, 7
        %v4610 = vsub.s32 %v4433, %v4609
        %v4611 = vrot.slane %v4282, %v4610
        %v4612 = vsel %vm4438, %v4611, %v4607
        %v4613 = vlaneseq
        %v4614 = vshrl.u32 %v4613, 7
        %v4615 = vsub.s32 %v4440, %v4614
        %v4616 = vrot.slane %v4285, %v4615
        %v4617 = vsel %vm4445, %v4616, %v4612
        %v4618 = vlaneseq
        %v4619 = vshrl.u32 %v4618, 7
        %v4620 = vsub.s32 %v2003, %v4619
        %v4621 = vrot.slane %v4288, %v4620
        %v4622 = vlaneseq
        %v4623 = vshrl.u32 %v4622, 7
        %v4624 = vsub.s32 %v4426, %v4623
        %v4625 = vrot.slane %v4291, %v4624
        %v4626 = vsel %vm4431, %v4625, %v4621
        %v4627 = vlaneseq
        %v4628 = vshrl.u32 %v4627, 7
        %v4629 = vsub.s32 %v4433, %v4628
        %v4630 = vrot.slane %v4294, %v4629
        %v4631 = vsel %vm4438, %v4630, %v4626
        %v4632 = vlaneseq
        %v4633 = vshrl.u32 %v4632, 7
        %v4634 = vsub.s32 %v4440, %v4633
        %v4635 = vrot.slane %v4297, %v4634
        %v4636 = vsel %vm4445, %v4635, %v4631
        %v4637 = vlaneseq
        %v4638 = vshrl.u32 %v4637, 7
        %v4639 = vsub.s32 %v2003, %v4638
        %v4640 = vrot.slane %v4300, %v4639
        %v4641 = vlaneseq
        %v4642 = vshrl.u32 %v4641, 7
        %v4643 = vsub.s32 %v4426, %v4642
        %v4644 = vrot.slane %v4303, %v4643
        %v4645 = vsel %vm4431, %v4644, %v4640
        %v4646 = vlaneseq
        %v4647 = vshrl.u32 %v4646, 7
        %v4648 = vsub.s32 %v4433, %v4647
        %v4649 = vrot.slane %v4306, %v4648
        %v4650 = vsel %vm4438, %v4649, %v4645
        %v4651 = vlaneseq
        %v4652 = vshrl.u32 %v4651, 7
        %v4653 = vsub.s32 %v4440, %v4652
        %v4654 = vrot.slane %v4309, %v4653
        %v4655 = vsel %vm4445, %v4654, %v4650
        %v4656 = vlaneseq
        %v4657 = vshrl.u32 %v4656, 7
        %v4658 = vsub.s32 %v2003, %v4657
        %v4659 = vrot.slane %v4312, %v4658
        %v4660 = vlaneseq
        %v4661 = vshrl.u32 %v4660, 7
        %v4662 = vsub.s32 %v4426, %v4661
        %v4663 = vrot.slane %v4315, %v4662
        %v4664 = vsel %vm4431, %v4663, %v4659
        %v4665 = vlaneseq
        %v4666 = vshrl.u32 %v4665, 7
        %v4667 = vsub.s32 %v4433, %v4666
        %v4668 = vrot.slane %v4318, %v4667
        %v4669 = vsel %vm4438, %v4668, %v4664
        %v4670 = vlaneseq
        %v4671 = vshrl.u32 %v4670, 7
        %v4672 = vsub.s32 %v4440, %v4671
        %v4673 = vrot.slane %v4321, %v4672
        %v4674 = vsel %vm4445, %v4673, %v4669
        %v4675 = vlaneseq
        %v4676 = vshrl.u32 %v4675, 7
        %v4677 = vsub.s32 %v2003, %v4676
        %v4678 = vrot.slane %v4324, %v4677
        %v4679 = vlaneseq
        %v4680 = vshrl.u32 %v4679, 7
        %v4681 = vsub.s32 %v4426, %v4680
        %v4682 = vrot.slane %v4327, %v4681
        %v4683 = vsel %vm4431, %v4682, %v4678
        %v4684 = vlaneseq
        %v4685 = vshrl.u32 %v4684, 7
        %v4686 = vsub.s32 %v4433, %v4685
        %v4687 = vrot.slane %v4330, %v4686
        %v4688 = vsel %vm4438, %v4687, %v4683
        %v4689 = vlaneseq
        %v4690 = vshrl.u32 %v4689, 7
        %v4691 = vsub.s32 %v4440, %v4690
        %v4692 = vrot.slane %v4333, %v4691
        %v4693 = vsel %vm4445, %v4692, %v4688
        %v4694 = vlaneseq
        %v4695 = vshrl.u32 %v4694, 7
        %v4696 = vsub.s32 %v2003, %v4695
        %v4697 = vrot.slane %v4336, %v4696
        %v4698 = vlaneseq
        %v4699 = vshrl.u32 %v4698, 7
        %v4700 = vsub.s32 %v4426, %v4699
        %v4701 = vrot.slane %v4339, %v4700
        %v4702 = vsel %vm4431, %v4701, %v4697
        %v4703 = vlaneseq
        %v4704 = vshrl.u32 %v4703, 7
        %v4705 = vsub.s32 %v4433, %v4704
        %v4706 = vrot.slane %v4342, %v4705
        %v4707 = vsel %vm4438, %v4706, %v4702
        %v4708 = vlaneseq
        %v4709 = vshrl.u32 %v4708, 7
        %v4710 = vsub.s32 %v4440, %v4709
        %v4711 = vrot.slane %v4345, %v4710
        %v4712 = vsel %vm4445, %v4711, %v4707
        %v4713 = vlaneseq
        %v4714 = vshrl.u32 %v4713, 7
        %v4715 = vsub.s32 %v2003, %v4714
        %v4716 = vrot.slane %v4348, %v4715
        %v4717 = vlaneseq
        %v4718 = vshrl.u32 %v4717, 7
        %v4719 = vsub.s32 %v4426, %v4718
        %v4720 = vrot.slane %v4351, %v4719
        %v4721 = vsel %vm4431, %v4720, %v4716
        %v4722 = vlaneseq
        %v4723 = vshrl.u32 %v4722, 7
        %v4724 = vsub.s32 %v4433, %v4723
        %v4725 = vrot.slane %v4354, %v4724
        %v4726 = vsel %vm4438, %v4725, %v4721
        %v4727 = vlaneseq
        %v4728 = vshrl.u32 %v4727, 7
        %v4729 = vsub.s32 %v4440, %v4728
        %v4730 = vrot.slane %v4357, %v4729
        %v4731 = vsel %vm4445, %v4730, %v4726
        %v4732 = vsel %vm2163, %v4465, %v4446
        %v4733 = vsel %vm2165, %v4484, %v4732
        %v4734 = vsel %vm2167, %v4503, %v4733
        %v4735 = vsel %vm2169, %v4522, %v4734
        %v4736 = vsel %vm2171, %v4541, %v4735
        %v4737 = vsel %vm2173, %v4560, %v4736
        %v4738 = vsel %vm2175, %v4579, %v4737
        %v4739 = vsel %vm2163, %v4617, %v4598
        %v4740 = vsel %vm2165, %v4636, %v4739
        %v4741 = vsel %vm2167, %v4655, %v4740
        %v4742 = vsel %vm2169, %v4674, %v4741
        %v4743 = vsel %vm2171, %v4693, %v4742
        %v4744 = vsel %vm2173, %v4712, %v4743
        %v4745 = vsel %vm2175, %v4731, %v4744
        %4748 = vst.msk [vmem:[%s203] sm:$0xff] %vm2382, %v4738
        %4749 = vst.msk [vmem:[%s203 + $0x8] sm:$0xff] %vm2382, %v4745
        %s4750 = sand.u32 %s101, 1
        %s4751 = scalar_lea.sflag [#allocation6], %s4750
        %s4752 = sand.u32 %s101, 1
        %s4753 = smul.addr %s4752, 16
        %s4754 = scalar_lea.vmem [#allocation7], %s4753
        // Predicated region
        $region37: #{tpu_custom_call.1} parent=31 // pred_check
          %p4755 = pneg %p111
        $region38: #{tpu_custom_call.1} parent=31 // pred_check_branch
          %4757 = sbr.rel (%p4755) target = $region40
        $region39: #{tpu_custom_call.1} parent=31 // pred_region
          %s4759 = ssub.s32 256, 256
          %4760 = vsyncadd %s4751, %s4759
          %s4761 = smul.addr %s20, 2
          %s4762 = smul.addr %s4761, 128
          %s4763 = scalar_lea.hbm %s3, %s4762
          %s4764 = sshll.u32 %s4754, 4
          %s4765 = int_to_ptr.vmem [resolvable:$true] %s4764
          %4770 = dma.vmem_to_hbm [thread:$0]  %s4765, 256, %s4763, %s4751, 128, 128, 8
        $region40: #{tpu_custom_call.1} parent=31 // pred_fallthru
          _
      $region32: #{tpu_custom_call.1} parent=5 // pred_fallthru
        _
      %p4771 = scmp.le.s32.totalorder 2, %s15
      // Predicated region
      $region41: #{tpu_custom_call.1} parent=5 // pred_check
        %p4772 = pneg %p4771
      $region42: #{tpu_custom_call.1} parent=5 // pred_check_branch
        %4774 = sbr.rel (%p4772) target = $region44
      $region43: #{tpu_custom_call.1} parent=5 // pred_region
        %s4775 = ssub.s32 %s15, 2
        // Predicated region
        $region45: #{tpu_custom_call.1} parent=43 // pred_check
          %p4776 = pneg %p117
        $region46: #{tpu_custom_call.1} parent=43 // pred_check_branch
          %4778 = sbr.rel (%p4776) target = $region48
        $region47: #{tpu_custom_call.1} parent=43 // pred_region
          %s4779 = sand.u32 %s102, 1
          %s4780 = scalar_lea.sflag [#allocation6], %s4779
          %s4781 = sand.u32 %s102, 1
          %s4782 = smul.addr %s4781, 16
          %s4783 = scalar_lea.vmem [#allocation7], %s4782
          %4784 = dma.done %s4780, 256
        $region48: #{tpu_custom_call.1} parent=43 // pred_fallthru
          _
      $region44: #{tpu_custom_call.1} parent=5 // pred_fallthru
        _
    $region6: #{tpu_custom_call.1} parent=1 // loop_footer
      %s19 = sadd.s32 1, %s15
    $region7: #{tpu_custom_call.1} parent=1 // loop_footer_branch
      %14 = sbr.rel target = $region3
    $region8: #{tpu_custom_call.1} parent=1 // loop_exit
      _
    %4785 = vsyncpa [#allocation5], 1
    %s4786 = scalar_lea.sflag [#allocation5], 1
    %4787 = vsyncpa %s4786, 1
    %4788 = vsyncpa [#allocation6], 1
    %s4789 = scalar_lea.sflag [#allocation6], 1
    %4790 = vsyncpa %s4789, 1

</llo_original>
